<compile_context>
chip_gen: v5e
topology: v5e:2x2
jax: 0.10.0
libtpu: 0.0.40
codegen_flags: <defaults>
</compile_context>

<pallas_src>
import jax
import jax.numpy as jnp
from jax.experimental import pallas as pl
from jax.experimental.pallas import tpu as pltpu

N_IN = 100
N_IN_PAD = 128           # lane-dense fc1 contraction (zero-padded)
H1, H2, H3 = 256, 512, 1024
N_OUT = 784


def _leaky_relu(v, slope=0.2):
    return jnp.maximum(v, slope * v)


def generator_kernel(x_ref,
                     w1_ref, b1_ref,
                     w2_ref, b2_ref,
                     w3_ref, b3_ref,
                     w4_ref, b4_ref,
                     o_ref):
    """Fused 4-layer MLP on one batch tile.

    Matmul inputs are bf16 (native MXU dtype), accumulation is f32
    (preferred_element_type); bias add / leaky-relu / tanh stay in f32
    (v5e VPU/EUP have no bf16)."""
    h = x_ref[...].astype(jnp.bfloat16)

    # fc1 + LeakyReLU(0.2)
    h = jnp.dot(h, w1_ref[...], preferred_element_type=jnp.float32) + b1_ref[...]
    h = _leaky_relu(h).astype(jnp.bfloat16)

    # fc2 + LeakyReLU(0.2)
    h = jnp.dot(h, w2_ref[...], preferred_element_type=jnp.float32) + b2_ref[...]
    h = _leaky_relu(h).astype(jnp.bfloat16)

    # fc3 + LeakyReLU(0.2)
    h = jnp.dot(h, w3_ref[...], preferred_element_type=jnp.float32) + b3_ref[...]
    h = _leaky_relu(h).astype(jnp.bfloat16)

    # fc4 + tanh
    h = jnp.dot(h, w4_ref[...], preferred_element_type=jnp.float32) + b4_ref[...]
    o_ref[...] = jnp.tanh(h).astype(o_ref.dtype)


def prepare_params(params):
    """One-time parameter prep (call ONCE, reuse across forwards).

    bf16 weights halve weight HBM/DMA traffic (f32 MXU accumulation happens
    in-kernel); fc1's contraction dim is zero-padded 100 -> 128 so the input
    tile and the first MXU pass are lane-dense.
    # TODO(synk): on v5e/v6e an int8 weight path (per-channel scales folded
    # into bias/activations) would halve weight DMA again; v7x's MXU has no
    # int8, so keep bf16 there (generation-gate the dtype choice).
    """
    (w1, b1), (w2, b2), (w3, b3), (w4, b4) = params
    w1p = jnp.pad(w1, ((0, N_IN_PAD - N_IN), (0, 0)))
    return (
        (w1p.astype(jnp.bfloat16), b1.astype(jnp.float32)),
        (w2.astype(jnp.bfloat16), b2.astype(jnp.float32)),
        (w3.astype(jnp.bfloat16), b3.astype(jnp.float32)),
        (w4.astype(jnp.bfloat16), b4.astype(jnp.float32)),
    )


def generator_net(x, prepped_params, *, block_b=512):
    """x: (B, 100) float32 -> (B, 784) float32.

    Same semantics as the PyTorch module (modulo bf16 weight / inter-layer
    activation rounding). `prepped_params` comes from prepare_params()."""
    (w1, b1), (w2, b2), (w3, b3), (w4, b4) = prepped_params
    B = x.shape[0]

    # Lane-dense input: pad the 100-wide latent to 128 (matches the zero rows
    # padded into w1; contributes nothing to fc1). Tiny per-call op.
    x = jnp.pad(x, ((0, 0), (0, N_IN_PAD - x.shape[1])))

    # Batch tile: as large as block_b but never more than the (8-rounded)
    # batch; the grid handles the ragged final block (no batch over-padding,
    # no extra HBM copy of x).
    tb = min(block_b, max(8, ((B + 7) // 8) * 8))
    grid = (pl.cdiv(B, tb),)

    def resident(shape):
        # Same block index every grid step -> weight DMA is issued once and
        # the weights stay resident in VMEM across batch tiles.
        return pl.BlockSpec(shape, lambda i: (0, 0))

    flops = 2 * B * (N_IN_PAD * H1 + H1 * H2 + H2 * H3 + H3 * N_OUT)
    bytes_accessed = (
        2 * (w1.size + w2.size + w3.size + w4.size)        # bf16 weights
        + 4 * (b1.size + b2.size + b3.size + b4.size)      # f32 biases
        + 4 * B * (N_IN_PAD + N_OUT))                      # x in, out

    out = pl.pallas_call(
        generator_kernel,
        out_shape=jax.ShapeDtypeStruct((B, N_OUT), jnp.float32),
        grid=grid,
        in_specs=[
            pl.BlockSpec((tb, N_IN_PAD), lambda i: (i, 0)),   # batch-tiled x
            resident(w1.shape), resident(b1.shape),
            resident(w2.shape), resident(b2.shape),
            resident(w3.shape), resident(b3.shape),
            resident(w4.shape), resident(b4.shape),
        ],
        out_specs=pl.BlockSpec((tb, N_OUT), lambda i: (i, 0)),
        compiler_params=pltpu.CompilerParams(
            # Batch axis shards across the two TensorCores on v7x megacore.
            dimension_semantics=("parallel",),
            # tb=512 footprint: ~6 MiB double-buffered bf16 weights + ~3.5 MiB
            # double-buffered f32 output tiles + ~8 MiB f32/bf16 intermediates
            # ~= 19 MiB -> above v5e's 16 MiB default scoped limit but well
            # under physical VMEM on all generations (v7x: 64 MiB).
            vmem_limit_bytes=48 << 20),
        cost_estimate=pl.CostEstimate(
            flops=flops,
            transcendentals=B * N_OUT,
            bytes_accessed=bytes_accessed),
    )(x, w1, b1, w2, b2, w3, b3, w4, b4)

    # TODO(synk): for v7x small-batch latency (grid=(1,)), add a second
    # "parallel" grid axis over the fc4 output features so both TensorCores
    # get work; kept single-axis here to preserve the fused single-pass MLP.
    return out


def init_params(key):
    """PyTorch nn.Linear default init: U(-1/sqrt(fan_in), 1/sqrt(fan_in))."""
    dims = [(N_IN, H1), (H1, H2), (H2, H3), (H3, N_OUT)]
    params = []
    for fan_in, fan_out in dims:
        key, kw, kb = jax.random.split(key, 3)
        bound = 1.0 / jnp.sqrt(jnp.float32(fan_in))
        w = jax.random.uniform(kw, (fan_in, fan_out), jnp.float32, -bound, bound)
        b = jax.random.uniform(kb, (1, fan_out), jnp.float32, -bound, bound)
        params.append((w, b))
    return params


def reference_forward_f32(x, params):
    """Pure-JAX f32 reference (matches the PyTorch module exactly)."""
    (w1, b1), (w2, b2), (w3, b3), (w4, b4) = params
    h = _leaky_relu(x @ w1 + b1)
    h = _leaky_relu(h @ w2 + b2)
    h = _leaky_relu(h @ w3 + b3)
    return jnp.tanh(h @ w4 + b4)


def reference_forward_bf16(x, params):
    """Reference mirroring the kernel's bf16 weight/activation quantization."""
    def q(a):
        return a.astype(jnp.bfloat16).astype(jnp.float32)
    (w1, b1), (w2, b2), (w3, b3), (w4, b4) = params
    h = q(x)
    h = q(_leaky_relu(h @ q(w1) + b1))
    h = q(_leaky_relu(h @ q(w2) + b2))
    h = q(_leaky_relu(h @ q(w3) + b3))
    return jnp.tanh(h @ q(w4) + b4)


if __name__ == "__main__":
    key = jax.random.PRNGKey(0)
    key, kx = jax.random.split(key)

    B = 8
    x = jax.random.normal(kx, (B, N_IN), jnp.float32)   # latent noise
    params = init_params(key)
    prepped = prepare_params(params)                     # one-time weight prep

    out = generator_net(x, prepped)
    out = jax.block_until_ready(out)
    assert out.shape == (B, N_OUT), out.shape

    # Tight check vs a reference that applies the same bf16 quantization.
    ref_q = reference_forward_bf16(x, params)
    assert jnp.allclose(out, ref_q, atol=1e-3, rtol=1e-3), "mismatch vs bf16-sim reference"

    # Loose check vs the exact f32 module semantics (bf16 rounding only).
    ref = reference_forward_f32(x, params)
    assert jnp.allclose(out, ref, atol=5e-2, rtol=5e-2), "mismatch vs f32 reference"

    print("KERNEL_OK")
</pallas_src>

<mosaic_0001>
module attributes {stable_mosaic.version = 11 : i64} {
  func.func @generator_kernel(%arg0: i32, %arg1: memref<8x128xf32, #tpu.memory_space<vmem>>, %arg2: memref<128x256xbf16, #tpu.memory_space<vmem>>, %arg3: memref<1x256xf32, #tpu.memory_space<vmem>>, %arg4: memref<256x512xbf16, #tpu.memory_space<vmem>>, %arg5: memref<1x512xf32, #tpu.memory_space<vmem>>, %arg6: memref<512x1024xbf16, #tpu.memory_space<vmem>>, %arg7: memref<1x1024xf32, #tpu.memory_space<vmem>>, %arg8: memref<1024x784xbf16, #tpu.memory_space<vmem>>, %arg9: memref<1x784xf32, #tpu.memory_space<vmem>>, %arg10: memref<8x784xf32, #tpu.memory_space<vmem>>) attributes {dimension_semantics = [#tpu.dimension_semantics<parallel>], iteration_bounds = array<i64: 1>, scalar_prefetch = 0 : i64, scratch_operands = 0 : i64, tpu.core_type = #tpu.core_type<tc>, window_params = [{transform_indices = @transform_0, window_bounds = array<i64: 8, 128>}, {pipeline_mode = #tpu.pipeline_mode<synchronous>, transform_indices = @transform_1, window_bounds = array<i64: 128, 256>}, {pipeline_mode = #tpu.pipeline_mode<synchronous>, transform_indices = @transform_2, window_bounds = array<i64: 1, 256>}, {pipeline_mode = #tpu.pipeline_mode<synchronous>, transform_indices = @transform_3, window_bounds = array<i64: 256, 512>}, {pipeline_mode = #tpu.pipeline_mode<synchronous>, transform_indices = @transform_4, window_bounds = array<i64: 1, 512>}, {pipeline_mode = #tpu.pipeline_mode<synchronous>, transform_indices = @transform_5, window_bounds = array<i64: 512, 1024>}, {pipeline_mode = #tpu.pipeline_mode<synchronous>, transform_indices = @transform_6, window_bounds = array<i64: 1, 1024>}, {pipeline_mode = #tpu.pipeline_mode<synchronous>, transform_indices = @transform_7, window_bounds = array<i64: 1024, 784>}, {pipeline_mode = #tpu.pipeline_mode<synchronous>, transform_indices = @transform_8, window_bounds = array<i64: 1, 784>}, {transform_indices = @transform_9, window_bounds = array<i64: 8, 784>}]} {
    %c0 = arith.constant 0 : index
    %c0_0 = arith.constant 0 : index
    %0 = vector.load %arg1[%c0, %c0_0] : memref<8x128xf32, #tpu.memory_space<vmem>>, vector<8x128xf32>
    %1 = arith.truncf %0 : vector<8x128xf32> to vector<8x128xbf16>
    %c0_1 = arith.constant 0 : index
    %c0_2 = arith.constant 0 : index
    %2 = vector.load %arg2[%c0_1, %c0_2] : memref<128x256xbf16, #tpu.memory_space<vmem>>, vector<128x256xbf16>
    %cst = arith.constant dense<0.000000e+00> : vector<8x256xf32>
    %3 = tpu.matmul %1, %2, %cst {dimension_numbers = #tpu.dot_dimension_numbers<[1], [0], [0], [1], [0, 0, 1, 1], [], []>} : vector<8x128xbf16>, vector<128x256xbf16>, vector<8x256xf32> -> vector<8x256xf32>
    %c0_3 = arith.constant 0 : index
    %c0_4 = arith.constant 0 : index
    %4 = vector.load %arg3[%c0_3, %c0_4] : memref<1x256xf32, #tpu.memory_space<vmem>>, vector<1x256xf32>
    %5 = vector.broadcast %4 : vector<1x256xf32> to vector<8x256xf32>
    %6 = arith.addf %3, %5 : vector<8x256xf32>
    %cst_5 = arith.constant 2.000000e-01 : f32
    %7 = vector.broadcast %cst_5 : f32 to vector<8x256xf32>
    %8 = arith.mulf %7, %6 : vector<8x256xf32>
    %9 = arith.maximumf %6, %8 : vector<8x256xf32>
    %10 = arith.truncf %9 : vector<8x256xf32> to vector<8x256xbf16>
    %c0_6 = arith.constant 0 : index
    %c0_7 = arith.constant 0 : index
    %11 = vector.load %arg4[%c0_6, %c0_7] : memref<256x512xbf16, #tpu.memory_space<vmem>>, vector<256x512xbf16>
    %cst_8 = arith.constant dense<0.000000e+00> : vector<8x512xf32>
    %12 = tpu.matmul %10, %11, %cst_8 {dimension_numbers = #tpu.dot_dimension_numbers<[1], [0], [0], [1], [0, 0, 1, 1], [], []>} : vector<8x256xbf16>, vector<256x512xbf16>, vector<8x512xf32> -> vector<8x512xf32>
    %c0_9 = arith.constant 0 : index
    %c0_10 = arith.constant 0 : index
    %13 = vector.load %arg5[%c0_9, %c0_10] : memref<1x512xf32, #tpu.memory_space<vmem>>, vector<1x512xf32>
    %14 = vector.broadcast %13 : vector<1x512xf32> to vector<8x512xf32>
    %15 = arith.addf %12, %14 : vector<8x512xf32>
    %cst_11 = arith.constant 2.000000e-01 : f32
    %16 = vector.broadcast %cst_11 : f32 to vector<8x512xf32>
    %17 = arith.mulf %16, %15 : vector<8x512xf32>
    %18 = arith.maximumf %15, %17 : vector<8x512xf32>
    %19 = arith.truncf %18 : vector<8x512xf32> to vector<8x512xbf16>
    %c0_12 = arith.constant 0 : index
    %c0_13 = arith.constant 0 : index
    %20 = vector.load %arg6[%c0_12, %c0_13] : memref<512x1024xbf16, #tpu.memory_space<vmem>>, vector<512x1024xbf16>
    %cst_14 = arith.constant dense<0.000000e+00> : vector<8x1024xf32>
    %21 = tpu.matmul %19, %20, %cst_14 {dimension_numbers = #tpu.dot_dimension_numbers<[1], [0], [0], [1], [0, 0, 1, 1], [], []>} : vector<8x512xbf16>, vector<512x1024xbf16>, vector<8x1024xf32> -> vector<8x1024xf32>
    %c0_15 = arith.constant 0 : index
    %c0_16 = arith.constant 0 : index
    %22 = vector.load %arg7[%c0_15, %c0_16] : memref<1x1024xf32, #tpu.memory_space<vmem>>, vector<1x1024xf32>
    %23 = vector.broadcast %22 : vector<1x1024xf32> to vector<8x1024xf32>
    %24 = arith.addf %21, %23 : vector<8x1024xf32>
    %cst_17 = arith.constant 2.000000e-01 : f32
    %25 = vector.broadcast %cst_17 : f32 to vector<8x1024xf32>
    %26 = arith.mulf %25, %24 : vector<8x1024xf32>
    %27 = arith.maximumf %24, %26 : vector<8x1024xf32>
    %28 = arith.truncf %27 : vector<8x1024xf32> to vector<8x1024xbf16>
    %c0_18 = arith.constant 0 : index
    %c0_19 = arith.constant 0 : index
    %29 = vector.load %arg8[%c0_18, %c0_19] : memref<1024x784xbf16, #tpu.memory_space<vmem>>, vector<1024x784xbf16>
    %cst_20 = arith.constant dense<0.000000e+00> : vector<8x784xf32>
    %30 = tpu.matmul %28, %29, %cst_20 {dimension_numbers = #tpu.dot_dimension_numbers<[1], [0], [0], [1], [0, 0, 1, 1], [], []>} : vector<8x1024xbf16>, vector<1024x784xbf16>, vector<8x784xf32> -> vector<8x784xf32>
    %c0_21 = arith.constant 0 : index
    %c0_22 = arith.constant 0 : index
    %31 = vector.load %arg9[%c0_21, %c0_22] : memref<1x784xf32, #tpu.memory_space<vmem>>, vector<1x784xf32>
    %32 = vector.broadcast %31 : vector<1x784xf32> to vector<8x784xf32>
    %33 = arith.addf %30, %32 : vector<8x784xf32>
    %34 = math.tanh %33 : vector<8x784xf32>
    %c0_23 = arith.constant 0 : index
    %c0_24 = arith.constant 0 : index
    %35 = vector.load %arg10[%c0_23, %c0_24] : memref<8x784xf32, #tpu.memory_space<vmem>>, vector<8x784xf32>
    tpu.vector_store %arg10[%c0_23, %c0_24], %34 {strides = array<i32>} : memref<8x784xf32, #tpu.memory_space<vmem>>, vector<8x784xf32>,
    return
  }
  func.func @transform_0(%arg0: i32) -> (i32, i32) {
    %c0_i32 = arith.constant 0 : i32
    %c0_i32_0 = arith.constant 0 : i32
    return %arg0, %c0_i32 : i32, i32
  }
  func.func @transform_1(%arg0: i32) -> (i32, i32) {
    %c0_i32 = arith.constant 0 : i32
    %c0_i32_0 = arith.constant 0 : i32
    %c0_i32_1 = arith.constant 0 : i32
    return %c0_i32, %c0_i32_0 : i32, i32
  }
  func.func @transform_2(%arg0: i32) -> (i32, i32) {
    %c0_i32 = arith.constant 0 : i32
    %c0_i32_0 = arith.constant 0 : i32
    %c0_i32_1 = arith.constant 0 : i32
    return %c0_i32, %c0_i32_0 : i32, i32
  }
  func.func @transform_3(%arg0: i32) -> (i32, i32) {
    %c0_i32 = arith.constant 0 : i32
    %c0_i32_0 = arith.constant 0 : i32
    %c0_i32_1 = arith.constant 0 : i32
    return %c0_i32, %c0_i32_0 : i32, i32
  }
  func.func @transform_4(%arg0: i32) -> (i32, i32) {
    %c0_i32 = arith.constant 0 : i32
    %c0_i32_0 = arith.constant 0 : i32
    %c0_i32_1 = arith.constant 0 : i32
    return %c0_i32, %c0_i32_0 : i32, i32
  }
  func.func @transform_5(%arg0: i32) -> (i32, i32) {
    %c0_i32 = arith.constant 0 : i32
    %c0_i32_0 = arith.constant 0 : i32
    %c0_i32_1 = arith.constant 0 : i32
    return %c0_i32, %c0_i32_0 : i32, i32
  }
  func.func @transform_6(%arg0: i32) -> (i32, i32) {
    %c0_i32 = arith.constant 0 : i32
    %c0_i32_0 = arith.constant 0 : i32
    %c0_i32_1 = arith.constant 0 : i32
    return %c0_i32, %c0_i32_0 : i32, i32
  }
  func.func @transform_7(%arg0: i32) -> (i32, i32) {
    %c0_i32 = arith.constant 0 : i32
    %c0_i32_0 = arith.constant 0 : i32
    %c0_i32_1 = arith.constant 0 : i32
    return %c0_i32, %c0_i32_0 : i32, i32
  }
  func.func @transform_8(%arg0: i32) -> (i32, i32) {
    %c0_i32 = arith.constant 0 : i32
    %c0_i32_0 = arith.constant 0 : i32
    %c0_i32_1 = arith.constant 0 : i32
    return %c0_i32, %c0_i32_0 : i32, i32
  }
  func.func @transform_9(%arg0: i32) -> (i32, i32) {
    %c0_i32 = arith.constant 0 : i32
    %c0_i32_0 = arith.constant 0 : i32
    return %arg0, %c0_i32 : i32, i32
  }
}

</mosaic_0001>

<llo_original>
// kernel: tpu_custom_call.1
$region0: #{tpu_custom_call.1}
  #allocation0 [shape = 'u32[]', space=smem, size = 0x4, offset = 0x4, fixed_abs, tag = 'smem constant byte address 0x4 - core index']
  #allocation1 [shape = 'u32[72,128]{1,0:T(1,128)}', space=vmem, size = 0x9000, scoped, tag = 'internal scratch']
  %s0 = inlined_call_operand.vmem [shape: f32[8,128], index: 0, kind: input, shape index: {}]
  %s1 = inlined_call_operand.vmem [shape: bf16[128,256], index: 1, kind: input, shape index: {}]
  %s2 = inlined_call_operand.vmem [shape: f32[1,256], index: 2, kind: input, shape index: {}]
  %s3 = inlined_call_operand.vmem [shape: bf16[256,512], index: 3, kind: input, shape index: {}]
  %s4 = inlined_call_operand.vmem [shape: f32[1,512], index: 4, kind: input, shape index: {}]
  %s5 = inlined_call_operand.vmem [shape: bf16[512,1024], index: 5, kind: input, shape index: {}]
  %s6 = inlined_call_operand.vmem [shape: f32[1,1024], index: 6, kind: input, shape index: {}]
  %s7 = inlined_call_operand.vmem [shape: bf16[1024,784], index: 7, kind: input, shape index: {}]
  %s8 = inlined_call_operand.vmem [shape: f32[1,784], index: 8, kind: input, shape index: {}]
  %s9 = inlined_call_operand.hbm [shape: f32[8,784], index: 9, kind: output, shape index: {}]
  %s10 = sld [smem:[#allocation0]]
  $region46: #{tpu_custom_call.1} parent=0
    _
  %s12 = ssub.s32 1, %s10
  %s13 = scalar_select 0, %s12, %s10
  $region1: #{tpu_custom_call.1} parent=0
    #allocation2 [shape = 'u8[28672]{0}', space=vmem, size = 0x7000, scoped, tag = 'output window, operand 0, single buffered']
    #allocation3 [shape = 's32[1]{0}', space=sflag, size = 0x4, scoped, tag = 'scoped memory for tpu_custom_call.1']
    %14 = vsyncpa [#allocation3], 0
    // Predicated region
    $region2: #{tpu_custom_call.1} parent=1 // pred_check
      _
    $region3: #{tpu_custom_call.1} parent=1 // pred_check_branch
      %16 = sbr.rel (0) target = $region5
    $region4: #{tpu_custom_call.1} parent=1 // pred_region
      _
    $region5: #{tpu_custom_call.1} parent=1 // pred_fallthru
      _
    // Predicated region
    $region6: #{tpu_custom_call.1} parent=1 // pred_check
      _
    $region7: #{tpu_custom_call.1} parent=1 // pred_check_branch
      %18 = sbr.rel (0) target = $region9
    $region8: #{tpu_custom_call.1} parent=1 // pred_region
      _
    $region9: #{tpu_custom_call.1} parent=1 // pred_fallthru
      _
    // Predicated region
    $region10: #{tpu_custom_call.1} parent=1 // pred_check
      _
    $region11: #{tpu_custom_call.1} parent=1 // pred_check_branch
      %20 = sbr.rel (0) target = $region13
    $region12: #{tpu_custom_call.1} parent=1 // pred_region
      _
    $region13: #{tpu_custom_call.1} parent=1 // pred_fallthru
      _
    // Predicated region
    $region14: #{tpu_custom_call.1} parent=1 // pred_check
      _
    $region15: #{tpu_custom_call.1} parent=1 // pred_check_branch
      %22 = sbr.rel (0) target = $region17
    $region16: #{tpu_custom_call.1} parent=1 // pred_region
      _
    $region17: #{tpu_custom_call.1} parent=1 // pred_fallthru
      _
    // Predicated region
    $region18: #{tpu_custom_call.1} parent=1 // pred_check
      _
    $region19: #{tpu_custom_call.1} parent=1 // pred_check_branch
      %24 = sbr.rel (0) target = $region21
    $region20: #{tpu_custom_call.1} parent=1 // pred_region
      _
    $region21: #{tpu_custom_call.1} parent=1 // pred_fallthru
      _
    // Predicated region
    $region22: #{tpu_custom_call.1} parent=1 // pred_check
      _
    $region23: #{tpu_custom_call.1} parent=1 // pred_check_branch
      %26 = sbr.rel (0) target = $region25
    $region24: #{tpu_custom_call.1} parent=1 // pred_region
      _
    $region25: #{tpu_custom_call.1} parent=1 // pred_fallthru
      _
    // Predicated region
    $region26: #{tpu_custom_call.1} parent=1 // pred_check
      _
    $region27: #{tpu_custom_call.1} parent=1 // pred_check_branch
      %28 = sbr.rel (0) target = $region29
    $region28: #{tpu_custom_call.1} parent=1 // pred_region
      _
    $region29: #{tpu_custom_call.1} parent=1 // pred_fallthru
      _
    // Predicated region
    $region30: #{tpu_custom_call.1} parent=1 // pred_check
      _
    $region31: #{tpu_custom_call.1} parent=1 // pred_check_branch
      %30 = sbr.rel (0) target = $region33
    $region32: #{tpu_custom_call.1} parent=1 // pred_region
      _
    $region33: #{tpu_custom_call.1} parent=1 // pred_fallthru
      _
    // Predicated region
    $region34: #{tpu_custom_call.1} parent=1 // pred_check
      _
    $region35: #{tpu_custom_call.1} parent=1 // pred_check_branch
      %32 = sbr.rel (0) target = $region37
    $region36: #{tpu_custom_call.1} parent=1 // pred_region
      _
    $region37: #{tpu_custom_call.1} parent=1 // pred_fallthru
      _
    %v33 = vld [vmem:[%s0] sm:$0xff]
    %v34 = vpack.c.bf16 %v33, %v33
    %v35 = vld [vmem:[%s1] sm:$0xff]
    %v36 = vld [vmem:[%s1 + $0x8] sm:$0xff]
    %v37 = vld [vmem:[%s1 + $0x10] sm:$0xff]
    %v38 = vld [vmem:[%s1 + $0x18] sm:$0xff]
    %v39 = vld [vmem:[%s1 + $0x20] sm:$0xff]
    %v40 = vld [vmem:[%s1 + $0x28] sm:$0xff]
    %v41 = vld [vmem:[%s1 + $0x30] sm:$0xff]
    %v42 = vld [vmem:[%s1 + $0x38] sm:$0xff]
    %v43 = vld [vmem:[%s1 + $0x40] sm:$0xff]
    %v44 = vld [vmem:[%s1 + $0x48] sm:$0xff]
    %v45 = vld [vmem:[%s1 + $0x50] sm:$0xff]
    %v46 = vld [vmem:[%s1 + $0x58] sm:$0xff]
    %v47 = vld [vmem:[%s1 + $0x60] sm:$0xff]
    %v48 = vld [vmem:[%s1 + $0x68] sm:$0xff]
    %v49 = vld [vmem:[%s1 + $0x70] sm:$0xff]
    %v50 = vld [vmem:[%s1 + $0x78] sm:$0xff]
    %v51 = vld [vmem:[%s2] sm:$0x3]
    %v53 = vperm.slane %v51, 0
    %v54 = vperm.slane %v51, 1
    %v73 = vunpack.c.l.b16 %v35
    %v74 = vunpack.c.h.b16 %v35
    %v75 = vunpack.c.l.b16 %v36
    %v76 = vunpack.c.h.b16 %v36
    %v77 = vunpack.c.l.b16 %v37
    %v78 = vunpack.c.h.b16 %v37
    %v79 = vunpack.c.l.b16 %v38
    %v80 = vunpack.c.h.b16 %v38
    %v81 = vunpack.c.l.b16 %v39
    %v82 = vunpack.c.h.b16 %v39
    %v83 = vunpack.c.l.b16 %v40
    %v84 = vunpack.c.h.b16 %v40
    %v85 = vunpack.c.l.b16 %v41
    %v86 = vunpack.c.h.b16 %v41
    %v87 = vunpack.c.l.b16 %v42
    %v88 = vunpack.c.h.b16 %v42
    %v89 = vunpack.c.l.b16 %v43
    %v90 = vunpack.c.h.b16 %v43
    %v91 = vunpack.c.l.b16 %v44
    %v92 = vunpack.c.h.b16 %v44
    %v93 = vunpack.c.l.b16 %v45
    %v94 = vunpack.c.h.b16 %v45
    %v95 = vunpack.c.l.b16 %v46
    %v96 = vunpack.c.h.b16 %v46
    %v97 = vunpack.c.l.b16 %v47
    %v98 = vunpack.c.h.b16 %v47
    %v99 = vunpack.c.l.b16 %v48
    %v100 = vunpack.c.h.b16 %v48
    %v101 = vunpack.c.l.b16 %v49
    %v102 = vunpack.c.h.b16 %v49
    %v103 = vunpack.c.l.b16 %v50
    %v104 = vunpack.c.h.b16 %v50
    %v105 = vpack.c.b16 %v75, %v73
    %v106 = vpack.c.b16 %v76, %v74
    %v107 = vpack.c.b16 %v79, %v77
    %v108 = vpack.c.b16 %v80, %v78
    %v109 = vpack.c.b16 %v83, %v81
    %v110 = vpack.c.b16 %v84, %v82
    %v111 = vpack.c.b16 %v87, %v85
    %v112 = vpack.c.b16 %v88, %v86
    %v113 = vpack.c.b16 %v91, %v89
    %v114 = vpack.c.b16 %v92, %v90
    %v115 = vpack.c.b16 %v95, %v93
    %v116 = vpack.c.b16 %v96, %v94
    %v117 = vpack.c.b16 %v99, %v97
    %v118 = vpack.c.b16 %v100, %v98
    %v119 = vpack.c.b16 %v103, %v101
    %v120 = vpack.c.b16 %v104, %v102
    %137 = vmatpush.bf16.msra.mxu0 %v119
    %138 = vmatpush.bf16.msra.mxu0 %v117
    %139 = vmatpush.bf16.msra.mxu0 %v115
    %140 = vmatpush.bf16.msra.mxu0 %v113
    %141 = vmatpush.bf16.msra.mxu0 %v111
    %142 = vmatpush.bf16.msra.mxu0 %v109
    %143 = vmatpush.bf16.msra.mxu0 %v107
    %144 = vmatpush.bf16.msra.mxu0 %v105
    %145 = vmatmul.bf16.gmra.mxu0 %v34
    %v146 = vpop.f32.mrf.mxu0
    %v147 = vadd.f32 %v53, %v146
    %v148 = vpop.f32.mrf.mxu0
    %149 = vdwg.mxu0
    %150 = vmatpush.bf16.msra.mxu0 %v120
    %151 = vmatpush.bf16.msra.mxu0 %v118
    %152 = vmatpush.bf16.msra.mxu0 %v116
    %153 = vmatpush.bf16.msra.mxu0 %v114
    %154 = vmatpush.bf16.msra.mxu0 %v112
    %155 = vmatpush.bf16.msra.mxu0 %v110
    %156 = vmatpush.bf16.msra.mxu0 %v108
    %157 = vmatpush.bf16.msra.mxu0 %v106
    %158 = vmatmul.bf16.gmra.mxu0 %v34
    %v159 = vpop.f32.mrf.mxu0
    %v160 = vadd.f32 %v54, %v159
    %v161 = vpop.f32.mrf.mxu0
    %162 = vdwg.mxu0
    %v163 = vmul.f32 %v147, 0.2
    %v164 = vmul.f32 %v160, 0.2
    %v165 = vmax.f32 %v147, %v163
    %v166 = vmax.f32 %v160, %v164
    %v167 = vpack.c.bf16 %v165, %v165
    %v168 = vpack.c.bf16 %v166, %v166
    %v169 = vld [vmem:[%s3] sm:$0xff]
    %v170 = vld [vmem:[%s3 + $0x8] sm:$0xff]
    %v171 = vld [vmem:[%s3 + $0x10] sm:$0xff]
    %v172 = vld [vmem:[%s3 + $0x18] sm:$0xff]
    %v173 = vld [vmem:[%s3 + $0x20] sm:$0xff]
    %v174 = vld [vmem:[%s3 + $0x28] sm:$0xff]
    %v175 = vld [vmem:[%s3 + $0x30] sm:$0xff]
    %v176 = vld [vmem:[%s3 + $0x38] sm:$0xff]
    %v177 = vld [vmem:[%s3 + $0x40] sm:$0xff]
    %v178 = vld [vmem:[%s3 + $0x48] sm:$0xff]
    %v179 = vld [vmem:[%s3 + $0x50] sm:$0xff]
    %v180 = vld [vmem:[%s3 + $0x58] sm:$0xff]
    %v181 = vld [vmem:[%s3 + $0x60] sm:$0xff]
    %v182 = vld [vmem:[%s3 + $0x68] sm:$0xff]
    %v183 = vld [vmem:[%s3 + $0x70] sm:$0xff]
    %v184 = vld [vmem:[%s3 + $0x78] sm:$0xff]
    %v185 = vld [vmem:[%s3 + $0x80] sm:$0xff]
    %v186 = vld [vmem:[%s3 + $0x88] sm:$0xff]
    %v187 = vld [vmem:[%s3 + $0x90] sm:$0xff]
    %v188 = vld [vmem:[%s3 + $0x98] sm:$0xff]
    %v189 = vld [vmem:[%s3 + $0xa0] sm:$0xff]
    %v190 = vld [vmem:[%s3 + $0xa8] sm:$0xff]
    %v191 = vld [vmem:[%s3 + $0xb0] sm:$0xff]
    %v192 = vld [vmem:[%s3 + $0xb8] sm:$0xff]
    %v193 = vld [vmem:[%s3 + $0xc0] sm:$0xff]
    %v194 = vld [vmem:[%s3 + $0xc8] sm:$0xff]
    %v195 = vld [vmem:[%s3 + $0xd0] sm:$0xff]
    %v196 = vld [vmem:[%s3 + $0xd8] sm:$0xff]
    %v197 = vld [vmem:[%s3 + $0xe0] sm:$0xff]
    %v198 = vld [vmem:[%s3 + $0xe8] sm:$0xff]
    %v199 = vld [vmem:[%s3 + $0xf0] sm:$0xff]
    %v200 = vld [vmem:[%s3 + $0xf8] sm:$0xff]
    %v201 = vld [vmem:[%s3 + $0x100] sm:$0xff]
    %v202 = vld [vmem:[%s3 + $0x108] sm:$0xff]
    %v203 = vld [vmem:[%s3 + $0x110] sm:$0xff]
    %v204 = vld [vmem:[%s3 + $0x118] sm:$0xff]
    %v205 = vld [vmem:[%s3 + $0x120] sm:$0xff]
    %v206 = vld [vmem:[%s3 + $0x128] sm:$0xff]
    %v207 = vld [vmem:[%s3 + $0x130] sm:$0xff]
    %v208 = vld [vmem:[%s3 + $0x138] sm:$0xff]
    %v209 = vld [vmem:[%s3 + $0x140] sm:$0xff]
    %v210 = vld [vmem:[%s3 + $0x148] sm:$0xff]
    %v211 = vld [vmem:[%s3 + $0x150] sm:$0xff]
    %v212 = vld [vmem:[%s3 + $0x158] sm:$0xff]
    %v213 = vld [vmem:[%s3 + $0x160] sm:$0xff]
    %v214 = vld [vmem:[%s3 + $0x168] sm:$0xff]
    %v215 = vld [vmem:[%s3 + $0x170] sm:$0xff]
    %v216 = vld [vmem:[%s3 + $0x178] sm:$0xff]
    %v217 = vld [vmem:[%s3 + $0x180] sm:$0xff]
    %v218 = vld [vmem:[%s3 + $0x188] sm:$0xff]
    %v219 = vld [vmem:[%s3 + $0x190] sm:$0xff]
    %v220 = vld [vmem:[%s3 + $0x198] sm:$0xff]
    %v221 = vld [vmem:[%s3 + $0x1a0] sm:$0xff]
    %v222 = vld [vmem:[%s3 + $0x1a8] sm:$0xff]
    %v223 = vld [vmem:[%s3 + $0x1b0] sm:$0xff]
    %v224 = vld [vmem:[%s3 + $0x1b8] sm:$0xff]
    %v225 = vld [vmem:[%s3 + $0x1c0] sm:$0xff]
    %v226 = vld [vmem:[%s3 + $0x1c8] sm:$0xff]
    %v227 = vld [vmem:[%s3 + $0x1d0] sm:$0xff]
    %v228 = vld [vmem:[%s3 + $0x1d8] sm:$0xff]
    %v229 = vld [vmem:[%s3 + $0x1e0] sm:$0xff]
    %v230 = vld [vmem:[%s3 + $0x1e8] sm:$0xff]
    %v231 = vld [vmem:[%s3 + $0x1f0] sm:$0xff]
    %v232 = vld [vmem:[%s3 + $0x1f8] sm:$0xff]
    %v233 = vld [vmem:[%s4] sm:$0xf]
    %v235 = vperm.slane %v233, 0
    %v236 = vperm.slane %v233, 1
    %v237 = vperm.slane %v233, 2
    %v238 = vperm.slane %v233, 3
    %v307 = vunpack.c.l.b16 %v169
    %v308 = vunpack.c.h.b16 %v169
    %v309 = vunpack.c.l.b16 %v170
    %v310 = vunpack.c.h.b16 %v170
    %v311 = vunpack.c.l.b16 %v171
    %v312 = vunpack.c.h.b16 %v171
    %v313 = vunpack.c.l.b16 %v172
    %v314 = vunpack.c.h.b16 %v172
    %v315 = vunpack.c.l.b16 %v173
    %v316 = vunpack.c.h.b16 %v173
    %v317 = vunpack.c.l.b16 %v174
    %v318 = vunpack.c.h.b16 %v174
    %v319 = vunpack.c.l.b16 %v175
    %v320 = vunpack.c.h.b16 %v175
    %v321 = vunpack.c.l.b16 %v176
    %v322 = vunpack.c.h.b16 %v176
    %v323 = vunpack.c.l.b16 %v177
    %v324 = vunpack.c.h.b16 %v177
    %v325 = vunpack.c.l.b16 %v178
    %v326 = vunpack.c.h.b16 %v178
    %v327 = vunpack.c.l.b16 %v179
    %v328 = vunpack.c.h.b16 %v179
    %v329 = vunpack.c.l.b16 %v180
    %v330 = vunpack.c.h.b16 %v180
    %v331 = vunpack.c.l.b16 %v181
    %v332 = vunpack.c.h.b16 %v181
    %v333 = vunpack.c.l.b16 %v182
    %v334 = vunpack.c.h.b16 %v182
    %v335 = vunpack.c.l.b16 %v183
    %v336 = vunpack.c.h.b16 %v183
    %v337 = vunpack.c.l.b16 %v184
    %v338 = vunpack.c.h.b16 %v184
    %v339 = vunpack.c.l.b16 %v185
    %v340 = vunpack.c.h.b16 %v185
    %v341 = vunpack.c.l.b16 %v186
    %v342 = vunpack.c.h.b16 %v186
    %v343 = vunpack.c.l.b16 %v187
    %v344 = vunpack.c.h.b16 %v187
    %v345 = vunpack.c.l.b16 %v188
    %v346 = vunpack.c.h.b16 %v188
    %v347 = vunpack.c.l.b16 %v189
    %v348 = vunpack.c.h.b16 %v189
    %v349 = vunpack.c.l.b16 %v190
    %v350 = vunpack.c.h.b16 %v190
    %v351 = vunpack.c.l.b16 %v191
    %v352 = vunpack.c.h.b16 %v191
    %v353 = vunpack.c.l.b16 %v192
    %v354 = vunpack.c.h.b16 %v192
    %v355 = vunpack.c.l.b16 %v193
    %v356 = vunpack.c.h.b16 %v193
    %v357 = vunpack.c.l.b16 %v194
    %v358 = vunpack.c.h.b16 %v194
    %v359 = vunpack.c.l.b16 %v195
    %v360 = vunpack.c.h.b16 %v195
    %v361 = vunpack.c.l.b16 %v196
    %v362 = vunpack.c.h.b16 %v196
    %v363 = vunpack.c.l.b16 %v197
    %v364 = vunpack.c.h.b16 %v197
    %v365 = vunpack.c.l.b16 %v198
    %v366 = vunpack.c.h.b16 %v198
    %v367 = vunpack.c.l.b16 %v199
    %v368 = vunpack.c.h.b16 %v199
    %v369 = vunpack.c.l.b16 %v200
    %v370 = vunpack.c.h.b16 %v200
    %v371 = vunpack.c.l.b16 %v201
    %v372 = vunpack.c.h.b16 %v201
    %v373 = vunpack.c.l.b16 %v202
    %v374 = vunpack.c.h.b16 %v202
    %v375 = vunpack.c.l.b16 %v203
    %v376 = vunpack.c.h.b16 %v203
    %v377 = vunpack.c.l.b16 %v204
    %v378 = vunpack.c.h.b16 %v204
    %v379 = vunpack.c.l.b16 %v205
    %v380 = vunpack.c.h.b16 %v205
    %v381 = vunpack.c.l.b16 %v206
    %v382 = vunpack.c.h.b16 %v206
    %v383 = vunpack.c.l.b16 %v207
    %v384 = vunpack.c.h.b16 %v207
    %v385 = vunpack.c.l.b16 %v208
    %v386 = vunpack.c.h.b16 %v208
    %v387 = vunpack.c.l.b16 %v209
    %v388 = vunpack.c.h.b16 %v209
    %v389 = vunpack.c.l.b16 %v210
    %v390 = vunpack.c.h.b16 %v210
    %v391 = vunpack.c.l.b16 %v211
    %v392 = vunpack.c.h.b16 %v211
    %v393 = vunpack.c.l.b16 %v212
    %v394 = vunpack.c.h.b16 %v212
    %v395 = vunpack.c.l.b16 %v213
    %v396 = vunpack.c.h.b16 %v213
    %v397 = vunpack.c.l.b16 %v214
    %v398 = vunpack.c.h.b16 %v214
    %v399 = vunpack.c.l.b16 %v215
    %v400 = vunpack.c.h.b16 %v215
    %v401 = vunpack.c.l.b16 %v216
    %v402 = vunpack.c.h.b16 %v216
    %v403 = vunpack.c.l.b16 %v217
    %v404 = vunpack.c.h.b16 %v217
    %v405 = vunpack.c.l.b16 %v218
    %v406 = vunpack.c.h.b16 %v218
    %v407 = vunpack.c.l.b16 %v219
    %v408 = vunpack.c.h.b16 %v219
    %v409 = vunpack.c.l.b16 %v220
    %v410 = vunpack.c.h.b16 %v220
    %v411 = vunpack.c.l.b16 %v221
    %v412 = vunpack.c.h.b16 %v221
    %v413 = vunpack.c.l.b16 %v222
    %v414 = vunpack.c.h.b16 %v222
    %v415 = vunpack.c.l.b16 %v223
    %v416 = vunpack.c.h.b16 %v223
    %v417 = vunpack.c.l.b16 %v224
    %v418 = vunpack.c.h.b16 %v224
    %v419 = vunpack.c.l.b16 %v225
    %v420 = vunpack.c.h.b16 %v225
    %v421 = vunpack.c.l.b16 %v226
    %v422 = vunpack.c.h.b16 %v226
    %v423 = vunpack.c.l.b16 %v227
    %v424 = vunpack.c.h.b16 %v227
    %v425 = vunpack.c.l.b16 %v228
    %v426 = vunpack.c.h.b16 %v228
    %v427 = vunpack.c.l.b16 %v229
    %v428 = vunpack.c.h.b16 %v229
    %v429 = vunpack.c.l.b16 %v230
    %v430 = vunpack.c.h.b16 %v230
    %v431 = vunpack.c.l.b16 %v231
    %v432 = vunpack.c.h.b16 %v231
    %v433 = vunpack.c.l.b16 %v232
    %v434 = vunpack.c.h.b16 %v232
    %v435 = vpack.c.b16 %v311, %v307
    %v436 = vpack.c.b16 %v312, %v308
    %v437 = vpack.c.b16 %v313, %v309
    %v438 = vpack.c.b16 %v314, %v310
    %v439 = vpack.c.b16 %v319, %v315
    %v440 = vpack.c.b16 %v320, %v316
    %v441 = vpack.c.b16 %v321, %v317
    %v442 = vpack.c.b16 %v322, %v318
    %v443 = vpack.c.b16 %v327, %v323
    %v444 = vpack.c.b16 %v328, %v324
    %v445 = vpack.c.b16 %v329, %v325
    %v446 = vpack.c.b16 %v330, %v326
    %v447 = vpack.c.b16 %v335, %v331
    %v448 = vpack.c.b16 %v336, %v332
    %v449 = vpack.c.b16 %v337, %v333
    %v450 = vpack.c.b16 %v338, %v334
    %v451 = vpack.c.b16 %v343, %v339
    %v452 = vpack.c.b16 %v344, %v340
    %v453 = vpack.c.b16 %v345, %v341
    %v454 = vpack.c.b16 %v346, %v342
    %v455 = vpack.c.b16 %v351, %v347
    %v456 = vpack.c.b16 %v352, %v348
    %v457 = vpack.c.b16 %v353, %v349
    %v458 = vpack.c.b16 %v354, %v350
    %v459 = vpack.c.b16 %v359, %v355
    %v460 = vpack.c.b16 %v360, %v356
    %v461 = vpack.c.b16 %v361, %v357
    %v462 = vpack.c.b16 %v362, %v358
    %v463 = vpack.c.b16 %v367, %v363
    %v464 = vpack.c.b16 %v368, %v364
    %v465 = vpack.c.b16 %v369, %v365
    %v466 = vpack.c.b16 %v370, %v366
    %v467 = vpack.c.b16 %v375, %v371
    %v468 = vpack.c.b16 %v376, %v372
    %v469 = vpack.c.b16 %v377, %v373
    %v470 = vpack.c.b16 %v378, %v374
    %v471 = vpack.c.b16 %v383, %v379
    %v472 = vpack.c.b16 %v384, %v380
    %v473 = vpack.c.b16 %v385, %v381
    %v474 = vpack.c.b16 %v386, %v382
    %v475 = vpack.c.b16 %v391, %v387
    %v476 = vpack.c.b16 %v392, %v388
    %v477 = vpack.c.b16 %v393, %v389
    %v478 = vpack.c.b16 %v394, %v390
    %v479 = vpack.c.b16 %v399, %v395
    %v480 = vpack.c.b16 %v400, %v396
    %v481 = vpack.c.b16 %v401, %v397
    %v482 = vpack.c.b16 %v402, %v398
    %v483 = vpack.c.b16 %v407, %v403
    %v484 = vpack.c.b16 %v408, %v404
    %v485 = vpack.c.b16 %v409, %v405
    %v486 = vpack.c.b16 %v410, %v406
    %v487 = vpack.c.b16 %v415, %v411
    %v488 = vpack.c.b16 %v416, %v412
    %v489 = vpack.c.b16 %v417, %v413
    %v490 = vpack.c.b16 %v418, %v414
    %v491 = vpack.c.b16 %v423, %v419
    %v492 = vpack.c.b16 %v424, %v420
    %v493 = vpack.c.b16 %v425, %v421
    %v494 = vpack.c.b16 %v426, %v422
    %v495 = vpack.c.b16 %v431, %v427
    %v496 = vpack.c.b16 %v432, %v428
    %v497 = vpack.c.b16 %v433, %v429
    %v498 = vpack.c.b16 %v434, %v430
    %563 = vmatpush.bf16.msra.mxu0 %v463
    %564 = vmatpush.bf16.msra.mxu0 %v459
    %565 = vmatpush.bf16.msra.mxu0 %v455
    %566 = vmatpush.bf16.msra.mxu0 %v451
    %567 = vmatpush.bf16.msra.mxu0 %v447
    %568 = vmatpush.bf16.msra.mxu0 %v443
    %569 = vmatpush.bf16.msra.mxu0 %v439
    %570 = vmatpush.bf16.msra.mxu0 %v435
    %571 = vmatmul.bf16.gmra.mxu0 %v167
    %v572 = vpop.f32.mrf.mxu0
    %v573 = vadd.f32 %v235, %v572
    %v574 = vpop.f32.mrf.mxu0
    %575 = vdwg.mxu0
    %576 = vmatpush.bf16.msra.mxu0 %v495
    %577 = vmatpush.bf16.msra.mxu0 %v491
    %578 = vmatpush.bf16.msra.mxu0 %v487
    %579 = vmatpush.bf16.msra.mxu0 %v483
    %580 = vmatpush.bf16.msra.mxu0 %v479
    %581 = vmatpush.bf16.msra.mxu0 %v475
    %582 = vmatpush.bf16.msra.mxu0 %v471
    %583 = vmatpush.bf16.msra.mxu0 %v467
    %584 = vmatmul.bf16.gmra.mxu0 %v168
    %v585 = vpop.f32.mrf.mxu0
    %v586 = vadd.f32 %v573, %v585
    %v587 = vpop.f32.mrf.mxu0
    %588 = vdwg.mxu0
    %589 = vmatpush.bf16.msra.mxu0 %v464
    %590 = vmatpush.bf16.msra.mxu0 %v460
    %591 = vmatpush.bf16.msra.mxu0 %v456
    %592 = vmatpush.bf16.msra.mxu0 %v452
    %593 = vmatpush.bf16.msra.mxu0 %v448
    %594 = vmatpush.bf16.msra.mxu0 %v444
    %595 = vmatpush.bf16.msra.mxu0 %v440
    %596 = vmatpush.bf16.msra.mxu0 %v436
    %597 = vmatmul.bf16.gmra.mxu0 %v167
    %v598 = vpop.f32.mrf.mxu0
    %v599 = vadd.f32 %v236, %v598
    %v600 = vpop.f32.mrf.mxu0
    %601 = vdwg.mxu0
    %602 = vmatpush.bf16.msra.mxu0 %v496
    %603 = vmatpush.bf16.msra.mxu0 %v492
    %604 = vmatpush.bf16.msra.mxu0 %v488
    %605 = vmatpush.bf16.msra.mxu0 %v484
    %606 = vmatpush.bf16.msra.mxu0 %v480
    %607 = vmatpush.bf16.msra.mxu0 %v476
    %608 = vmatpush.bf16.msra.mxu0 %v472
    %609 = vmatpush.bf16.msra.mxu0 %v468
    %610 = vmatmul.bf16.gmra.mxu0 %v168
    %v611 = vpop.f32.mrf.mxu0
    %v612 = vadd.f32 %v599, %v611
    %v613 = vpop.f32.mrf.mxu0
    %614 = vdwg.mxu0
    %615 = vmatpush.bf16.msra.mxu0 %v465
    %616 = vmatpush.bf16.msra.mxu0 %v461
    %617 = vmatpush.bf16.msra.mxu0 %v457
    %618 = vmatpush.bf16.msra.mxu0 %v453
    %619 = vmatpush.bf16.msra.mxu0 %v449
    %620 = vmatpush.bf16.msra.mxu0 %v445
    %621 = vmatpush.bf16.msra.mxu0 %v441
    %622 = vmatpush.bf16.msra.mxu0 %v437
    %623 = vmatmul.bf16.gmra.mxu0 %v167
    %v624 = vpop.f32.mrf.mxu0
    %v625 = vadd.f32 %v237, %v624
    %v626 = vpop.f32.mrf.mxu0
    %627 = vdwg.mxu0
    %628 = vmatpush.bf16.msra.mxu0 %v497
    %629 = vmatpush.bf16.msra.mxu0 %v493
    %630 = vmatpush.bf16.msra.mxu0 %v489
    %631 = vmatpush.bf16.msra.mxu0 %v485
    %632 = vmatpush.bf16.msra.mxu0 %v481
    %633 = vmatpush.bf16.msra.mxu0 %v477
    %634 = vmatpush.bf16.msra.mxu0 %v473
    %635 = vmatpush.bf16.msra.mxu0 %v469
    %636 = vmatmul.bf16.gmra.mxu0 %v168
    %v637 = vpop.f32.mrf.mxu0
    %v638 = vadd.f32 %v625, %v637
    %v639 = vpop.f32.mrf.mxu0
    %640 = vdwg.mxu0
    %641 = vmatpush.bf16.msra.mxu0 %v466
    %642 = vmatpush.bf16.msra.mxu0 %v462
    %643 = vmatpush.bf16.msra.mxu0 %v458
    %644 = vmatpush.bf16.msra.mxu0 %v454
    %645 = vmatpush.bf16.msra.mxu0 %v450
    %646 = vmatpush.bf16.msra.mxu0 %v446
    %647 = vmatpush.bf16.msra.mxu0 %v442
    %648 = vmatpush.bf16.msra.mxu0 %v438
    %649 = vmatmul.bf16.gmra.mxu0 %v167
    %v650 = vpop.f32.mrf.mxu0
    %v651 = vadd.f32 %v238, %v650
    %v652 = vpop.f32.mrf.mxu0
    %653 = vdwg.mxu0
    %654 = vmatpush.bf16.msra.mxu0 %v498
    %655 = vmatpush.bf16.msra.mxu0 %v494
    %656 = vmatpush.bf16.msra.mxu0 %v490
    %657 = vmatpush.bf16.msra.mxu0 %v486
    %658 = vmatpush.bf16.msra.mxu0 %v482
    %659 = vmatpush.bf16.msra.mxu0 %v478
    %660 = vmatpush.bf16.msra.mxu0 %v474
    %661 = vmatpush.bf16.msra.mxu0 %v470
    %662 = vmatmul.bf16.gmra.mxu0 %v168
    %v663 = vpop.f32.mrf.mxu0
    %v664 = vadd.f32 %v651, %v663
    %v665 = vpop.f32.mrf.mxu0
    %666 = vdwg.mxu0
    %v667 = vmul.f32 %v586, 0.2
    %v668 = vmul.f32 %v612, 0.2
    %v669 = vmul.f32 %v638, 0.2
    %v670 = vmul.f32 %v664, 0.2
    %v671 = vmax.f32 %v586, %v667
    %v672 = vmax.f32 %v612, %v668
    %v673 = vmax.f32 %v638, %v669
    %v674 = vmax.f32 %v664, %v670
    %v675 = vpack.c.bf16 %v671, %v671
    %v676 = vpack.c.bf16 %v672, %v672
    %v677 = vpack.c.bf16 %v673, %v673
    %v678 = vpack.c.bf16 %v674, %v674
    %v679 = vld [vmem:[%s5] sm:$0xff]
    %v680 = vld [vmem:[%s5 + $0x8] sm:$0xff]
    %v681 = vld [vmem:[%s5 + $0x10] sm:$0xff]
    %v682 = vld [vmem:[%s5 + $0x18] sm:$0xff]
    %v683 = vld [vmem:[%s5 + $0x20] sm:$0xff]
    %v684 = vld [vmem:[%s5 + $0x28] sm:$0xff]
    %v685 = vld [vmem:[%s5 + $0x30] sm:$0xff]
    %v686 = vld [vmem:[%s5 + $0x38] sm:$0xff]
    %v687 = vld [vmem:[%s5 + $0x40] sm:$0xff]
    %v688 = vld [vmem:[%s5 + $0x48] sm:$0xff]
    %v689 = vld [vmem:[%s5 + $0x50] sm:$0xff]
    %v690 = vld [vmem:[%s5 + $0x58] sm:$0xff]
    %v691 = vld [vmem:[%s5 + $0x60] sm:$0xff]
    %v692 = vld [vmem:[%s5 + $0x68] sm:$0xff]
    %v693 = vld [vmem:[%s5 + $0x70] sm:$0xff]
    %v694 = vld [vmem:[%s5 + $0x78] sm:$0xff]
    %v695 = vld [vmem:[%s5 + $0x80] sm:$0xff]
    %v696 = vld [vmem:[%s5 + $0x88] sm:$0xff]
    %v697 = vld [vmem:[%s5 + $0x90] sm:$0xff]
    %v698 = vld [vmem:[%s5 + $0x98] sm:$0xff]
    %v699 = vld [vmem:[%s5 + $0xa0] sm:$0xff]
    %v700 = vld [vmem:[%s5 + $0xa8] sm:$0xff]
    %v701 = vld [vmem:[%s5 + $0xb0] sm:$0xff]
    %v702 = vld [vmem:[%s5 + $0xb8] sm:$0xff]
    %v703 = vld [vmem:[%s5 + $0xc0] sm:$0xff]
    %v704 = vld [vmem:[%s5 + $0xc8] sm:$0xff]
    %v705 = vld [vmem:[%s5 + $0xd0] sm:$0xff]
    %v706 = vld [vmem:[%s5 + $0xd8] sm:$0xff]
    %v707 = vld [vmem:[%s5 + $0xe0] sm:$0xff]
    %v708 = vld [vmem:[%s5 + $0xe8] sm:$0xff]
    %v709 = vld [vmem:[%s5 + $0xf0] sm:$0xff]
    %v710 = vld [vmem:[%s5 + $0xf8] sm:$0xff]
    %v711 = vld [vmem:[%s5 + $0x100] sm:$0xff]
    %v712 = vld [vmem:[%s5 + $0x108] sm:$0xff]
    %v713 = vld [vmem:[%s5 + $0x110] sm:$0xff]
    %v714 = vld [vmem:[%s5 + $0x118] sm:$0xff]
    %v715 = vld [vmem:[%s5 + $0x120] sm:$0xff]
    %v716 = vld [vmem:[%s5 + $0x128] sm:$0xff]
    %v717 = vld [vmem:[%s5 + $0x130] sm:$0xff]
    %v718 = vld [vmem:[%s5 + $0x138] sm:$0xff]
    %v719 = vld [vmem:[%s5 + $0x140] sm:$0xff]
    %v720 = vld [vmem:[%s5 + $0x148] sm:$0xff]
    %v721 = vld [vmem:[%s5 + $0x150] sm:$0xff]
    %v722 = vld [vmem:[%s5 + $0x158] sm:$0xff]
    %v723 = vld [vmem:[%s5 + $0x160] sm:$0xff]
    %v724 = vld [vmem:[%s5 + $0x168] sm:$0xff]
    %v725 = vld [vmem:[%s5 + $0x170] sm:$0xff]
    %v726 = vld [vmem:[%s5 + $0x178] sm:$0xff]
    %v727 = vld [vmem:[%s5 + $0x180] sm:$0xff]
    %v728 = vld [vmem:[%s5 + $0x188] sm:$0xff]
    %v729 = vld [vmem:[%s5 + $0x190] sm:$0xff]
    %v730 = vld [vmem:[%s5 + $0x198] sm:$0xff]
    %v731 = vld [vmem:[%s5 + $0x1a0] sm:$0xff]
    %v732 = vld [vmem:[%s5 + $0x1a8] sm:$0xff]
    %v733 = vld [vmem:[%s5 + $0x1b0] sm:$0xff]
    %v734 = vld [vmem:[%s5 + $0x1b8] sm:$0xff]
    %v735 = vld [vmem:[%s5 + $0x1c0] sm:$0xff]
    %v736 = vld [vmem:[%s5 + $0x1c8] sm:$0xff]
    %v737 = vld [vmem:[%s5 + $0x1d0] sm:$0xff]
    %v738 = vld [vmem:[%s5 + $0x1d8] sm:$0xff]
    %v739 = vld [vmem:[%s5 + $0x1e0] sm:$0xff]
    %v740 = vld [vmem:[%s5 + $0x1e8] sm:$0xff]
    %v741 = vld [vmem:[%s5 + $0x1f0] sm:$0xff]
    %v742 = vld [vmem:[%s5 + $0x1f8] sm:$0xff]
    %v743 = vld [vmem:[%s5 + $0x200] sm:$0xff]
    %v744 = vld [vmem:[%s5 + $0x208] sm:$0xff]
    %v745 = vld [vmem:[%s5 + $0x210] sm:$0xff]
    %v746 = vld [vmem:[%s5 + $0x218] sm:$0xff]
    %v747 = vld [vmem:[%s5 + $0x220] sm:$0xff]
    %v748 = vld [vmem:[%s5 + $0x228] sm:$0xff]
    %v749 = vld [vmem:[%s5 + $0x230] sm:$0xff]
    %v750 = vld [vmem:[%s5 + $0x238] sm:$0xff]
    %v751 = vld [vmem:[%s5 + $0x240] sm:$0xff]
    %v752 = vld [vmem:[%s5 + $0x248] sm:$0xff]
    %v753 = vld [vmem:[%s5 + $0x250] sm:$0xff]
    %v754 = vld [vmem:[%s5 + $0x258] sm:$0xff]
    %v755 = vld [vmem:[%s5 + $0x260] sm:$0xff]
    %v756 = vld [vmem:[%s5 + $0x268] sm:$0xff]
    %v757 = vld [vmem:[%s5 + $0x270] sm:$0xff]
    %v758 = vld [vmem:[%s5 + $0x278] sm:$0xff]
    %v759 = vld [vmem:[%s5 + $0x280] sm:$0xff]
    %v760 = vld [vmem:[%s5 + $0x288] sm:$0xff]
    %v761 = vld [vmem:[%s5 + $0x290] sm:$0xff]
    %v762 = vld [vmem:[%s5 + $0x298] sm:$0xff]
    %v763 = vld [vmem:[%s5 + $0x2a0] sm:$0xff]
    %v764 = vld [vmem:[%s5 + $0x2a8] sm:$0xff]
    %v765 = vld [vmem:[%s5 + $0x2b0] sm:$0xff]
    %v766 = vld [vmem:[%s5 + $0x2b8] sm:$0xff]
    %v767 = vld [vmem:[%s5 + $0x2c0] sm:$0xff]
    %v768 = vld [vmem:[%s5 + $0x2c8] sm:$0xff]
    %v769 = vld [vmem:[%s5 + $0x2d0] sm:$0xff]
    %v770 = vld [vmem:[%s5 + $0x2d8] sm:$0xff]
    %v771 = vld [vmem:[%s5 + $0x2e0] sm:$0xff]
    %v772 = vld [vmem:[%s5 + $0x2e8] sm:$0xff]
    %v773 = vld [vmem:[%s5 + $0x2f0] sm:$0xff]
    %v774 = vld [vmem:[%s5 + $0x2f8] sm:$0xff]
    %v775 = vld [vmem:[%s5 + $0x300] sm:$0xff]
    %v776 = vld [vmem:[%s5 + $0x308] sm:$0xff]
    %v777 = vld [vmem:[%s5 + $0x310] sm:$0xff]
    %v778 = vld [vmem:[%s5 + $0x318] sm:$0xff]
    %v779 = vld [vmem:[%s5 + $0x320] sm:$0xff]
    %v780 = vld [vmem:[%s5 + $0x328] sm:$0xff]
    %v781 = vld [vmem:[%s5 + $0x330] sm:$0xff]
    %v782 = vld [vmem:[%s5 + $0x338] sm:$0xff]
    %v783 = vld [vmem:[%s5 + $0x340] sm:$0xff]
    %v784 = vld [vmem:[%s5 + $0x348] sm:$0xff]
    %v785 = vld [vmem:[%s5 + $0x350] sm:$0xff]
    %v786 = vld [vmem:[%s5 + $0x358] sm:$0xff]
    %v787 = vld [vmem:[%s5 + $0x360] sm:$0xff]
    %v788 = vld [vmem:[%s5 + $0x368] sm:$0xff]
    %v789 = vld [vmem:[%s5 + $0x370] sm:$0xff]
    %v790 = vld [vmem:[%s5 + $0x378] sm:$0xff]
    %v791 = vld [vmem:[%s5 + $0x380] sm:$0xff]
    %v792 = vld [vmem:[%s5 + $0x388] sm:$0xff]
    %v793 = vld [vmem:[%s5 + $0x390] sm:$0xff]
    %v794 = vld [vmem:[%s5 + $0x398] sm:$0xff]
    %v795 = vld [vmem:[%s5 + $0x3a0] sm:$0xff]
    %v796 = vld [vmem:[%s5 + $0x3a8] sm:$0xff]
    %v797 = vld [vmem:[%s5 + $0x3b0] sm:$0xff]
    %v798 = vld [vmem:[%s5 + $0x3b8] sm:$0xff]
    %v799 = vld [vmem:[%s5 + $0x3c0] sm:$0xff]
    %v800 = vld [vmem:[%s5 + $0x3c8] sm:$0xff]
    %v801 = vld [vmem:[%s5 + $0x3d0] sm:$0xff]
    %v802 = vld [vmem:[%s5 + $0x3d8] sm:$0xff]
    %v803 = vld [vmem:[%s5 + $0x3e0] sm:$0xff]
    %v804 = vld [vmem:[%s5 + $0x3e8] sm:$0xff]
    %v805 = vld [vmem:[%s5 + $0x3f0] sm:$0xff]
    %v806 = vld [vmem:[%s5 + $0x3f8] sm:$0xff]
    %v807 = vld [vmem:[%s5 + $0x400] sm:$0xff]
    %v808 = vld [vmem:[%s5 + $0x408] sm:$0xff]
    %v809 = vld [vmem:[%s5 + $0x410] sm:$0xff]
    %v810 = vld [vmem:[%s5 + $0x418] sm:$0xff]
    %v811 = vld [vmem:[%s5 + $0x420] sm:$0xff]
    %v812 = vld [vmem:[%s5 + $0x428] sm:$0xff]
    %v813 = vld [vmem:[%s5 + $0x430] sm:$0xff]
    %v814 = vld [vmem:[%s5 + $0x438] sm:$0xff]
    %v815 = vld [vmem:[%s5 + $0x440] sm:$0xff]
    %v816 = vld [vmem:[%s5 + $0x448] sm:$0xff]
    %v817 = vld [vmem:[%s5 + $0x450] sm:$0xff]
    %v818 = vld [vmem:[%s5 + $0x458] sm:$0xff]
    %v819 = vld [vmem:[%s5 + $0x460] sm:$0xff]
    %v820 = vld [vmem:[%s5 + $0x468] sm:$0xff]
    %v821 = vld [vmem:[%s5 + $0x470] sm:$0xff]
    %v822 = vld [vmem:[%s5 + $0x478] sm:$0xff]
    %v823 = vld [vmem:[%s5 + $0x480] sm:$0xff]
    %v824 = vld [vmem:[%s5 + $0x488] sm:$0xff]
    %v825 = vld [vmem:[%s5 + $0x490] sm:$0xff]
    %v826 = vld [vmem:[%s5 + $0x498] sm:$0xff]
    %v827 = vld [vmem:[%s5 + $0x4a0] sm:$0xff]
    %v828 = vld [vmem:[%s5 + $0x4a8] sm:$0xff]
    %v829 = vld [vmem:[%s5 + $0x4b0] sm:$0xff]
    %v830 = vld [vmem:[%s5 + $0x4b8] sm:$0xff]
    %v831 = vld [vmem:[%s5 + $0x4c0] sm:$0xff]
    %v832 = vld [vmem:[%s5 + $0x4c8] sm:$0xff]
    %v833 = vld [vmem:[%s5 + $0x4d0] sm:$0xff]
    %v834 = vld [vmem:[%s5 + $0x4d8] sm:$0xff]
    %v835 = vld [vmem:[%s5 + $0x4e0] sm:$0xff]
    %v836 = vld [vmem:[%s5 + $0x4e8] sm:$0xff]
    %v837 = vld [vmem:[%s5 + $0x4f0] sm:$0xff]
    %v838 = vld [vmem:[%s5 + $0x4f8] sm:$0xff]
    %v839 = vld [vmem:[%s5 + $0x500] sm:$0xff]
    %v840 = vld [vmem:[%s5 + $0x508] sm:$0xff]
    %v841 = vld [vmem:[%s5 + $0x510] sm:$0xff]
    %v842 = vld [vmem:[%s5 + $0x518] sm:$0xff]
    %v843 = vld [vmem:[%s5 + $0x520] sm:$0xff]
    %v844 = vld [vmem:[%s5 + $0x528] sm:$0xff]
    %v845 = vld [vmem:[%s5 + $0x530] sm:$0xff]
    %v846 = vld [vmem:[%s5 + $0x538] sm:$0xff]
    %v847 = vld [vmem:[%s5 + $0x540] sm:$0xff]
    %v848 = vld [vmem:[%s5 + $0x548] sm:$0xff]
    %v849 = vld [vmem:[%s5 + $0x550] sm:$0xff]
    %v850 = vld [vmem:[%s5 + $0x558] sm:$0xff]
    %v851 = vld [vmem:[%s5 + $0x560] sm:$0xff]
    %v852 = vld [vmem:[%s5 + $0x568] sm:$0xff]
    %v853 = vld [vmem:[%s5 + $0x570] sm:$0xff]
    %v854 = vld [vmem:[%s5 + $0x578] sm:$0xff]
    %v855 = vld [vmem:[%s5 + $0x580] sm:$0xff]
    %v856 = vld [vmem:[%s5 + $0x588] sm:$0xff]
    %v857 = vld [vmem:[%s5 + $0x590] sm:$0xff]
    %v858 = vld [vmem:[%s5 + $0x598] sm:$0xff]
    %v859 = vld [vmem:[%s5 + $0x5a0] sm:$0xff]
    %v860 = vld [vmem:[%s5 + $0x5a8] sm:$0xff]
    %v861 = vld [vmem:[%s5 + $0x5b0] sm:$0xff]
    %v862 = vld [vmem:[%s5 + $0x5b8] sm:$0xff]
    %v863 = vld [vmem:[%s5 + $0x5c0] sm:$0xff]
    %v864 = vld [vmem:[%s5 + $0x5c8] sm:$0xff]
    %v865 = vld [vmem:[%s5 + $0x5d0] sm:$0xff]
    %v866 = vld [vmem:[%s5 + $0x5d8] sm:$0xff]
    %v867 = vld [vmem:[%s5 + $0x5e0] sm:$0xff]
    %v868 = vld [vmem:[%s5 + $0x5e8] sm:$0xff]
    %v869 = vld [vmem:[%s5 + $0x5f0] sm:$0xff]
    %v870 = vld [vmem:[%s5 + $0x5f8] sm:$0xff]
    %v871 = vld [vmem:[%s5 + $0x600] sm:$0xff]
    %v872 = vld [vmem:[%s5 + $0x608] sm:$0xff]
    %v873 = vld [vmem:[%s5 + $0x610] sm:$0xff]
    %v874 = vld [vmem:[%s5 + $0x618] sm:$0xff]
    %v875 = vld [vmem:[%s5 + $0x620] sm:$0xff]
    %v876 = vld [vmem:[%s5 + $0x628] sm:$0xff]
    %v877 = vld [vmem:[%s5 + $0x630] sm:$0xff]
    %v878 = vld [vmem:[%s5 + $0x638] sm:$0xff]
    %v879 = vld [vmem:[%s5 + $0x640] sm:$0xff]
    %v880 = vld [vmem:[%s5 + $0x648] sm:$0xff]
    %v881 = vld [vmem:[%s5 + $0x650] sm:$0xff]
    %v882 = vld [vmem:[%s5 + $0x658] sm:$0xff]
    %v883 = vld [vmem:[%s5 + $0x660] sm:$0xff]
    %v884 = vld [vmem:[%s5 + $0x668] sm:$0xff]
    %v885 = vld [vmem:[%s5 + $0x670] sm:$0xff]
    %v886 = vld [vmem:[%s5 + $0x678] sm:$0xff]
    %v887 = vld [vmem:[%s5 + $0x680] sm:$0xff]
    %v888 = vld [vmem:[%s5 + $0x688] sm:$0xff]
    %v889 = vld [vmem:[%s5 + $0x690] sm:$0xff]
    %v890 = vld [vmem:[%s5 + $0x698] sm:$0xff]
    %v891 = vld [vmem:[%s5 + $0x6a0] sm:$0xff]
    %v892 = vld [vmem:[%s5 + $0x6a8] sm:$0xff]
    %v893 = vld [vmem:[%s5 + $0x6b0] sm:$0xff]
    %v894 = vld [vmem:[%s5 + $0x6b8] sm:$0xff]
    %v895 = vld [vmem:[%s5 + $0x6c0] sm:$0xff]
    %v896 = vld [vmem:[%s5 + $0x6c8] sm:$0xff]
    %v897 = vld [vmem:[%s5 + $0x6d0] sm:$0xff]
    %v898 = vld [vmem:[%s5 + $0x6d8] sm:$0xff]
    %v899 = vld [vmem:[%s5 + $0x6e0] sm:$0xff]
    %v900 = vld [vmem:[%s5 + $0x6e8] sm:$0xff]
    %v901 = vld [vmem:[%s5 + $0x6f0] sm:$0xff]
    %v902 = vld [vmem:[%s5 + $0x6f8] sm:$0xff]
    %v903 = vld [vmem:[%s5 + $0x700] sm:$0xff]
    %v904 = vld [vmem:[%s5 + $0x708] sm:$0xff]
    %v905 = vld [vmem:[%s5 + $0x710] sm:$0xff]
    %v906 = vld [vmem:[%s5 + $0x718] sm:$0xff]
    %v907 = vld [vmem:[%s5 + $0x720] sm:$0xff]
    %v908 = vld [vmem:[%s5 + $0x728] sm:$0xff]
    %v909 = vld [vmem:[%s5 + $0x730] sm:$0xff]
    %v910 = vld [vmem:[%s5 + $0x738] sm:$0xff]
    %v911 = vld [vmem:[%s5 + $0x740] sm:$0xff]
    %v912 = vld [vmem:[%s5 + $0x748] sm:$0xff]
    %v913 = vld [vmem:[%s5 + $0x750] sm:$0xff]
    %v914 = vld [vmem:[%s5 + $0x758] sm:$0xff]
    %v915 = vld [vmem:[%s5 + $0x760] sm:$0xff]
    %v916 = vld [vmem:[%s5 + $0x768] sm:$0xff]
    %v917 = vld [vmem:[%s5 + $0x770] sm:$0xff]
    %v918 = vld [vmem:[%s5 + $0x778] sm:$0xff]
    %v919 = vld [vmem:[%s5 + $0x780] sm:$0xff]
    %v920 = vld [vmem:[%s5 + $0x788] sm:$0xff]
    %v921 = vld [vmem:[%s5 + $0x790] sm:$0xff]
    %v922 = vld [vmem:[%s5 + $0x798] sm:$0xff]
    %v923 = vld [vmem:[%s5 + $0x7a0] sm:$0xff]
    %v924 = vld [vmem:[%s5 + $0x7a8] sm:$0xff]
    %v925 = vld [vmem:[%s5 + $0x7b0] sm:$0xff]
    %v926 = vld [vmem:[%s5 + $0x7b8] sm:$0xff]
    %v927 = vld [vmem:[%s5 + $0x7c0] sm:$0xff]
    %v928 = vld [vmem:[%s5 + $0x7c8] sm:$0xff]
    %v929 = vld [vmem:[%s5 + $0x7d0] sm:$0xff]
    %v930 = vld [vmem:[%s5 + $0x7d8] sm:$0xff]
    %v931 = vld [vmem:[%s5 + $0x7e0] sm:$0xff]
    %v932 = vld [vmem:[%s5 + $0x7e8] sm:$0xff]
    %v933 = vld [vmem:[%s5 + $0x7f0] sm:$0xff]
    %v934 = vld [vmem:[%s5 + $0x7f8] sm:$0xff]
    %v935 = vld [vmem:[%s6] sm:$0xff]
    %v937 = vperm.slane %v935, 0
    %v938 = vperm.slane %v935, 1
    %v939 = vperm.slane %v935, 2
    %v940 = vperm.slane %v935, 3
    %v941 = vperm.slane %v935, 4
    %v942 = vperm.slane %v935, 5
    %v943 = vperm.slane %v935, 6
    %v944 = vperm.slane %v935, 7
    %v1209 = vunpack.c.l.b16 %v679
    %v1210 = vunpack.c.h.b16 %v679
    %v1211 = vunpack.c.l.b16 %v680
    %v1212 = vunpack.c.h.b16 %v680
    %v1213 = vunpack.c.l.b16 %v681
    %v1214 = vunpack.c.h.b16 %v681
    %v1215 = vunpack.c.l.b16 %v682
    %v1216 = vunpack.c.h.b16 %v682
    %v1217 = vunpack.c.l.b16 %v683
    %v1218 = vunpack.c.h.b16 %v683
    %v1219 = vunpack.c.l.b16 %v684
    %v1220 = vunpack.c.h.b16 %v684
    %v1221 = vunpack.c.l.b16 %v685
    %v1222 = vunpack.c.h.b16 %v685
    %v1223 = vunpack.c.l.b16 %v686
    %v1224 = vunpack.c.h.b16 %v686
    %v1225 = vunpack.c.l.b16 %v687
    %v1226 = vunpack.c.h.b16 %v687
    %v1227 = vunpack.c.l.b16 %v688
    %v1228 = vunpack.c.h.b16 %v688
    %v1229 = vunpack.c.l.b16 %v689
    %v1230 = vunpack.c.h.b16 %v689
    %v1231 = vunpack.c.l.b16 %v690
    %v1232 = vunpack.c.h.b16 %v690
    %v1233 = vunpack.c.l.b16 %v691
    %v1234 = vunpack.c.h.b16 %v691
    %v1235 = vunpack.c.l.b16 %v692
    %v1236 = vunpack.c.h.b16 %v692
    %v1237 = vunpack.c.l.b16 %v693
    %v1238 = vunpack.c.h.b16 %v693
    %v1239 = vunpack.c.l.b16 %v694
    %v1240 = vunpack.c.h.b16 %v694
    %v1241 = vunpack.c.l.b16 %v695
    %v1242 = vunpack.c.h.b16 %v695
    %v1243 = vunpack.c.l.b16 %v696
    %v1244 = vunpack.c.h.b16 %v696
    %v1245 = vunpack.c.l.b16 %v697
    %v1246 = vunpack.c.h.b16 %v697
    %v1247 = vunpack.c.l.b16 %v698
    %v1248 = vunpack.c.h.b16 %v698
    %v1249 = vunpack.c.l.b16 %v699
    %v1250 = vunpack.c.h.b16 %v699
    %v1251 = vunpack.c.l.b16 %v700
    %v1252 = vunpack.c.h.b16 %v700
    %v1253 = vunpack.c.l.b16 %v701
    %v1254 = vunpack.c.h.b16 %v701
    %v1255 = vunpack.c.l.b16 %v702
    %v1256 = vunpack.c.h.b16 %v702
    %v1257 = vunpack.c.l.b16 %v703
    %v1258 = vunpack.c.h.b16 %v703
    %v1259 = vunpack.c.l.b16 %v704
    %v1260 = vunpack.c.h.b16 %v704
    %v1261 = vunpack.c.l.b16 %v705
    %v1262 = vunpack.c.h.b16 %v705
    %v1263 = vunpack.c.l.b16 %v706
    %v1264 = vunpack.c.h.b16 %v706
    %v1265 = vunpack.c.l.b16 %v707
    %v1266 = vunpack.c.h.b16 %v707
    %v1267 = vunpack.c.l.b16 %v708
    %v1268 = vunpack.c.h.b16 %v708
    %v1269 = vunpack.c.l.b16 %v709
    %v1270 = vunpack.c.h.b16 %v709
    %v1271 = vunpack.c.l.b16 %v710
    %v1272 = vunpack.c.h.b16 %v710
    %v1273 = vunpack.c.l.b16 %v711
    %v1274 = vunpack.c.h.b16 %v711
    %v1275 = vunpack.c.l.b16 %v712
    %v1276 = vunpack.c.h.b16 %v712
    %v1277 = vunpack.c.l.b16 %v713
    %v1278 = vunpack.c.h.b16 %v713
    %v1279 = vunpack.c.l.b16 %v714
    %v1280 = vunpack.c.h.b16 %v714
    %v1281 = vunpack.c.l.b16 %v715
    %v1282 = vunpack.c.h.b16 %v715
    %v1283 = vunpack.c.l.b16 %v716
    %v1284 = vunpack.c.h.b16 %v716
    %v1285 = vunpack.c.l.b16 %v717
    %v1286 = vunpack.c.h.b16 %v717
    %v1287 = vunpack.c.l.b16 %v718
    %v1288 = vunpack.c.h.b16 %v718
    %v1289 = vunpack.c.l.b16 %v719
    %v1290 = vunpack.c.h.b16 %v719
    %v1291 = vunpack.c.l.b16 %v720
    %v1292 = vunpack.c.h.b16 %v720
    %v1293 = vunpack.c.l.b16 %v721
    %v1294 = vunpack.c.h.b16 %v721
    %v1295 = vunpack.c.l.b16 %v722
    %v1296 = vunpack.c.h.b16 %v722
    %v1297 = vunpack.c.l.b16 %v723
    %v1298 = vunpack.c.h.b16 %v723
    %v1299 = vunpack.c.l.b16 %v724
    %v1300 = vunpack.c.h.b16 %v724
    %v1301 = vunpack.c.l.b16 %v725
    %v1302 = vunpack.c.h.b16 %v725
    %v1303 = vunpack.c.l.b16 %v726
    %v1304 = vunpack.c.h.b16 %v726
    %v1305 = vunpack.c.l.b16 %v727
    %v1306 = vunpack.c.h.b16 %v727
    %v1307 = vunpack.c.l.b16 %v728
    %v1308 = vunpack.c.h.b16 %v728
    %v1309 = vunpack.c.l.b16 %v729
    %v1310 = vunpack.c.h.b16 %v729
    %v1311 = vunpack.c.l.b16 %v730
    %v1312 = vunpack.c.h.b16 %v730
    %v1313 = vunpack.c.l.b16 %v731
    %v1314 = vunpack.c.h.b16 %v731
    %v1315 = vunpack.c.l.b16 %v732
    %v1316 = vunpack.c.h.b16 %v732
    %v1317 = vunpack.c.l.b16 %v733
    %v1318 = vunpack.c.h.b16 %v733
    %v1319 = vunpack.c.l.b16 %v734
    %v1320 = vunpack.c.h.b16 %v734
    %v1321 = vunpack.c.l.b16 %v735
    %v1322 = vunpack.c.h.b16 %v735
    %v1323 = vunpack.c.l.b16 %v736
    %v1324 = vunpack.c.h.b16 %v736
    %v1325 = vunpack.c.l.b16 %v737
    %v1326 = vunpack.c.h.b16 %v737
    %v1327 = vunpack.c.l.b16 %v738
    %v1328 = vunpack.c.h.b16 %v738
    %v1329 = vunpack.c.l.b16 %v739
    %v1330 = vunpack.c.h.b16 %v739
    %v1331 = vunpack.c.l.b16 %v740
    %v1332 = vunpack.c.h.b16 %v740
    %v1333 = vunpack.c.l.b16 %v741
    %v1334 = vunpack.c.h.b16 %v741
    %v1335 = vunpack.c.l.b16 %v742
    %v1336 = vunpack.c.h.b16 %v742
    %v1337 = vunpack.c.l.b16 %v743
    %v1338 = vunpack.c.h.b16 %v743
    %v1339 = vunpack.c.l.b16 %v744
    %v1340 = vunpack.c.h.b16 %v744
    %v1341 = vunpack.c.l.b16 %v745
    %v1342 = vunpack.c.h.b16 %v745
    %v1343 = vunpack.c.l.b16 %v746
    %v1344 = vunpack.c.h.b16 %v746
    %v1345 = vunpack.c.l.b16 %v747
    %v1346 = vunpack.c.h.b16 %v747
    %v1347 = vunpack.c.l.b16 %v748
    %v1348 = vunpack.c.h.b16 %v748
    %v1349 = vunpack.c.l.b16 %v749
    %v1350 = vunpack.c.h.b16 %v749
    %v1351 = vunpack.c.l.b16 %v750
    %v1352 = vunpack.c.h.b16 %v750
    %v1353 = vunpack.c.l.b16 %v751
    %v1354 = vunpack.c.h.b16 %v751
    %v1355 = vunpack.c.l.b16 %v752
    %v1356 = vunpack.c.h.b16 %v752
    %v1357 = vunpack.c.l.b16 %v753
    %v1358 = vunpack.c.h.b16 %v753
    %v1359 = vunpack.c.l.b16 %v754
    %v1360 = vunpack.c.h.b16 %v754
    %v1361 = vunpack.c.l.b16 %v755
    %v1362 = vunpack.c.h.b16 %v755
    %v1363 = vunpack.c.l.b16 %v756
    %v1364 = vunpack.c.h.b16 %v756
    %v1365 = vunpack.c.l.b16 %v757
    %v1366 = vunpack.c.h.b16 %v757
    %v1367 = vunpack.c.l.b16 %v758
    %v1368 = vunpack.c.h.b16 %v758
    %v1369 = vunpack.c.l.b16 %v759
    %v1370 = vunpack.c.h.b16 %v759
    %v1371 = vunpack.c.l.b16 %v760
    %v1372 = vunpack.c.h.b16 %v760
    %v1373 = vunpack.c.l.b16 %v761
    %v1374 = vunpack.c.h.b16 %v761
    %v1375 = vunpack.c.l.b16 %v762
    %v1376 = vunpack.c.h.b16 %v762
    %v1377 = vunpack.c.l.b16 %v763
    %v1378 = vunpack.c.h.b16 %v763
    %v1379 = vunpack.c.l.b16 %v764
    %v1380 = vunpack.c.h.b16 %v764
    %v1381 = vunpack.c.l.b16 %v765
    %v1382 = vunpack.c.h.b16 %v765
    %v1383 = vunpack.c.l.b16 %v766
    %v1384 = vunpack.c.h.b16 %v766
    %v1385 = vunpack.c.l.b16 %v767
    %v1386 = vunpack.c.h.b16 %v767
    %v1387 = vunpack.c.l.b16 %v768
    %v1388 = vunpack.c.h.b16 %v768
    %v1389 = vunpack.c.l.b16 %v769
    %v1390 = vunpack.c.h.b16 %v769
    %v1391 = vunpack.c.l.b16 %v770
    %v1392 = vunpack.c.h.b16 %v770
    %v1393 = vunpack.c.l.b16 %v771
    %v1394 = vunpack.c.h.b16 %v771
    %v1395 = vunpack.c.l.b16 %v772
    %v1396 = vunpack.c.h.b16 %v772
    %v1397 = vunpack.c.l.b16 %v773
    %v1398 = vunpack.c.h.b16 %v773
    %v1399 = vunpack.c.l.b16 %v774
    %v1400 = vunpack.c.h.b16 %v774
    %v1401 = vunpack.c.l.b16 %v775
    %v1402 = vunpack.c.h.b16 %v775
    %v1403 = vunpack.c.l.b16 %v776
    %v1404 = vunpack.c.h.b16 %v776
    %v1405 = vunpack.c.l.b16 %v777
    %v1406 = vunpack.c.h.b16 %v777
    %v1407 = vunpack.c.l.b16 %v778
    %v1408 = vunpack.c.h.b16 %v778
    %v1409 = vunpack.c.l.b16 %v779
    %v1410 = vunpack.c.h.b16 %v779
    %v1411 = vunpack.c.l.b16 %v780
    %v1412 = vunpack.c.h.b16 %v780
    %v1413 = vunpack.c.l.b16 %v781
    %v1414 = vunpack.c.h.b16 %v781
    %v1415 = vunpack.c.l.b16 %v782
    %v1416 = vunpack.c.h.b16 %v782
    %v1417 = vunpack.c.l.b16 %v783
    %v1418 = vunpack.c.h.b16 %v783
    %v1419 = vunpack.c.l.b16 %v784
    %v1420 = vunpack.c.h.b16 %v784
    %v1421 = vunpack.c.l.b16 %v785
    %v1422 = vunpack.c.h.b16 %v785
    %v1423 = vunpack.c.l.b16 %v786
    %v1424 = vunpack.c.h.b16 %v786
    %v1425 = vunpack.c.l.b16 %v787
    %v1426 = vunpack.c.h.b16 %v787
    %v1427 = vunpack.c.l.b16 %v788
    %v1428 = vunpack.c.h.b16 %v788
    %v1429 = vunpack.c.l.b16 %v789
    %v1430 = vunpack.c.h.b16 %v789
    %v1431 = vunpack.c.l.b16 %v790
    %v1432 = vunpack.c.h.b16 %v790
    %v1433 = vunpack.c.l.b16 %v791
    %v1434 = vunpack.c.h.b16 %v791
    %v1435 = vunpack.c.l.b16 %v792
    %v1436 = vunpack.c.h.b16 %v792
    %v1437 = vunpack.c.l.b16 %v793
    %v1438 = vunpack.c.h.b16 %v793
    %v1439 = vunpack.c.l.b16 %v794
    %v1440 = vunpack.c.h.b16 %v794
    %v1441 = vunpack.c.l.b16 %v795
    %v1442 = vunpack.c.h.b16 %v795
    %v1443 = vunpack.c.l.b16 %v796
    %v1444 = vunpack.c.h.b16 %v796
    %v1445 = vunpack.c.l.b16 %v797
    %v1446 = vunpack.c.h.b16 %v797
    %v1447 = vunpack.c.l.b16 %v798
    %v1448 = vunpack.c.h.b16 %v798
    %v1449 = vunpack.c.l.b16 %v799
    %v1450 = vunpack.c.h.b16 %v799
    %v1451 = vunpack.c.l.b16 %v800
    %v1452 = vunpack.c.h.b16 %v800
    %v1453 = vunpack.c.l.b16 %v801
    %v1454 = vunpack.c.h.b16 %v801
    %v1455 = vunpack.c.l.b16 %v802
    %v1456 = vunpack.c.h.b16 %v802
    %v1457 = vunpack.c.l.b16 %v803
    %v1458 = vunpack.c.h.b16 %v803
    %v1459 = vunpack.c.l.b16 %v804
    %v1460 = vunpack.c.h.b16 %v804
    %v1461 = vunpack.c.l.b16 %v805
    %v1462 = vunpack.c.h.b16 %v805
    %v1463 = vunpack.c.l.b16 %v806
    %v1464 = vunpack.c.h.b16 %v806
    %v1465 = vunpack.c.l.b16 %v807
    %v1466 = vunpack.c.h.b16 %v807
    %v1467 = vunpack.c.l.b16 %v808
    %v1468 = vunpack.c.h.b16 %v808
    %v1469 = vunpack.c.l.b16 %v809
    %v1470 = vunpack.c.h.b16 %v809
    %v1471 = vunpack.c.l.b16 %v810
    %v1472 = vunpack.c.h.b16 %v810
    %v1473 = vunpack.c.l.b16 %v811
    %v1474 = vunpack.c.h.b16 %v811
    %v1475 = vunpack.c.l.b16 %v812
    %v1476 = vunpack.c.h.b16 %v812
    %v1477 = vunpack.c.l.b16 %v813
    %v1478 = vunpack.c.h.b16 %v813
    %v1479 = vunpack.c.l.b16 %v814
    %v1480 = vunpack.c.h.b16 %v814
    %v1481 = vunpack.c.l.b16 %v815
    %v1482 = vunpack.c.h.b16 %v815
    %v1483 = vunpack.c.l.b16 %v816
    %v1484 = vunpack.c.h.b16 %v816
    %v1485 = vunpack.c.l.b16 %v817
    %v1486 = vunpack.c.h.b16 %v817
    %v1487 = vunpack.c.l.b16 %v818
    %v1488 = vunpack.c.h.b16 %v818
    %v1489 = vunpack.c.l.b16 %v819
    %v1490 = vunpack.c.h.b16 %v819
    %v1491 = vunpack.c.l.b16 %v820
    %v1492 = vunpack.c.h.b16 %v820
    %v1493 = vunpack.c.l.b16 %v821
    %v1494 = vunpack.c.h.b16 %v821
    %v1495 = vunpack.c.l.b16 %v822
    %v1496 = vunpack.c.h.b16 %v822
    %v1497 = vunpack.c.l.b16 %v823
    %v1498 = vunpack.c.h.b16 %v823
    %v1499 = vunpack.c.l.b16 %v824
    %v1500 = vunpack.c.h.b16 %v824
    %v1501 = vunpack.c.l.b16 %v825
    %v1502 = vunpack.c.h.b16 %v825
    %v1503 = vunpack.c.l.b16 %v826
    %v1504 = vunpack.c.h.b16 %v826
    %v1505 = vunpack.c.l.b16 %v827
    %v1506 = vunpack.c.h.b16 %v827
    %v1507 = vunpack.c.l.b16 %v828
    %v1508 = vunpack.c.h.b16 %v828
    %v1509 = vunpack.c.l.b16 %v829
    %v1510 = vunpack.c.h.b16 %v829
    %v1511 = vunpack.c.l.b16 %v830
    %v1512 = vunpack.c.h.b16 %v830
    %v1513 = vunpack.c.l.b16 %v831
    %v1514 = vunpack.c.h.b16 %v831
    %v1515 = vunpack.c.l.b16 %v832
    %v1516 = vunpack.c.h.b16 %v832
    %v1517 = vunpack.c.l.b16 %v833
    %v1518 = vunpack.c.h.b16 %v833
    %v1519 = vunpack.c.l.b16 %v834
    %v1520 = vunpack.c.h.b16 %v834
    %v1521 = vunpack.c.l.b16 %v835
    %v1522 = vunpack.c.h.b16 %v835
    %v1523 = vunpack.c.l.b16 %v836
    %v1524 = vunpack.c.h.b16 %v836
    %v1525 = vunpack.c.l.b16 %v837
    %v1526 = vunpack.c.h.b16 %v837
    %v1527 = vunpack.c.l.b16 %v838
    %v1528 = vunpack.c.h.b16 %v838
    %v1529 = vunpack.c.l.b16 %v839
    %v1530 = vunpack.c.h.b16 %v839
    %v1531 = vunpack.c.l.b16 %v840
    %v1532 = vunpack.c.h.b16 %v840
    %v1533 = vunpack.c.l.b16 %v841
    %v1534 = vunpack.c.h.b16 %v841
    %v1535 = vunpack.c.l.b16 %v842
    %v1536 = vunpack.c.h.b16 %v842
    %v1537 = vunpack.c.l.b16 %v843
    %v1538 = vunpack.c.h.b16 %v843
    %v1539 = vunpack.c.l.b16 %v844
    %v1540 = vunpack.c.h.b16 %v844
    %v1541 = vunpack.c.l.b16 %v845
    %v1542 = vunpack.c.h.b16 %v845
    %v1543 = vunpack.c.l.b16 %v846
    %v1544 = vunpack.c.h.b16 %v846
    %v1545 = vunpack.c.l.b16 %v847
    %v1546 = vunpack.c.h.b16 %v847
    %v1547 = vunpack.c.l.b16 %v848
    %v1548 = vunpack.c.h.b16 %v848
    %v1549 = vunpack.c.l.b16 %v849
    %v1550 = vunpack.c.h.b16 %v849
    %v1551 = vunpack.c.l.b16 %v850
    %v1552 = vunpack.c.h.b16 %v850
    %v1553 = vunpack.c.l.b16 %v851
    %v1554 = vunpack.c.h.b16 %v851
    %v1555 = vunpack.c.l.b16 %v852
    %v1556 = vunpack.c.h.b16 %v852
    %v1557 = vunpack.c.l.b16 %v853
    %v1558 = vunpack.c.h.b16 %v853
    %v1559 = vunpack.c.l.b16 %v854
    %v1560 = vunpack.c.h.b16 %v854
    %v1561 = vunpack.c.l.b16 %v855
    %v1562 = vunpack.c.h.b16 %v855
    %v1563 = vunpack.c.l.b16 %v856
    %v1564 = vunpack.c.h.b16 %v856
    %v1565 = vunpack.c.l.b16 %v857
    %v1566 = vunpack.c.h.b16 %v857
    %v1567 = vunpack.c.l.b16 %v858
    %v1568 = vunpack.c.h.b16 %v858
    %v1569 = vunpack.c.l.b16 %v859
    %v1570 = vunpack.c.h.b16 %v859
    %v1571 = vunpack.c.l.b16 %v860
    %v1572 = vunpack.c.h.b16 %v860
    %v1573 = vunpack.c.l.b16 %v861
    %v1574 = vunpack.c.h.b16 %v861
    %v1575 = vunpack.c.l.b16 %v862
    %v1576 = vunpack.c.h.b16 %v862
    %v1577 = vunpack.c.l.b16 %v863
    %v1578 = vunpack.c.h.b16 %v863
    %v1579 = vunpack.c.l.b16 %v864
    %v1580 = vunpack.c.h.b16 %v864
    %v1581 = vunpack.c.l.b16 %v865
    %v1582 = vunpack.c.h.b16 %v865
    %v1583 = vunpack.c.l.b16 %v866
    %v1584 = vunpack.c.h.b16 %v866
    %v1585 = vunpack.c.l.b16 %v867
    %v1586 = vunpack.c.h.b16 %v867
    %v1587 = vunpack.c.l.b16 %v868
    %v1588 = vunpack.c.h.b16 %v868
    %v1589 = vunpack.c.l.b16 %v869
    %v1590 = vunpack.c.h.b16 %v869
    %v1591 = vunpack.c.l.b16 %v870
    %v1592 = vunpack.c.h.b16 %v870
    %v1593 = vunpack.c.l.b16 %v871
    %v1594 = vunpack.c.h.b16 %v871
    %v1595 = vunpack.c.l.b16 %v872
    %v1596 = vunpack.c.h.b16 %v872
    %v1597 = vunpack.c.l.b16 %v873
    %v1598 = vunpack.c.h.b16 %v873
    %v1599 = vunpack.c.l.b16 %v874
    %v1600 = vunpack.c.h.b16 %v874
    %v1601 = vunpack.c.l.b16 %v875
    %v1602 = vunpack.c.h.b16 %v875
    %v1603 = vunpack.c.l.b16 %v876
    %v1604 = vunpack.c.h.b16 %v876
    %v1605 = vunpack.c.l.b16 %v877
    %v1606 = vunpack.c.h.b16 %v877
    %v1607 = vunpack.c.l.b16 %v878
    %v1608 = vunpack.c.h.b16 %v878
    %v1609 = vunpack.c.l.b16 %v879
    %v1610 = vunpack.c.h.b16 %v879
    %v1611 = vunpack.c.l.b16 %v880
    %v1612 = vunpack.c.h.b16 %v880
    %v1613 = vunpack.c.l.b16 %v881
    %v1614 = vunpack.c.h.b16 %v881
    %v1615 = vunpack.c.l.b16 %v882
    %v1616 = vunpack.c.h.b16 %v882
    %v1617 = vunpack.c.l.b16 %v883
    %v1618 = vunpack.c.h.b16 %v883
    %v1619 = vunpack.c.l.b16 %v884
    %v1620 = vunpack.c.h.b16 %v884
    %v1621 = vunpack.c.l.b16 %v885
    %v1622 = vunpack.c.h.b16 %v885
    %v1623 = vunpack.c.l.b16 %v886
    %v1624 = vunpack.c.h.b16 %v886
    %v1625 = vunpack.c.l.b16 %v887
    %v1626 = vunpack.c.h.b16 %v887
    %v1627 = vunpack.c.l.b16 %v888
    %v1628 = vunpack.c.h.b16 %v888
    %v1629 = vunpack.c.l.b16 %v889
    %v1630 = vunpack.c.h.b16 %v889
    %v1631 = vunpack.c.l.b16 %v890
    %v1632 = vunpack.c.h.b16 %v890
    %v1633 = vunpack.c.l.b16 %v891
    %v1634 = vunpack.c.h.b16 %v891
    %v1635 = vunpack.c.l.b16 %v892
    %v1636 = vunpack.c.h.b16 %v892
    %v1637 = vunpack.c.l.b16 %v893
    %v1638 = vunpack.c.h.b16 %v893
    %v1639 = vunpack.c.l.b16 %v894
    %v1640 = vunpack.c.h.b16 %v894
    %v1641 = vunpack.c.l.b16 %v895
    %v1642 = vunpack.c.h.b16 %v895
    %v1643 = vunpack.c.l.b16 %v896
    %v1644 = vunpack.c.h.b16 %v896
    %v1645 = vunpack.c.l.b16 %v897
    %v1646 = vunpack.c.h.b16 %v897
    %v1647 = vunpack.c.l.b16 %v898
    %v1648 = vunpack.c.h.b16 %v898
    %v1649 = vunpack.c.l.b16 %v899
    %v1650 = vunpack.c.h.b16 %v899
    %v1651 = vunpack.c.l.b16 %v900
    %v1652 = vunpack.c.h.b16 %v900
    %v1653 = vunpack.c.l.b16 %v901
    %v1654 = vunpack.c.h.b16 %v901
    %v1655 = vunpack.c.l.b16 %v902
    %v1656 = vunpack.c.h.b16 %v902
    %v1657 = vunpack.c.l.b16 %v903
    %v1658 = vunpack.c.h.b16 %v903
    %v1659 = vunpack.c.l.b16 %v904
    %v1660 = vunpack.c.h.b16 %v904
    %v1661 = vunpack.c.l.b16 %v905
    %v1662 = vunpack.c.h.b16 %v905
    %v1663 = vunpack.c.l.b16 %v906
    %v1664 = vunpack.c.h.b16 %v906
    %v1665 = vunpack.c.l.b16 %v907
    %v1666 = vunpack.c.h.b16 %v907
    %v1667 = vunpack.c.l.b16 %v908
    %v1668 = vunpack.c.h.b16 %v908
    %v1669 = vunpack.c.l.b16 %v909
    %v1670 = vunpack.c.h.b16 %v909
    %v1671 = vunpack.c.l.b16 %v910
    %v1672 = vunpack.c.h.b16 %v910
    %v1673 = vunpack.c.l.b16 %v911
    %v1674 = vunpack.c.h.b16 %v911
    %v1675 = vunpack.c.l.b16 %v912
    %v1676 = vunpack.c.h.b16 %v912
    %v1677 = vunpack.c.l.b16 %v913
    %v1678 = vunpack.c.h.b16 %v913
    %v1679 = vunpack.c.l.b16 %v914
    %v1680 = vunpack.c.h.b16 %v914
    %v1681 = vunpack.c.l.b16 %v915
    %v1682 = vunpack.c.h.b16 %v915
    %v1683 = vunpack.c.l.b16 %v916
    %v1684 = vunpack.c.h.b16 %v916
    %v1685 = vunpack.c.l.b16 %v917
    %v1686 = vunpack.c.h.b16 %v917
    %v1687 = vunpack.c.l.b16 %v918
    %v1688 = vunpack.c.h.b16 %v918
    %v1689 = vunpack.c.l.b16 %v919
    %v1690 = vunpack.c.h.b16 %v919
    %v1691 = vunpack.c.l.b16 %v920
    %v1692 = vunpack.c.h.b16 %v920
    %v1693 = vunpack.c.l.b16 %v921
    %v1694 = vunpack.c.h.b16 %v921
    %v1695 = vunpack.c.l.b16 %v922
    %v1696 = vunpack.c.h.b16 %v922
    %v1697 = vunpack.c.l.b16 %v923
    %v1698 = vunpack.c.h.b16 %v923
    %v1699 = vunpack.c.l.b16 %v924
    %v1700 = vunpack.c.h.b16 %v924
    %v1701 = vunpack.c.l.b16 %v925
    %v1702 = vunpack.c.h.b16 %v925
    %v1703 = vunpack.c.l.b16 %v926
    %v1704 = vunpack.c.h.b16 %v926
    %v1705 = vunpack.c.l.b16 %v927
    %v1706 = vunpack.c.h.b16 %v927
    %v1707 = vunpack.c.l.b16 %v928
    %v1708 = vunpack.c.h.b16 %v928
    %v1709 = vunpack.c.l.b16 %v929
    %v1710 = vunpack.c.h.b16 %v929
    %v1711 = vunpack.c.l.b16 %v930
    %v1712 = vunpack.c.h.b16 %v930
    %v1713 = vunpack.c.l.b16 %v931
    %v1714 = vunpack.c.h.b16 %v931
    %v1715 = vunpack.c.l.b16 %v932
    %v1716 = vunpack.c.h.b16 %v932
    %v1717 = vunpack.c.l.b16 %v933
    %v1718 = vunpack.c.h.b16 %v933
    %v1719 = vunpack.c.l.b16 %v934
    %v1720 = vunpack.c.h.b16 %v934
    %v1721 = vpack.c.b16 %v1217, %v1209
    %v1722 = vpack.c.b16 %v1218, %v1210
    %v1723 = vpack.c.b16 %v1219, %v1211
    %v1724 = vpack.c.b16 %v1220, %v1212
    %v1725 = vpack.c.b16 %v1221, %v1213
    %v1726 = vpack.c.b16 %v1222, %v1214
    %v1727 = vpack.c.b16 %v1223, %v1215
    %v1728 = vpack.c.b16 %v1224, %v1216
    %v1729 = vpack.c.b16 %v1233, %v1225
    %v1730 = vpack.c.b16 %v1234, %v1226
    %v1731 = vpack.c.b16 %v1235, %v1227
    %v1732 = vpack.c.b16 %v1236, %v1228
    %v1733 = vpack.c.b16 %v1237, %v1229
    %v1734 = vpack.c.b16 %v1238, %v1230
    %v1735 = vpack.c.b16 %v1239, %v1231
    %v1736 = vpack.c.b16 %v1240, %v1232
    %v1737 = vpack.c.b16 %v1249, %v1241
    %v1738 = vpack.c.b16 %v1250, %v1242
    %v1739 = vpack.c.b16 %v1251, %v1243
    %v1740 = vpack.c.b16 %v1252, %v1244
    %v1741 = vpack.c.b16 %v1253, %v1245
    %v1742 = vpack.c.b16 %v1254, %v1246
    %v1743 = vpack.c.b16 %v1255, %v1247
    %v1744 = vpack.c.b16 %v1256, %v1248
    %v1745 = vpack.c.b16 %v1265, %v1257
    %v1746 = vpack.c.b16 %v1266, %v1258
    %v1747 = vpack.c.b16 %v1267, %v1259
    %v1748 = vpack.c.b16 %v1268, %v1260
    %v1749 = vpack.c.b16 %v1269, %v1261
    %v1750 = vpack.c.b16 %v1270, %v1262
    %v1751 = vpack.c.b16 %v1271, %v1263
    %v1752 = vpack.c.b16 %v1272, %v1264
    %v1753 = vpack.c.b16 %v1281, %v1273
    %v1754 = vpack.c.b16 %v1282, %v1274
    %v1755 = vpack.c.b16 %v1283, %v1275
    %v1756 = vpack.c.b16 %v1284, %v1276
    %v1757 = vpack.c.b16 %v1285, %v1277
    %v1758 = vpack.c.b16 %v1286, %v1278
    %v1759 = vpack.c.b16 %v1287, %v1279
    %v1760 = vpack.c.b16 %v1288, %v1280
    %v1761 = vpack.c.b16 %v1297, %v1289
    %v1762 = vpack.c.b16 %v1298, %v1290
    %v1763 = vpack.c.b16 %v1299, %v1291
    %v1764 = vpack.c.b16 %v1300, %v1292
    %v1765 = vpack.c.b16 %v1301, %v1293
    %v1766 = vpack.c.b16 %v1302, %v1294
    %v1767 = vpack.c.b16 %v1303, %v1295
    %v1768 = vpack.c.b16 %v1304, %v1296
    %v1769 = vpack.c.b16 %v1313, %v1305
    %v1770 = vpack.c.b16 %v1314, %v1306
    %v1771 = vpack.c.b16 %v1315, %v1307
    %v1772 = vpack.c.b16 %v1316, %v1308
    %v1773 = vpack.c.b16 %v1317, %v1309
    %v1774 = vpack.c.b16 %v1318, %v1310
    %v1775 = vpack.c.b16 %v1319, %v1311
    %v1776 = vpack.c.b16 %v1320, %v1312
    %v1777 = vpack.c.b16 %v1329, %v1321
    %v1778 = vpack.c.b16 %v1330, %v1322
    %v1779 = vpack.c.b16 %v1331, %v1323
    %v1780 = vpack.c.b16 %v1332, %v1324
    %v1781 = vpack.c.b16 %v1333, %v1325
    %v1782 = vpack.c.b16 %v1334, %v1326
    %v1783 = vpack.c.b16 %v1335, %v1327
    %v1784 = vpack.c.b16 %v1336, %v1328
    %v1785 = vpack.c.b16 %v1345, %v1337
    %v1786 = vpack.c.b16 %v1346, %v1338
    %v1787 = vpack.c.b16 %v1347, %v1339
    %v1788 = vpack.c.b16 %v1348, %v1340
    %v1789 = vpack.c.b16 %v1349, %v1341
    %v1790 = vpack.c.b16 %v1350, %v1342
    %v1791 = vpack.c.b16 %v1351, %v1343
    %v1792 = vpack.c.b16 %v1352, %v1344
    %v1793 = vpack.c.b16 %v1361, %v1353
    %v1794 = vpack.c.b16 %v1362, %v1354
    %v1795 = vpack.c.b16 %v1363, %v1355
    %v1796 = vpack.c.b16 %v1364, %v1356
    %v1797 = vpack.c.b16 %v1365, %v1357
    %v1798 = vpack.c.b16 %v1366, %v1358
    %v1799 = vpack.c.b16 %v1367, %v1359
    %v1800 = vpack.c.b16 %v1368, %v1360
    %v1801 = vpack.c.b16 %v1377, %v1369
    %v1802 = vpack.c.b16 %v1378, %v1370
    %v1803 = vpack.c.b16 %v1379, %v1371
    %v1804 = vpack.c.b16 %v1380, %v1372
    %v1805 = vpack.c.b16 %v1381, %v1373
    %v1806 = vpack.c.b16 %v1382, %v1374
    %v1807 = vpack.c.b16 %v1383, %v1375
    %v1808 = vpack.c.b16 %v1384, %v1376
    %v1809 = vpack.c.b16 %v1393, %v1385
    %v1810 = vpack.c.b16 %v1394, %v1386
    %v1811 = vpack.c.b16 %v1395, %v1387
    %v1812 = vpack.c.b16 %v1396, %v1388
    %v1813 = vpack.c.b16 %v1397, %v1389
    %v1814 = vpack.c.b16 %v1398, %v1390
    %v1815 = vpack.c.b16 %v1399, %v1391
    %v1816 = vpack.c.b16 %v1400, %v1392
    %v1817 = vpack.c.b16 %v1409, %v1401
    %v1818 = vpack.c.b16 %v1410, %v1402
    %v1819 = vpack.c.b16 %v1411, %v1403
    %v1820 = vpack.c.b16 %v1412, %v1404
    %v1821 = vpack.c.b16 %v1413, %v1405
    %v1822 = vpack.c.b16 %v1414, %v1406
    %v1823 = vpack.c.b16 %v1415, %v1407
    %v1824 = vpack.c.b16 %v1416, %v1408
    %v1825 = vpack.c.b16 %v1425, %v1417
    %v1826 = vpack.c.b16 %v1426, %v1418
    %v1827 = vpack.c.b16 %v1427, %v1419
    %v1828 = vpack.c.b16 %v1428, %v1420
    %v1829 = vpack.c.b16 %v1429, %v1421
    %v1830 = vpack.c.b16 %v1430, %v1422
    %v1831 = vpack.c.b16 %v1431, %v1423
    %v1832 = vpack.c.b16 %v1432, %v1424
    %v1833 = vpack.c.b16 %v1441, %v1433
    %v1834 = vpack.c.b16 %v1442, %v1434
    %v1835 = vpack.c.b16 %v1443, %v1435
    %v1836 = vpack.c.b16 %v1444, %v1436
    %v1837 = vpack.c.b16 %v1445, %v1437
    %v1838 = vpack.c.b16 %v1446, %v1438
    %v1839 = vpack.c.b16 %v1447, %v1439
    %v1840 = vpack.c.b16 %v1448, %v1440
    %v1841 = vpack.c.b16 %v1457, %v1449
    %v1842 = vpack.c.b16 %v1458, %v1450
    %v1843 = vpack.c.b16 %v1459, %v1451
    %v1844 = vpack.c.b16 %v1460, %v1452
    %v1845 = vpack.c.b16 %v1461, %v1453
    %v1846 = vpack.c.b16 %v1462, %v1454
    %v1847 = vpack.c.b16 %v1463, %v1455
    %v1848 = vpack.c.b16 %v1464, %v1456
    %v1849 = vpack.c.b16 %v1473, %v1465
    %v1850 = vpack.c.b16 %v1474, %v1466
    %v1851 = vpack.c.b16 %v1475, %v1467
    %v1852 = vpack.c.b16 %v1476, %v1468
    %v1853 = vpack.c.b16 %v1477, %v1469
    %v1854 = vpack.c.b16 %v1478, %v1470
    %v1855 = vpack.c.b16 %v1479, %v1471
    %v1856 = vpack.c.b16 %v1480, %v1472
    %v1857 = vpack.c.b16 %v1489, %v1481
    %v1858 = vpack.c.b16 %v1490, %v1482
    %v1859 = vpack.c.b16 %v1491, %v1483
    %v1860 = vpack.c.b16 %v1492, %v1484
    %v1861 = vpack.c.b16 %v1493, %v1485
    %v1862 = vpack.c.b16 %v1494, %v1486
    %v1863 = vpack.c.b16 %v1495, %v1487
    %v1864 = vpack.c.b16 %v1496, %v1488
    %v1865 = vpack.c.b16 %v1505, %v1497
    %v1866 = vpack.c.b16 %v1506, %v1498
    %v1867 = vpack.c.b16 %v1507, %v1499
    %v1868 = vpack.c.b16 %v1508, %v1500
    %v1869 = vpack.c.b16 %v1509, %v1501
    %v1870 = vpack.c.b16 %v1510, %v1502
    %v1871 = vpack.c.b16 %v1511, %v1503
    %v1872 = vpack.c.b16 %v1512, %v1504
    %v1873 = vpack.c.b16 %v1521, %v1513
    %v1874 = vpack.c.b16 %v1522, %v1514
    %v1875 = vpack.c.b16 %v1523, %v1515
    %v1876 = vpack.c.b16 %v1524, %v1516
    %v1877 = vpack.c.b16 %v1525, %v1517
    %v1878 = vpack.c.b16 %v1526, %v1518
    %v1879 = vpack.c.b16 %v1527, %v1519
    %v1880 = vpack.c.b16 %v1528, %v1520
    %v1881 = vpack.c.b16 %v1537, %v1529
    %v1882 = vpack.c.b16 %v1538, %v1530
    %v1883 = vpack.c.b16 %v1539, %v1531
    %v1884 = vpack.c.b16 %v1540, %v1532
    %v1885 = vpack.c.b16 %v1541, %v1533
    %v1886 = vpack.c.b16 %v1542, %v1534
    %v1887 = vpack.c.b16 %v1543, %v1535
    %v1888 = vpack.c.b16 %v1544, %v1536
    %v1889 = vpack.c.b16 %v1553, %v1545
    %v1890 = vpack.c.b16 %v1554, %v1546
    %v1891 = vpack.c.b16 %v1555, %v1547
    %v1892 = vpack.c.b16 %v1556, %v1548
    %v1893 = vpack.c.b16 %v1557, %v1549
    %v1894 = vpack.c.b16 %v1558, %v1550
    %v1895 = vpack.c.b16 %v1559, %v1551
    %v1896 = vpack.c.b16 %v1560, %v1552
    %v1897 = vpack.c.b16 %v1569, %v1561
    %v1898 = vpack.c.b16 %v1570, %v1562
    %v1899 = vpack.c.b16 %v1571, %v1563
    %v1900 = vpack.c.b16 %v1572, %v1564
    %v1901 = vpack.c.b16 %v1573, %v1565
    %v1902 = vpack.c.b16 %v1574, %v1566
    %v1903 = vpack.c.b16 %v1575, %v1567
    %v1904 = vpack.c.b16 %v1576, %v1568
    %v1905 = vpack.c.b16 %v1585, %v1577
    %v1906 = vpack.c.b16 %v1586, %v1578
    %v1907 = vpack.c.b16 %v1587, %v1579
    %v1908 = vpack.c.b16 %v1588, %v1580
    %v1909 = vpack.c.b16 %v1589, %v1581
    %v1910 = vpack.c.b16 %v1590, %v1582
    %v1911 = vpack.c.b16 %v1591, %v1583
    %v1912 = vpack.c.b16 %v1592, %v1584
    %v1913 = vpack.c.b16 %v1601, %v1593
    %v1914 = vpack.c.b16 %v1602, %v1594
    %v1915 = vpack.c.b16 %v1603, %v1595
    %v1916 = vpack.c.b16 %v1604, %v1596
    %v1917 = vpack.c.b16 %v1605, %v1597
    %v1918 = vpack.c.b16 %v1606, %v1598
    %v1919 = vpack.c.b16 %v1607, %v1599
    %v1920 = vpack.c.b16 %v1608, %v1600
    %v1921 = vpack.c.b16 %v1617, %v1609
    %v1922 = vpack.c.b16 %v1618, %v1610
    %v1923 = vpack.c.b16 %v1619, %v1611
    %v1924 = vpack.c.b16 %v1620, %v1612
    %v1925 = vpack.c.b16 %v1621, %v1613
    %v1926 = vpack.c.b16 %v1622, %v1614
    %v1927 = vpack.c.b16 %v1623, %v1615
    %v1928 = vpack.c.b16 %v1624, %v1616
    %v1929 = vpack.c.b16 %v1633, %v1625
    %v1930 = vpack.c.b16 %v1634, %v1626
    %v1931 = vpack.c.b16 %v1635, %v1627
    %v1932 = vpack.c.b16 %v1636, %v1628
    %v1933 = vpack.c.b16 %v1637, %v1629
    %v1934 = vpack.c.b16 %v1638, %v1630
    %v1935 = vpack.c.b16 %v1639, %v1631
    %v1936 = vpack.c.b16 %v1640, %v1632
    %v1937 = vpack.c.b16 %v1649, %v1641
    %v1938 = vpack.c.b16 %v1650, %v1642
    %v1939 = vpack.c.b16 %v1651, %v1643
    %v1940 = vpack.c.b16 %v1652, %v1644
    %v1941 = vpack.c.b16 %v1653, %v1645
    %v1942 = vpack.c.b16 %v1654, %v1646
    %v1943 = vpack.c.b16 %v1655, %v1647
    %v1944 = vpack.c.b16 %v1656, %v1648
    %v1945 = vpack.c.b16 %v1665, %v1657
    %v1946 = vpack.c.b16 %v1666, %v1658
    %v1947 = vpack.c.b16 %v1667, %v1659
    %v1948 = vpack.c.b16 %v1668, %v1660
    %v1949 = vpack.c.b16 %v1669, %v1661
    %v1950 = vpack.c.b16 %v1670, %v1662
    %v1951 = vpack.c.b16 %v1671, %v1663
    %v1952 = vpack.c.b16 %v1672, %v1664
    %v1953 = vpack.c.b16 %v1681, %v1673
    %v1954 = vpack.c.b16 %v1682, %v1674
    %v1955 = vpack.c.b16 %v1683, %v1675
    %v1956 = vpack.c.b16 %v1684, %v1676
    %v1957 = vpack.c.b16 %v1685, %v1677
    %v1958 = vpack.c.b16 %v1686, %v1678
    %v1959 = vpack.c.b16 %v1687, %v1679
    %v1960 = vpack.c.b16 %v1688, %v1680
    %v1961 = vpack.c.b16 %v1697, %v1689
    %v1962 = vpack.c.b16 %v1698, %v1690
    %v1963 = vpack.c.b16 %v1699, %v1691
    %v1964 = vpack.c.b16 %v1700, %v1692
    %v1965 = vpack.c.b16 %v1701, %v1693
    %v1966 = vpack.c.b16 %v1702, %v1694
    %v1967 = vpack.c.b16 %v1703, %v1695
    %v1968 = vpack.c.b16 %v1704, %v1696
    %v1969 = vpack.c.b16 %v1713, %v1705
    %v1970 = vpack.c.b16 %v1714, %v1706
    %v1971 = vpack.c.b16 %v1715, %v1707
    %v1972 = vpack.c.b16 %v1716, %v1708
    %v1973 = vpack.c.b16 %v1717, %v1709
    %v1974 = vpack.c.b16 %v1718, %v1710
    %v1975 = vpack.c.b16 %v1719, %v1711
    %v1976 = vpack.c.b16 %v1720, %v1712
    %2233 = vmatpush.bf16.msra.mxu0 %v1777
    %2234 = vmatpush.bf16.msra.mxu0 %v1769
    %2235 = vmatpush.bf16.msra.mxu0 %v1761
    %2236 = vmatpush.bf16.msra.mxu0 %v1753
    %2237 = vmatpush.bf16.msra.mxu0 %v1745
    %2238 = vmatpush.bf16.msra.mxu0 %v1737
    %2239 = vmatpush.bf16.msra.mxu0 %v1729
    %2240 = vmatpush.bf16.msra.mxu0 %v1721
    %2241 = vmatmul.bf16.gmra.mxu0 %v675
    %v2242 = vpop.f32.mrf.mxu0
    %v2243 = vadd.f32 %v937, %v2242
    %v2244 = vpop.f32.mrf.mxu0
    %2245 = vdwg.mxu0
    %2246 = vmatpush.bf16.msra.mxu0 %v1841
    %2247 = vmatpush.bf16.msra.mxu0 %v1833
    %2248 = vmatpush.bf16.msra.mxu0 %v1825
    %2249 = vmatpush.bf16.msra.mxu0 %v1817
    %2250 = vmatpush.bf16.msra.mxu0 %v1809
    %2251 = vmatpush.bf16.msra.mxu0 %v1801
    %2252 = vmatpush.bf16.msra.mxu0 %v1793
    %2253 = vmatpush.bf16.msra.mxu0 %v1785
    %2254 = vmatmul.bf16.gmra.mxu0 %v676
    %v2255 = vpop.f32.mrf.mxu0
    %v2256 = vadd.f32 %v2243, %v2255
    %v2257 = vpop.f32.mrf.mxu0
    %2258 = vdwg.mxu0
    %2259 = vmatpush.bf16.msra.mxu0 %v1905
    %2260 = vmatpush.bf16.msra.mxu0 %v1897
    %2261 = vmatpush.bf16.msra.mxu0 %v1889
    %2262 = vmatpush.bf16.msra.mxu0 %v1881
    %2263 = vmatpush.bf16.msra.mxu0 %v1873
    %2264 = vmatpush.bf16.msra.mxu0 %v1865
    %2265 = vmatpush.bf16.msra.mxu0 %v1857
    %2266 = vmatpush.bf16.msra.mxu0 %v1849
    %2267 = vmatmul.bf16.gmra.mxu0 %v677
    %v2268 = vpop.f32.mrf.mxu0
    %v2269 = vadd.f32 %v2256, %v2268
    %v2270 = vpop.f32.mrf.mxu0
    %2271 = vdwg.mxu0
    %2272 = vmatpush.bf16.msra.mxu0 %v1969
    %2273 = vmatpush.bf16.msra.mxu0 %v1961
    %2274 = vmatpush.bf16.msra.mxu0 %v1953
    %2275 = vmatpush.bf16.msra.mxu0 %v1945
    %2276 = vmatpush.bf16.msra.mxu0 %v1937
    %2277 = vmatpush.bf16.msra.mxu0 %v1929
    %2278 = vmatpush.bf16.msra.mxu0 %v1921
    %2279 = vmatpush.bf16.msra.mxu0 %v1913
    %2280 = vmatmul.bf16.gmra.mxu0 %v678
    %v2281 = vpop.f32.mrf.mxu0
    %v2282 = vadd.f32 %v2269, %v2281
    %v2283 = vpop.f32.mrf.mxu0
    %2284 = vdwg.mxu0
    %2285 = vmatpush.bf16.msra.mxu0 %v1778
    %2286 = vmatpush.bf16.msra.mxu0 %v1770
    %2287 = vmatpush.bf16.msra.mxu0 %v1762
    %2288 = vmatpush.bf16.msra.mxu0 %v1754
    %2289 = vmatpush.bf16.msra.mxu0 %v1746
    %2290 = vmatpush.bf16.msra.mxu0 %v1738
    %2291 = vmatpush.bf16.msra.mxu0 %v1730
    %2292 = vmatpush.bf16.msra.mxu0 %v1722
    %2293 = vmatmul.bf16.gmra.mxu0 %v675
    %v2294 = vpop.f32.mrf.mxu0
    %v2295 = vadd.f32 %v938, %v2294
    %v2296 = vpop.f32.mrf.mxu0
    %2297 = vdwg.mxu0
    %2298 = vmatpush.bf16.msra.mxu0 %v1842
    %2299 = vmatpush.bf16.msra.mxu0 %v1834
    %2300 = vmatpush.bf16.msra.mxu0 %v1826
    %2301 = vmatpush.bf16.msra.mxu0 %v1818
    %2302 = vmatpush.bf16.msra.mxu0 %v1810
    %2303 = vmatpush.bf16.msra.mxu0 %v1802
    %2304 = vmatpush.bf16.msra.mxu0 %v1794
    %2305 = vmatpush.bf16.msra.mxu0 %v1786
    %2306 = vmatmul.bf16.gmra.mxu0 %v676
    %v2307 = vpop.f32.mrf.mxu0
    %v2308 = vadd.f32 %v2295, %v2307
    %v2309 = vpop.f32.mrf.mxu0
    %2310 = vdwg.mxu0
    %2311 = vmatpush.bf16.msra.mxu0 %v1906
    %2312 = vmatpush.bf16.msra.mxu0 %v1898
    %2313 = vmatpush.bf16.msra.mxu0 %v1890
    %2314 = vmatpush.bf16.msra.mxu0 %v1882
    %2315 = vmatpush.bf16.msra.mxu0 %v1874
    %2316 = vmatpush.bf16.msra.mxu0 %v1866
    %2317 = vmatpush.bf16.msra.mxu0 %v1858
    %2318 = vmatpush.bf16.msra.mxu0 %v1850
    %2319 = vmatmul.bf16.gmra.mxu0 %v677
    %v2320 = vpop.f32.mrf.mxu0
    %v2321 = vadd.f32 %v2308, %v2320
    %v2322 = vpop.f32.mrf.mxu0
    %2323 = vdwg.mxu0
    %2324 = vmatpush.bf16.msra.mxu0 %v1970
    %2325 = vmatpush.bf16.msra.mxu0 %v1962
    %2326 = vmatpush.bf16.msra.mxu0 %v1954
    %2327 = vmatpush.bf16.msra.mxu0 %v1946
    %2328 = vmatpush.bf16.msra.mxu0 %v1938
    %2329 = vmatpush.bf16.msra.mxu0 %v1930
    %2330 = vmatpush.bf16.msra.mxu0 %v1922
    %2331 = vmatpush.bf16.msra.mxu0 %v1914
    %2332 = vmatmul.bf16.gmra.mxu0 %v678
    %v2333 = vpop.f32.mrf.mxu0
    %v2334 = vadd.f32 %v2321, %v2333
    %v2335 = vpop.f32.mrf.mxu0
    %2336 = vdwg.mxu0
    %2337 = vmatpush.bf16.msra.mxu0 %v1779
    %2338 = vmatpush.bf16.msra.mxu0 %v1771
    %2339 = vmatpush.bf16.msra.mxu0 %v1763
    %2340 = vmatpush.bf16.msra.mxu0 %v1755
    %2341 = vmatpush.bf16.msra.mxu0 %v1747
    %2342 = vmatpush.bf16.msra.mxu0 %v1739
    %2343 = vmatpush.bf16.msra.mxu0 %v1731
    %2344 = vmatpush.bf16.msra.mxu0 %v1723
    %2345 = vmatmul.bf16.gmra.mxu0 %v675
    %v2346 = vpop.f32.mrf.mxu0
    %v2347 = vadd.f32 %v939, %v2346
    %v2348 = vpop.f32.mrf.mxu0
    %2349 = vdwg.mxu0
    %2350 = vmatpush.bf16.msra.mxu0 %v1843
    %2351 = vmatpush.bf16.msra.mxu0 %v1835
    %2352 = vmatpush.bf16.msra.mxu0 %v1827
    %2353 = vmatpush.bf16.msra.mxu0 %v1819
    %2354 = vmatpush.bf16.msra.mxu0 %v1811
    %2355 = vmatpush.bf16.msra.mxu0 %v1803
    %2356 = vmatpush.bf16.msra.mxu0 %v1795
    %2357 = vmatpush.bf16.msra.mxu0 %v1787
    %2358 = vmatmul.bf16.gmra.mxu0 %v676
    %v2359 = vpop.f32.mrf.mxu0
    %v2360 = vadd.f32 %v2347, %v2359
    %v2361 = vpop.f32.mrf.mxu0
    %2362 = vdwg.mxu0
    %2363 = vmatpush.bf16.msra.mxu0 %v1907
    %2364 = vmatpush.bf16.msra.mxu0 %v1899
    %2365 = vmatpush.bf16.msra.mxu0 %v1891
    %2366 = vmatpush.bf16.msra.mxu0 %v1883
    %2367 = vmatpush.bf16.msra.mxu0 %v1875
    %2368 = vmatpush.bf16.msra.mxu0 %v1867
    %2369 = vmatpush.bf16.msra.mxu0 %v1859
    %2370 = vmatpush.bf16.msra.mxu0 %v1851
    %2371 = vmatmul.bf16.gmra.mxu0 %v677
    %v2372 = vpop.f32.mrf.mxu0
    %v2373 = vadd.f32 %v2360, %v2372
    %v2374 = vpop.f32.mrf.mxu0
    %2375 = vdwg.mxu0
    %2376 = vmatpush.bf16.msra.mxu0 %v1971
    %2377 = vmatpush.bf16.msra.mxu0 %v1963
    %2378 = vmatpush.bf16.msra.mxu0 %v1955
    %2379 = vmatpush.bf16.msra.mxu0 %v1947
    %2380 = vmatpush.bf16.msra.mxu0 %v1939
    %2381 = vmatpush.bf16.msra.mxu0 %v1931
    %2382 = vmatpush.bf16.msra.mxu0 %v1923
    %2383 = vmatpush.bf16.msra.mxu0 %v1915
    %2384 = vmatmul.bf16.gmra.mxu0 %v678
    %v2385 = vpop.f32.mrf.mxu0
    %v2386 = vadd.f32 %v2373, %v2385
    %v2387 = vpop.f32.mrf.mxu0
    %2388 = vdwg.mxu0
    %2389 = vmatpush.bf16.msra.mxu0 %v1780
    %2390 = vmatpush.bf16.msra.mxu0 %v1772
    %2391 = vmatpush.bf16.msra.mxu0 %v1764
    %2392 = vmatpush.bf16.msra.mxu0 %v1756
    %2393 = vmatpush.bf16.msra.mxu0 %v1748
    %2394 = vmatpush.bf16.msra.mxu0 %v1740
    %2395 = vmatpush.bf16.msra.mxu0 %v1732
    %2396 = vmatpush.bf16.msra.mxu0 %v1724
    %2397 = vmatmul.bf16.gmra.mxu0 %v675
    %v2398 = vpop.f32.mrf.mxu0
    %v2399 = vadd.f32 %v940, %v2398
    %v2400 = vpop.f32.mrf.mxu0
    %2401 = vdwg.mxu0
    %2402 = vmatpush.bf16.msra.mxu0 %v1844
    %2403 = vmatpush.bf16.msra.mxu0 %v1836
    %2404 = vmatpush.bf16.msra.mxu0 %v1828
    %2405 = vmatpush.bf16.msra.mxu0 %v1820
    %2406 = vmatpush.bf16.msra.mxu0 %v1812
    %2407 = vmatpush.bf16.msra.mxu0 %v1804
    %2408 = vmatpush.bf16.msra.mxu0 %v1796
    %2409 = vmatpush.bf16.msra.mxu0 %v1788
    %2410 = vmatmul.bf16.gmra.mxu0 %v676
    %v2411 = vpop.f32.mrf.mxu0
    %v2412 = vadd.f32 %v2399, %v2411
    %v2413 = vpop.f32.mrf.mxu0
    %2414 = vdwg.mxu0
    %2415 = vmatpush.bf16.msra.mxu0 %v1908
    %2416 = vmatpush.bf16.msra.mxu0 %v1900
    %2417 = vmatpush.bf16.msra.mxu0 %v1892
    %2418 = vmatpush.bf16.msra.mxu0 %v1884
    %2419 = vmatpush.bf16.msra.mxu0 %v1876
    %2420 = vmatpush.bf16.msra.mxu0 %v1868
    %2421 = vmatpush.bf16.msra.mxu0 %v1860
    %2422 = vmatpush.bf16.msra.mxu0 %v1852
    %2423 = vmatmul.bf16.gmra.mxu0 %v677
    %v2424 = vpop.f32.mrf.mxu0
    %v2425 = vadd.f32 %v2412, %v2424
    %v2426 = vpop.f32.mrf.mxu0
    %2427 = vdwg.mxu0
    %2428 = vmatpush.bf16.msra.mxu0 %v1972
    %2429 = vmatpush.bf16.msra.mxu0 %v1964
    %2430 = vmatpush.bf16.msra.mxu0 %v1956
    %2431 = vmatpush.bf16.msra.mxu0 %v1948
    %2432 = vmatpush.bf16.msra.mxu0 %v1940
    %2433 = vmatpush.bf16.msra.mxu0 %v1932
    %2434 = vmatpush.bf16.msra.mxu0 %v1924
    %2435 = vmatpush.bf16.msra.mxu0 %v1916
    %2436 = vmatmul.bf16.gmra.mxu0 %v678
    %v2437 = vpop.f32.mrf.mxu0
    %v2438 = vadd.f32 %v2425, %v2437
    %v2439 = vpop.f32.mrf.mxu0
    %2440 = vdwg.mxu0
    %2441 = vmatpush.bf16.msra.mxu0 %v1781
    %2442 = vmatpush.bf16.msra.mxu0 %v1773
    %2443 = vmatpush.bf16.msra.mxu0 %v1765
    %2444 = vmatpush.bf16.msra.mxu0 %v1757
    %2445 = vmatpush.bf16.msra.mxu0 %v1749
    %2446 = vmatpush.bf16.msra.mxu0 %v1741
    %2447 = vmatpush.bf16.msra.mxu0 %v1733
    %2448 = vmatpush.bf16.msra.mxu0 %v1725
    %2449 = vmatmul.bf16.gmra.mxu0 %v675
    %v2450 = vpop.f32.mrf.mxu0
    %v2451 = vadd.f32 %v941, %v2450
    %v2452 = vpop.f32.mrf.mxu0
    %2453 = vdwg.mxu0
    %2454 = vmatpush.bf16.msra.mxu0 %v1845
    %2455 = vmatpush.bf16.msra.mxu0 %v1837
    %2456 = vmatpush.bf16.msra.mxu0 %v1829
    %2457 = vmatpush.bf16.msra.mxu0 %v1821
    %2458 = vmatpush.bf16.msra.mxu0 %v1813
    %2459 = vmatpush.bf16.msra.mxu0 %v1805
    %2460 = vmatpush.bf16.msra.mxu0 %v1797
    %2461 = vmatpush.bf16.msra.mxu0 %v1789
    %2462 = vmatmul.bf16.gmra.mxu0 %v676
    %v2463 = vpop.f32.mrf.mxu0
    %v2464 = vadd.f32 %v2451, %v2463
    %v2465 = vpop.f32.mrf.mxu0
    %2466 = vdwg.mxu0
    %2467 = vmatpush.bf16.msra.mxu0 %v1909
    %2468 = vmatpush.bf16.msra.mxu0 %v1901
    %2469 = vmatpush.bf16.msra.mxu0 %v1893
    %2470 = vmatpush.bf16.msra.mxu0 %v1885
    %2471 = vmatpush.bf16.msra.mxu0 %v1877
    %2472 = vmatpush.bf16.msra.mxu0 %v1869
    %2473 = vmatpush.bf16.msra.mxu0 %v1861
    %2474 = vmatpush.bf16.msra.mxu0 %v1853
    %2475 = vmatmul.bf16.gmra.mxu0 %v677
    %v2476 = vpop.f32.mrf.mxu0
    %v2477 = vadd.f32 %v2464, %v2476
    %v2478 = vpop.f32.mrf.mxu0
    %2479 = vdwg.mxu0
    %2480 = vmatpush.bf16.msra.mxu0 %v1973
    %2481 = vmatpush.bf16.msra.mxu0 %v1965
    %2482 = vmatpush.bf16.msra.mxu0 %v1957
    %2483 = vmatpush.bf16.msra.mxu0 %v1949
    %2484 = vmatpush.bf16.msra.mxu0 %v1941
    %2485 = vmatpush.bf16.msra.mxu0 %v1933
    %2486 = vmatpush.bf16.msra.mxu0 %v1925
    %2487 = vmatpush.bf16.msra.mxu0 %v1917
    %2488 = vmatmul.bf16.gmra.mxu0 %v678
    %v2489 = vpop.f32.mrf.mxu0
    %v2490 = vadd.f32 %v2477, %v2489
    %v2491 = vpop.f32.mrf.mxu0
    %2492 = vdwg.mxu0
    %2493 = vmatpush.bf16.msra.mxu0 %v1782
    %2494 = vmatpush.bf16.msra.mxu0 %v1774
    %2495 = vmatpush.bf16.msra.mxu0 %v1766
    %2496 = vmatpush.bf16.msra.mxu0 %v1758
    %2497 = vmatpush.bf16.msra.mxu0 %v1750
    %2498 = vmatpush.bf16.msra.mxu0 %v1742
    %2499 = vmatpush.bf16.msra.mxu0 %v1734
    %2500 = vmatpush.bf16.msra.mxu0 %v1726
    %2501 = vmatmul.bf16.gmra.mxu0 %v675
    %v2502 = vpop.f32.mrf.mxu0
    %v2503 = vadd.f32 %v942, %v2502
    %v2504 = vpop.f32.mrf.mxu0
    %2505 = vdwg.mxu0
    %2506 = vmatpush.bf16.msra.mxu0 %v1846
    %2507 = vmatpush.bf16.msra.mxu0 %v1838
    %2508 = vmatpush.bf16.msra.mxu0 %v1830
    %2509 = vmatpush.bf16.msra.mxu0 %v1822
    %2510 = vmatpush.bf16.msra.mxu0 %v1814
    %2511 = vmatpush.bf16.msra.mxu0 %v1806
    %2512 = vmatpush.bf16.msra.mxu0 %v1798
    %2513 = vmatpush.bf16.msra.mxu0 %v1790
    %2514 = vmatmul.bf16.gmra.mxu0 %v676
    %v2515 = vpop.f32.mrf.mxu0
    %v2516 = vadd.f32 %v2503, %v2515
    %v2517 = vpop.f32.mrf.mxu0
    %2518 = vdwg.mxu0
    %2519 = vmatpush.bf16.msra.mxu0 %v1910
    %2520 = vmatpush.bf16.msra.mxu0 %v1902
    %2521 = vmatpush.bf16.msra.mxu0 %v1894
    %2522 = vmatpush.bf16.msra.mxu0 %v1886
    %2523 = vmatpush.bf16.msra.mxu0 %v1878
    %2524 = vmatpush.bf16.msra.mxu0 %v1870
    %2525 = vmatpush.bf16.msra.mxu0 %v1862
    %2526 = vmatpush.bf16.msra.mxu0 %v1854
    %2527 = vmatmul.bf16.gmra.mxu0 %v677
    %v2528 = vpop.f32.mrf.mxu0
    %v2529 = vadd.f32 %v2516, %v2528
    %v2530 = vpop.f32.mrf.mxu0
    %2531 = vdwg.mxu0
    %2532 = vmatpush.bf16.msra.mxu0 %v1974
    %2533 = vmatpush.bf16.msra.mxu0 %v1966
    %2534 = vmatpush.bf16.msra.mxu0 %v1958
    %2535 = vmatpush.bf16.msra.mxu0 %v1950
    %2536 = vmatpush.bf16.msra.mxu0 %v1942
    %2537 = vmatpush.bf16.msra.mxu0 %v1934
    %2538 = vmatpush.bf16.msra.mxu0 %v1926
    %2539 = vmatpush.bf16.msra.mxu0 %v1918
    %2540 = vmatmul.bf16.gmra.mxu0 %v678
    %v2541 = vpop.f32.mrf.mxu0
    %v2542 = vadd.f32 %v2529, %v2541
    %v2543 = vpop.f32.mrf.mxu0
    %2544 = vdwg.mxu0
    %2545 = vmatpush.bf16.msra.mxu0 %v1783
    %2546 = vmatpush.bf16.msra.mxu0 %v1775
    %2547 = vmatpush.bf16.msra.mxu0 %v1767
    %2548 = vmatpush.bf16.msra.mxu0 %v1759
    %2549 = vmatpush.bf16.msra.mxu0 %v1751
    %2550 = vmatpush.bf16.msra.mxu0 %v1743
    %2551 = vmatpush.bf16.msra.mxu0 %v1735
    %2552 = vmatpush.bf16.msra.mxu0 %v1727
    %2553 = vmatmul.bf16.gmra.mxu0 %v675
    %v2554 = vpop.f32.mrf.mxu0
    %v2555 = vadd.f32 %v943, %v2554
    %v2556 = vpop.f32.mrf.mxu0
    %2557 = vdwg.mxu0
    %2558 = vmatpush.bf16.msra.mxu0 %v1847
    %2559 = vmatpush.bf16.msra.mxu0 %v1839
    %2560 = vmatpush.bf16.msra.mxu0 %v1831
    %2561 = vmatpush.bf16.msra.mxu0 %v1823
    %2562 = vmatpush.bf16.msra.mxu0 %v1815
    %2563 = vmatpush.bf16.msra.mxu0 %v1807
    %2564 = vmatpush.bf16.msra.mxu0 %v1799
    %2565 = vmatpush.bf16.msra.mxu0 %v1791
    %2566 = vmatmul.bf16.gmra.mxu0 %v676
    %v2567 = vpop.f32.mrf.mxu0
    %v2568 = vadd.f32 %v2555, %v2567
    %v2569 = vpop.f32.mrf.mxu0
    %2570 = vdwg.mxu0
    %2571 = vmatpush.bf16.msra.mxu0 %v1911
    %2572 = vmatpush.bf16.msra.mxu0 %v1903
    %2573 = vmatpush.bf16.msra.mxu0 %v1895
    %2574 = vmatpush.bf16.msra.mxu0 %v1887
    %2575 = vmatpush.bf16.msra.mxu0 %v1879
    %2576 = vmatpush.bf16.msra.mxu0 %v1871
    %2577 = vmatpush.bf16.msra.mxu0 %v1863
    %2578 = vmatpush.bf16.msra.mxu0 %v1855
    %2579 = vmatmul.bf16.gmra.mxu0 %v677
    %v2580 = vpop.f32.mrf.mxu0
    %v2581 = vadd.f32 %v2568, %v2580
    %v2582 = vpop.f32.mrf.mxu0
    %2583 = vdwg.mxu0
    %2584 = vmatpush.bf16.msra.mxu0 %v1975
    %2585 = vmatpush.bf16.msra.mxu0 %v1967
    %2586 = vmatpush.bf16.msra.mxu0 %v1959
    %2587 = vmatpush.bf16.msra.mxu0 %v1951
    %2588 = vmatpush.bf16.msra.mxu0 %v1943
    %2589 = vmatpush.bf16.msra.mxu0 %v1935
    %2590 = vmatpush.bf16.msra.mxu0 %v1927
    %2591 = vmatpush.bf16.msra.mxu0 %v1919
    %2592 = vmatmul.bf16.gmra.mxu0 %v678
    %v2593 = vpop.f32.mrf.mxu0
    %v2594 = vadd.f32 %v2581, %v2593
    %v2595 = vpop.f32.mrf.mxu0
    %2596 = vdwg.mxu0
    %2597 = vmatpush.bf16.msra.mxu0 %v1784
    %2598 = vmatpush.bf16.msra.mxu0 %v1776
    %2599 = vmatpush.bf16.msra.mxu0 %v1768
    %2600 = vmatpush.bf16.msra.mxu0 %v1760
    %2601 = vmatpush.bf16.msra.mxu0 %v1752
    %2602 = vmatpush.bf16.msra.mxu0 %v1744
    %2603 = vmatpush.bf16.msra.mxu0 %v1736
    %2604 = vmatpush.bf16.msra.mxu0 %v1728
    %2605 = vmatmul.bf16.gmra.mxu0 %v675
    %v2606 = vpop.f32.mrf.mxu0
    %v2607 = vadd.f32 %v944, %v2606
    %v2608 = vpop.f32.mrf.mxu0
    %2609 = vdwg.mxu0
    %2610 = vmatpush.bf16.msra.mxu0 %v1848
    %2611 = vmatpush.bf16.msra.mxu0 %v1840
    %2612 = vmatpush.bf16.msra.mxu0 %v1832
    %2613 = vmatpush.bf16.msra.mxu0 %v1824
    %2614 = vmatpush.bf16.msra.mxu0 %v1816
    %2615 = vmatpush.bf16.msra.mxu0 %v1808
    %2616 = vmatpush.bf16.msra.mxu0 %v1800
    %2617 = vmatpush.bf16.msra.mxu0 %v1792
    %2618 = vmatmul.bf16.gmra.mxu0 %v676
    %v2619 = vpop.f32.mrf.mxu0
    %v2620 = vadd.f32 %v2607, %v2619
    %v2621 = vpop.f32.mrf.mxu0
    %2622 = vdwg.mxu0
    %2623 = vmatpush.bf16.msra.mxu0 %v1912
    %2624 = vmatpush.bf16.msra.mxu0 %v1904
    %2625 = vmatpush.bf16.msra.mxu0 %v1896
    %2626 = vmatpush.bf16.msra.mxu0 %v1888
    %2627 = vmatpush.bf16.msra.mxu0 %v1880
    %2628 = vmatpush.bf16.msra.mxu0 %v1872
    %2629 = vmatpush.bf16.msra.mxu0 %v1864
    %2630 = vmatpush.bf16.msra.mxu0 %v1856
    %2631 = vmatmul.bf16.gmra.mxu0 %v677
    %v2632 = vpop.f32.mrf.mxu0
    %v2633 = vadd.f32 %v2620, %v2632
    %v2634 = vpop.f32.mrf.mxu0
    %2635 = vdwg.mxu0
    %2636 = vmatpush.bf16.msra.mxu0 %v1976
    %2637 = vmatpush.bf16.msra.mxu0 %v1968
    %2638 = vmatpush.bf16.msra.mxu0 %v1960
    %2639 = vmatpush.bf16.msra.mxu0 %v1952
    %2640 = vmatpush.bf16.msra.mxu0 %v1944
    %2641 = vmatpush.bf16.msra.mxu0 %v1936
    %2642 = vmatpush.bf16.msra.mxu0 %v1928
    %2643 = vmatpush.bf16.msra.mxu0 %v1920
    %2644 = vmatmul.bf16.gmra.mxu0 %v678
    %v2645 = vpop.f32.mrf.mxu0
    %v2646 = vadd.f32 %v2633, %v2645
    %v2647 = vpop.f32.mrf.mxu0
    %2648 = vdwg.mxu0
    %v2649 = vmul.f32 %v2282, 0.2
    %v2650 = vmul.f32 %v2334, 0.2
    %v2651 = vmul.f32 %v2386, 0.2
    %v2652 = vmul.f32 %v2438, 0.2
    %v2653 = vmul.f32 %v2490, 0.2
    %v2654 = vmul.f32 %v2542, 0.2
    %v2655 = vmul.f32 %v2594, 0.2
    %v2656 = vmul.f32 %v2646, 0.2
    %v2657 = vmax.f32 %v2282, %v2649
    %v2658 = vmax.f32 %v2334, %v2650
    %v2659 = vmax.f32 %v2386, %v2651
    %v2660 = vmax.f32 %v2438, %v2652
    %v2661 = vmax.f32 %v2490, %v2653
    %v2662 = vmax.f32 %v2542, %v2654
    %v2663 = vmax.f32 %v2594, %v2655
    %v2664 = vmax.f32 %v2646, %v2656
    %v2665 = vpack.c.bf16 %v2657, %v2657
    %v2666 = vpack.c.bf16 %v2658, %v2658
    %v2667 = vpack.c.bf16 %v2659, %v2659
    %v2668 = vpack.c.bf16 %v2660, %v2660
    %v2669 = vpack.c.bf16 %v2661, %v2661
    %v2670 = vpack.c.bf16 %v2662, %v2662
    %v2671 = vpack.c.bf16 %v2663, %v2663
    %v2672 = vpack.c.bf16 %v2664, %v2664
    %v2673 = vld [vmem:[%s7] sm:$0xff]
    %v2674 = vld [vmem:[%s7 + $0x8] sm:$0xff]
    %v2675 = vld [vmem:[%s7 + $0x10] sm:$0xff]
    %v2676 = vld [vmem:[%s7 + $0x18] sm:$0xf]
    %v2677 = vld [vmem:[%s7 + $0x1c] sm:$0xff]
    %v2678 = vld [vmem:[%s7 + $0x24] sm:$0xff]
    %v2679 = vld [vmem:[%s7 + $0x2c] sm:$0xff]
    %v2680 = vld [vmem:[%s7 + $0x34] sm:$0xf]
    %v2681 = vld [vmem:[%s7 + $0x38] sm:$0xff]
    %v2682 = vld [vmem:[%s7 + $0x40] sm:$0xff]
    %v2683 = vld [vmem:[%s7 + $0x48] sm:$0xff]
    %v2684 = vld [vmem:[%s7 + $0x50] sm:$0xf]
    %v2685 = vld [vmem:[%s7 + $0x54] sm:$0xff]
    %v2686 = vld [vmem:[%s7 + $0x5c] sm:$0xff]
    %v2687 = vld [vmem:[%s7 + $0x64] sm:$0xff]
    %v2688 = vld [vmem:[%s7 + $0x6c] sm:$0xf]
    %v2689 = vld [vmem:[%s7 + $0x70] sm:$0xff]
    %v2690 = vld [vmem:[%s7 + $0x78] sm:$0xff]
    %v2691 = vld [vmem:[%s7 + $0x80] sm:$0xff]
    %v2692 = vld [vmem:[%s7 + $0x88] sm:$0xf]
    %v2693 = vld [vmem:[%s7 + $0x8c] sm:$0xff]
    %v2694 = vld [vmem:[%s7 + $0x94] sm:$0xff]
    %v2695 = vld [vmem:[%s7 + $0x9c] sm:$0xff]
    %v2696 = vld [vmem:[%s7 + $0xa4] sm:$0xf]
    %v2697 = vld [vmem:[%s7 + $0xa8] sm:$0xff]
    %v2698 = vld [vmem:[%s7 + $0xb0] sm:$0xff]
    %v2699 = vld [vmem:[%s7 + $0xb8] sm:$0xff]
    %v2700 = vld [vmem:[%s7 + $0xc0] sm:$0xf]
    %v2701 = vld [vmem:[%s7 + $0xc4] sm:$0xff]
    %v2702 = vld [vmem:[%s7 + $0xcc] sm:$0xff]
    %v2703 = vld [vmem:[%s7 + $0xd4] sm:$0xff]
    %v2704 = vld [vmem:[%s7 + $0xdc] sm:$0xf]
    %v2705 = vld [vmem:[%s7 + $0xe0] sm:$0xff]
    %v2706 = vld [vmem:[%s7 + $0xe8] sm:$0xff]
    %v2707 = vld [vmem:[%s7 + $0xf0] sm:$0xff]
    %v2708 = vld [vmem:[%s7 + $0xf8] sm:$0xf]
    %v2709 = vld [vmem:[%s7 + $0xfc] sm:$0xff]
    %v2710 = vld [vmem:[%s7 + $0x104] sm:$0xff]
    %v2711 = vld [vmem:[%s7 + $0x10c] sm:$0xff]
    %v2712 = vld [vmem:[%s7 + $0x114] sm:$0xf]
    %v2713 = vld [vmem:[%s7 + $0x118] sm:$0xff]
    %v2714 = vld [vmem:[%s7 + $0x120] sm:$0xff]
    %v2715 = vld [vmem:[%s7 + $0x128] sm:$0xff]
    %v2716 = vld [vmem:[%s7 + $0x130] sm:$0xf]
    %v2717 = vld [vmem:[%s7 + $0x134] sm:$0xff]
    %v2718 = vld [vmem:[%s7 + $0x13c] sm:$0xff]
    %v2719 = vld [vmem:[%s7 + $0x144] sm:$0xff]
    %v2720 = vld [vmem:[%s7 + $0x14c] sm:$0xf]
    %v2721 = vld [vmem:[%s7 + $0x150] sm:$0xff]
    %v2722 = vld [vmem:[%s7 + $0x158] sm:$0xff]
    %v2723 = vld [vmem:[%s7 + $0x160] sm:$0xff]
    %v2724 = vld [vmem:[%s7 + $0x168] sm:$0xf]
    %v2725 = vld [vmem:[%s7 + $0x16c] sm:$0xff]
    %v2726 = vld [vmem:[%s7 + $0x174] sm:$0xff]
    %v2727 = vld [vmem:[%s7 + $0x17c] sm:$0xff]
    %v2728 = vld [vmem:[%s7 + $0x184] sm:$0xf]
    %v2729 = vld [vmem:[%s7 + $0x188] sm:$0xff]
    %v2730 = vld [vmem:[%s7 + $0x190] sm:$0xff]
    %v2731 = vld [vmem:[%s7 + $0x198] sm:$0xff]
    %v2732 = vld [vmem:[%s7 + $0x1a0] sm:$0xf]
    %v2733 = vld [vmem:[%s7 + $0x1a4] sm:$0xff]
    %v2734 = vld [vmem:[%s7 + $0x1ac] sm:$0xff]
    %v2735 = vld [vmem:[%s7 + $0x1b4] sm:$0xff]
    %v2736 = vld [vmem:[%s7 + $0x1bc] sm:$0xf]
    %v2737 = vld [vmem:[%s7 + $0x1c0] sm:$0xff]
    %v2738 = vld [vmem:[%s7 + $0x1c8] sm:$0xff]
    %v2739 = vld [vmem:[%s7 + $0x1d0] sm:$0xff]
    %v2740 = vld [vmem:[%s7 + $0x1d8] sm:$0xf]
    %v2741 = vld [vmem:[%s7 + $0x1dc] sm:$0xff]
    %v2742 = vld [vmem:[%s7 + $0x1e4] sm:$0xff]
    %v2743 = vld [vmem:[%s7 + $0x1ec] sm:$0xff]
    %v2744 = vld [vmem:[%s7 + $0x1f4] sm:$0xf]
    %v2745 = vld [vmem:[%s7 + $0x1f8] sm:$0xff]
    %v2746 = vld [vmem:[%s7 + $0x200] sm:$0xff]
    %v2747 = vld [vmem:[%s7 + $0x208] sm:$0xff]
    %v2748 = vld [vmem:[%s7 + $0x210] sm:$0xf]
    %v2749 = vld [vmem:[%s7 + $0x214] sm:$0xff]
    %v2750 = vld [vmem:[%s7 + $0x21c] sm:$0xff]
    %v2751 = vld [vmem:[%s7 + $0x224] sm:$0xff]
    %v2752 = vld [vmem:[%s7 + $0x22c] sm:$0xf]
    %v2753 = vld [vmem:[%s7 + $0x230] sm:$0xff]
    %v2754 = vld [vmem:[%s7 + $0x238] sm:$0xff]
    %v2755 = vld [vmem:[%s7 + $0x240] sm:$0xff]
    %v2756 = vld [vmem:[%s7 + $0x248] sm:$0xf]
    %v2757 = vld [vmem:[%s7 + $0x24c] sm:$0xff]
    %v2758 = vld [vmem:[%s7 + $0x254] sm:$0xff]
    %v2759 = vld [vmem:[%s7 + $0x25c] sm:$0xff]
    %v2760 = vld [vmem:[%s7 + $0x264] sm:$0xf]
    %v2761 = vld [vmem:[%s7 + $0x268] sm:$0xff]
    %v2762 = vld [vmem:[%s7 + $0x270] sm:$0xff]
    %v2763 = vld [vmem:[%s7 + $0x278] sm:$0xff]
    %v2764 = vld [vmem:[%s7 + $0x280] sm:$0xf]
    %v2765 = vld [vmem:[%s7 + $0x284] sm:$0xff]
    %v2766 = vld [vmem:[%s7 + $0x28c] sm:$0xff]
    %v2767 = vld [vmem:[%s7 + $0x294] sm:$0xff]
    %v2768 = vld [vmem:[%s7 + $0x29c] sm:$0xf]
    %v2769 = vld [vmem:[%s7 + $0x2a0] sm:$0xff]
    %v2770 = vld [vmem:[%s7 + $0x2a8] sm:$0xff]
    %v2771 = vld [vmem:[%s7 + $0x2b0] sm:$0xff]
    %v2772 = vld [vmem:[%s7 + $0x2b8] sm:$0xf]
    %v2773 = vld [vmem:[%s7 + $0x2bc] sm:$0xff]
    %v2774 = vld [vmem:[%s7 + $0x2c4] sm:$0xff]
    %v2775 = vld [vmem:[%s7 + $0x2cc] sm:$0xff]
    %v2776 = vld [vmem:[%s7 + $0x2d4] sm:$0xf]
    %v2777 = vld [vmem:[%s7 + $0x2d8] sm:$0xff]
    %v2778 = vld [vmem:[%s7 + $0x2e0] sm:$0xff]
    %v2779 = vld [vmem:[%s7 + $0x2e8] sm:$0xff]
    %v2780 = vld [vmem:[%s7 + $0x2f0] sm:$0xf]
    %v2781 = vld [vmem:[%s7 + $0x2f4] sm:$0xff]
    %v2782 = vld [vmem:[%s7 + $0x2fc] sm:$0xff]
    %v2783 = vld [vmem:[%s7 + $0x304] sm:$0xff]
    %v2784 = vld [vmem:[%s7 + $0x30c] sm:$0xf]
    %v2785 = vld [vmem:[%s7 + $0x310] sm:$0xff]
    %v2786 = vld [vmem:[%s7 + $0x318] sm:$0xff]
    %v2787 = vld [vmem:[%s7 + $0x320] sm:$0xff]
    %v2788 = vld [vmem:[%s7 + $0x328] sm:$0xf]
    %v2789 = vld [vmem:[%s7 + $0x32c] sm:$0xff]
    %v2790 = vld [vmem:[%s7 + $0x334] sm:$0xff]
    %v2791 = vld [vmem:[%s7 + $0x33c] sm:$0xff]
    %v2792 = vld [vmem:[%s7 + $0x344] sm:$0xf]
    %v2793 = vld [vmem:[%s7 + $0x348] sm:$0xff]
    %v2794 = vld [vmem:[%s7 + $0x350] sm:$0xff]
    %v2795 = vld [vmem:[%s7 + $0x358] sm:$0xff]
    %v2796 = vld [vmem:[%s7 + $0x360] sm:$0xf]
    %v2797 = vld [vmem:[%s7 + $0x364] sm:$0xff]
    %v2798 = vld [vmem:[%s7 + $0x36c] sm:$0xff]
    %v2799 = vld [vmem:[%s7 + $0x374] sm:$0xff]
    %v2800 = vld [vmem:[%s7 + $0x37c] sm:$0xf]
    %v2801 = vld [vmem:[%s7 + $0x380] sm:$0xff]
    %v2802 = vld [vmem:[%s7 + $0x388] sm:$0xff]
    %v2803 = vld [vmem:[%s7 + $0x390] sm:$0xff]
    %v2804 = vld [vmem:[%s7 + $0x398] sm:$0xf]
    %v2805 = vld [vmem:[%s7 + $0x39c] sm:$0xff]
    %v2806 = vld [vmem:[%s7 + $0x3a4] sm:$0xff]
    %v2807 = vld [vmem:[%s7 + $0x3ac] sm:$0xff]
    %v2808 = vld [vmem:[%s7 + $0x3b4] sm:$0xf]
    %v2809 = vld [vmem:[%s7 + $0x3b8] sm:$0xff]
    %v2810 = vld [vmem:[%s7 + $0x3c0] sm:$0xff]
    %v2811 = vld [vmem:[%s7 + $0x3c8] sm:$0xff]
    %v2812 = vld [vmem:[%s7 + $0x3d0] sm:$0xf]
    %v2813 = vld [vmem:[%s7 + $0x3d4] sm:$0xff]
    %v2814 = vld [vmem:[%s7 + $0x3dc] sm:$0xff]
    %v2815 = vld [vmem:[%s7 + $0x3e4] sm:$0xff]
    %v2816 = vld [vmem:[%s7 + $0x3ec] sm:$0xf]
    %v2817 = vld [vmem:[%s7 + $0x3f0] sm:$0xff]
    %v2818 = vld [vmem:[%s7 + $0x3f8] sm:$0xff]
    %v2819 = vld [vmem:[%s7 + $0x400] sm:$0xff]
    %v2820 = vld [vmem:[%s7 + $0x408] sm:$0xf]
    %v2821 = vld [vmem:[%s7 + $0x40c] sm:$0xff]
    %v2822 = vld [vmem:[%s7 + $0x414] sm:$0xff]
    %v2823 = vld [vmem:[%s7 + $0x41c] sm:$0xff]
    %v2824 = vld [vmem:[%s7 + $0x424] sm:$0xf]
    %v2825 = vld [vmem:[%s7 + $0x428] sm:$0xff]
    %v2826 = vld [vmem:[%s7 + $0x430] sm:$0xff]
    %v2827 = vld [vmem:[%s7 + $0x438] sm:$0xff]
    %v2828 = vld [vmem:[%s7 + $0x440] sm:$0xf]
    %v2829 = vld [vmem:[%s7 + $0x444] sm:$0xff]
    %v2830 = vld [vmem:[%s7 + $0x44c] sm:$0xff]
    %v2831 = vld [vmem:[%s7 + $0x454] sm:$0xff]
    %v2832 = vld [vmem:[%s7 + $0x45c] sm:$0xf]
    %v2833 = vld [vmem:[%s7 + $0x460] sm:$0xff]
    %v2834 = vld [vmem:[%s7 + $0x468] sm:$0xff]
    %v2835 = vld [vmem:[%s7 + $0x470] sm:$0xff]
    %v2836 = vld [vmem:[%s7 + $0x478] sm:$0xf]
    %v2837 = vld [vmem:[%s7 + $0x47c] sm:$0xff]
    %v2838 = vld [vmem:[%s7 + $0x484] sm:$0xff]
    %v2839 = vld [vmem:[%s7 + $0x48c] sm:$0xff]
    %v2840 = vld [vmem:[%s7 + $0x494] sm:$0xf]
    %v2841 = vld [vmem:[%s7 + $0x498] sm:$0xff]
    %v2842 = vld [vmem:[%s7 + $0x4a0] sm:$0xff]
    %v2843 = vld [vmem:[%s7 + $0x4a8] sm:$0xff]
    %v2844 = vld [vmem:[%s7 + $0x4b0] sm:$0xf]
    %v2845 = vld [vmem:[%s7 + $0x4b4] sm:$0xff]
    %v2846 = vld [vmem:[%s7 + $0x4bc] sm:$0xff]
    %v2847 = vld [vmem:[%s7 + $0x4c4] sm:$0xff]
    %v2848 = vld [vmem:[%s7 + $0x4cc] sm:$0xf]
    %v2849 = vld [vmem:[%s7 + $0x4d0] sm:$0xff]
    %v2850 = vld [vmem:[%s7 + $0x4d8] sm:$0xff]
    %v2851 = vld [vmem:[%s7 + $0x4e0] sm:$0xff]
    %v2852 = vld [vmem:[%s7 + $0x4e8] sm:$0xf]
    %v2853 = vld [vmem:[%s7 + $0x4ec] sm:$0xff]
    %v2854 = vld [vmem:[%s7 + $0x4f4] sm:$0xff]
    %v2855 = vld [vmem:[%s7 + $0x4fc] sm:$0xff]
    %v2856 = vld [vmem:[%s7 + $0x504] sm:$0xf]
    %v2857 = vld [vmem:[%s7 + $0x508] sm:$0xff]
    %v2858 = vld [vmem:[%s7 + $0x510] sm:$0xff]
    %v2859 = vld [vmem:[%s7 + $0x518] sm:$0xff]
    %v2860 = vld [vmem:[%s7 + $0x520] sm:$0xf]
    %v2861 = vld [vmem:[%s7 + $0x524] sm:$0xff]
    %v2862 = vld [vmem:[%s7 + $0x52c] sm:$0xff]
    %v2863 = vld [vmem:[%s7 + $0x534] sm:$0xff]
    %v2864 = vld [vmem:[%s7 + $0x53c] sm:$0xf]
    %v2865 = vld [vmem:[%s7 + $0x540] sm:$0xff]
    %v2866 = vld [vmem:[%s7 + $0x548] sm:$0xff]
    %v2867 = vld [vmem:[%s7 + $0x550] sm:$0xff]
    %v2868 = vld [vmem:[%s7 + $0x558] sm:$0xf]
    %v2869 = vld [vmem:[%s7 + $0x55c] sm:$0xff]
    %v2870 = vld [vmem:[%s7 + $0x564] sm:$0xff]
    %v2871 = vld [vmem:[%s7 + $0x56c] sm:$0xff]
    %v2872 = vld [vmem:[%s7 + $0x574] sm:$0xf]
    %v2873 = vld [vmem:[%s7 + $0x578] sm:$0xff]
    %v2874 = vld [vmem:[%s7 + $0x580] sm:$0xff]
    %v2875 = vld [vmem:[%s7 + $0x588] sm:$0xff]
    %v2876 = vld [vmem:[%s7 + $0x590] sm:$0xf]
    %v2877 = vld [vmem:[%s7 + $0x594] sm:$0xff]
    %v2878 = vld [vmem:[%s7 + $0x59c] sm:$0xff]
    %v2879 = vld [vmem:[%s7 + $0x5a4] sm:$0xff]
    %v2880 = vld [vmem:[%s7 + $0x5ac] sm:$0xf]
    %v2881 = vld [vmem:[%s7 + $0x5b0] sm:$0xff]
    %v2882 = vld [vmem:[%s7 + $0x5b8] sm:$0xff]
    %v2883 = vld [vmem:[%s7 + $0x5c0] sm:$0xff]
    %v2884 = vld [vmem:[%s7 + $0x5c8] sm:$0xf]
    %v2885 = vld [vmem:[%s7 + $0x5cc] sm:$0xff]
    %v2886 = vld [vmem:[%s7 + $0x5d4] sm:$0xff]
    %v2887 = vld [vmem:[%s7 + $0x5dc] sm:$0xff]
    %v2888 = vld [vmem:[%s7 + $0x5e4] sm:$0xf]
    %v2889 = vld [vmem:[%s7 + $0x5e8] sm:$0xff]
    %v2890 = vld [vmem:[%s7 + $0x5f0] sm:$0xff]
    %v2891 = vld [vmem:[%s7 + $0x5f8] sm:$0xff]
    %v2892 = vld [vmem:[%s7 + $0x600] sm:$0xf]
    %v2893 = vld [vmem:[%s7 + $0x604] sm:$0xff]
    %v2894 = vld [vmem:[%s7 + $0x60c] sm:$0xff]
    %v2895 = vld [vmem:[%s7 + $0x614] sm:$0xff]
    %v2896 = vld [vmem:[%s7 + $0x61c] sm:$0xf]
    %v2897 = vld [vmem:[%s7 + $0x620] sm:$0xff]
    %v2898 = vld [vmem:[%s7 + $0x628] sm:$0xff]
    %v2899 = vld [vmem:[%s7 + $0x630] sm:$0xff]
    %v2900 = vld [vmem:[%s7 + $0x638] sm:$0xf]
    %v2901 = vld [vmem:[%s7 + $0x63c] sm:$0xff]
    %v2902 = vld [vmem:[%s7 + $0x644] sm:$0xff]
    %v2903 = vld [vmem:[%s7 + $0x64c] sm:$0xff]
    %v2904 = vld [vmem:[%s7 + $0x654] sm:$0xf]
    %v2905 = vld [vmem:[%s7 + $0x658] sm:$0xff]
    %v2906 = vld [vmem:[%s7 + $0x660] sm:$0xff]
    %v2907 = vld [vmem:[%s7 + $0x668] sm:$0xff]
    %v2908 = vld [vmem:[%s7 + $0x670] sm:$0xf]
    %v2909 = vld [vmem:[%s7 + $0x674] sm:$0xff]
    %v2910 = vld [vmem:[%s7 + $0x67c] sm:$0xff]
    %v2911 = vld [vmem:[%s7 + $0x684] sm:$0xff]
    %v2912 = vld [vmem:[%s7 + $0x68c] sm:$0xf]
    %v2913 = vld [vmem:[%s7 + $0x690] sm:$0xff]
    %v2914 = vld [vmem:[%s7 + $0x698] sm:$0xff]
    %v2915 = vld [vmem:[%s7 + $0x6a0] sm:$0xff]
    %v2916 = vld [vmem:[%s7 + $0x6a8] sm:$0xf]
    %v2917 = vld [vmem:[%s7 + $0x6ac] sm:$0xff]
    %v2918 = vld [vmem:[%s7 + $0x6b4] sm:$0xff]
    %v2919 = vld [vmem:[%s7 + $0x6bc] sm:$0xff]
    %v2920 = vld [vmem:[%s7 + $0x6c4] sm:$0xf]
    %v2921 = vld [vmem:[%s7 + $0x6c8] sm:$0xff]
    %v2922 = vld [vmem:[%s7 + $0x6d0] sm:$0xff]
    %v2923 = vld [vmem:[%s7 + $0x6d8] sm:$0xff]
    %v2924 = vld [vmem:[%s7 + $0x6e0] sm:$0xf]
    %v2925 = vld [vmem:[%s7 + $0x6e4] sm:$0xff]
    %v2926 = vld [vmem:[%s7 + $0x6ec] sm:$0xff]
    %v2927 = vld [vmem:[%s7 + $0x6f4] sm:$0xff]
    %v2928 = vld [vmem:[%s7 + $0x6fc] sm:$0xf]
    %v2929 = vld [vmem:[%s7 + $0x700] sm:$0xff]
    %v2930 = vld [vmem:[%s7 + $0x708] sm:$0xff]
    %v2931 = vld [vmem:[%s7 + $0x710] sm:$0xff]
    %v2932 = vld [vmem:[%s7 + $0x718] sm:$0xf]
    %v2933 = vld [vmem:[%s7 + $0x71c] sm:$0xff]
    %v2934 = vld [vmem:[%s7 + $0x724] sm:$0xff]
    %v2935 = vld [vmem:[%s7 + $0x72c] sm:$0xff]
    %v2936 = vld [vmem:[%s7 + $0x734] sm:$0xf]
    %v2937 = vld [vmem:[%s7 + $0x738] sm:$0xff]
    %v2938 = vld [vmem:[%s7 + $0x740] sm:$0xff]
    %v2939 = vld [vmem:[%s7 + $0x748] sm:$0xff]
    %v2940 = vld [vmem:[%s7 + $0x750] sm:$0xf]
    %v2941 = vld [vmem:[%s7 + $0x754] sm:$0xff]
    %v2942 = vld [vmem:[%s7 + $0x75c] sm:$0xff]
    %v2943 = vld [vmem:[%s7 + $0x764] sm:$0xff]
    %v2944 = vld [vmem:[%s7 + $0x76c] sm:$0xf]
    %v2945 = vld [vmem:[%s7 + $0x770] sm:$0xff]
    %v2946 = vld [vmem:[%s7 + $0x778] sm:$0xff]
    %v2947 = vld [vmem:[%s7 + $0x780] sm:$0xff]
    %v2948 = vld [vmem:[%s7 + $0x788] sm:$0xf]
    %v2949 = vld [vmem:[%s7 + $0x78c] sm:$0xff]
    %v2950 = vld [vmem:[%s7 + $0x794] sm:$0xff]
    %v2951 = vld [vmem:[%s7 + $0x79c] sm:$0xff]
    %v2952 = vld [vmem:[%s7 + $0x7a4] sm:$0xf]
    %v2953 = vld [vmem:[%s7 + $0x7a8] sm:$0xff]
    %v2954 = vld [vmem:[%s7 + $0x7b0] sm:$0xff]
    %v2955 = vld [vmem:[%s7 + $0x7b8] sm:$0xff]
    %v2956 = vld [vmem:[%s7 + $0x7c0] sm:$0xf]
    %v2957 = vld [vmem:[%s7 + $0x7c4] sm:$0xff]
    %v2958 = vld [vmem:[%s7 + $0x7cc] sm:$0xff]
    %v2959 = vld [vmem:[%s7 + $0x7d4] sm:$0xff]
    %v2960 = vld [vmem:[%s7 + $0x7dc] sm:$0xf]
    %v2961 = vld [vmem:[%s7 + $0x7e0] sm:$0xff]
    %v2962 = vld [vmem:[%s7 + $0x7e8] sm:$0xff]
    %v2963 = vld [vmem:[%s7 + $0x7f0] sm:$0xff]
    %v2964 = vld [vmem:[%s7 + $0x7f8] sm:$0xf]
    %v2965 = vld [vmem:[%s7 + $0x7fc] sm:$0xff]
    %v2966 = vld [vmem:[%s7 + $0x804] sm:$0xff]
    %v2967 = vld [vmem:[%s7 + $0x80c] sm:$0xff]
    %v2968 = vld [vmem:[%s7 + $0x814] sm:$0xf]
    %v2969 = vld [vmem:[%s7 + $0x818] sm:$0xff]
    %v2970 = vld [vmem:[%s7 + $0x820] sm:$0xff]
    %v2971 = vld [vmem:[%s7 + $0x828] sm:$0xff]
    %v2972 = vld [vmem:[%s7 + $0x830] sm:$0xf]
    %v2973 = vld [vmem:[%s7 + $0x834] sm:$0xff]
    %v2974 = vld [vmem:[%s7 + $0x83c] sm:$0xff]
    %v2975 = vld [vmem:[%s7 + $0x844] sm:$0xff]
    %v2976 = vld [vmem:[%s7 + $0x84c] sm:$0xf]
    %v2977 = vld [vmem:[%s7 + $0x850] sm:$0xff]
    %v2978 = vld [vmem:[%s7 + $0x858] sm:$0xff]
    %v2979 = vld [vmem:[%s7 + $0x860] sm:$0xff]
    %v2980 = vld [vmem:[%s7 + $0x868] sm:$0xf]
    %v2981 = vld [vmem:[%s7 + $0x86c] sm:$0xff]
    %v2982 = vld [vmem:[%s7 + $0x874] sm:$0xff]
    %v2983 = vld [vmem:[%s7 + $0x87c] sm:$0xff]
    %v2984 = vld [vmem:[%s7 + $0x884] sm:$0xf]
    %v2985 = vld [vmem:[%s7 + $0x888] sm:$0xff]
    %v2986 = vld [vmem:[%s7 + $0x890] sm:$0xff]
    %v2987 = vld [vmem:[%s7 + $0x898] sm:$0xff]
    %v2988 = vld [vmem:[%s7 + $0x8a0] sm:$0xf]
    %v2989 = vld [vmem:[%s7 + $0x8a4] sm:$0xff]
    %v2990 = vld [vmem:[%s7 + $0x8ac] sm:$0xff]
    %v2991 = vld [vmem:[%s7 + $0x8b4] sm:$0xff]
    %v2992 = vld [vmem:[%s7 + $0x8bc] sm:$0xf]
    %v2993 = vld [vmem:[%s7 + $0x8c0] sm:$0xff]
    %v2994 = vld [vmem:[%s7 + $0x8c8] sm:$0xff]
    %v2995 = vld [vmem:[%s7 + $0x8d0] sm:$0xff]
    %v2996 = vld [vmem:[%s7 + $0x8d8] sm:$0xf]
    %v2997 = vld [vmem:[%s7 + $0x8dc] sm:$0xff]
    %v2998 = vld [vmem:[%s7 + $0x8e4] sm:$0xff]
    %v2999 = vld [vmem:[%s7 + $0x8ec] sm:$0xff]
    %v3000 = vld [vmem:[%s7 + $0x8f4] sm:$0xf]
    %v3001 = vld [vmem:[%s7 + $0x8f8] sm:$0xff]
    %v3002 = vld [vmem:[%s7 + $0x900] sm:$0xff]
    %v3003 = vld [vmem:[%s7 + $0x908] sm:$0xff]
    %v3004 = vld [vmem:[%s7 + $0x910] sm:$0xf]
    %v3005 = vld [vmem:[%s7 + $0x914] sm:$0xff]
    %v3006 = vld [vmem:[%s7 + $0x91c] sm:$0xff]
    %v3007 = vld [vmem:[%s7 + $0x924] sm:$0xff]
    %v3008 = vld [vmem:[%s7 + $0x92c] sm:$0xf]
    %v3009 = vld [vmem:[%s7 + $0x930] sm:$0xff]
    %v3010 = vld [vmem:[%s7 + $0x938] sm:$0xff]
    %v3011 = vld [vmem:[%s7 + $0x940] sm:$0xff]
    %v3012 = vld [vmem:[%s7 + $0x948] sm:$0xf]
    %v3013 = vld [vmem:[%s7 + $0x94c] sm:$0xff]
    %v3014 = vld [vmem:[%s7 + $0x954] sm:$0xff]
    %v3015 = vld [vmem:[%s7 + $0x95c] sm:$0xff]
    %v3016 = vld [vmem:[%s7 + $0x964] sm:$0xf]
    %v3017 = vld [vmem:[%s7 + $0x968] sm:$0xff]
    %v3018 = vld [vmem:[%s7 + $0x970] sm:$0xff]
    %v3019 = vld [vmem:[%s7 + $0x978] sm:$0xff]
    %v3020 = vld [vmem:[%s7 + $0x980] sm:$0xf]
    %v3021 = vld [vmem:[%s7 + $0x984] sm:$0xff]
    %v3022 = vld [vmem:[%s7 + $0x98c] sm:$0xff]
    %v3023 = vld [vmem:[%s7 + $0x994] sm:$0xff]
    %v3024 = vld [vmem:[%s7 + $0x99c] sm:$0xf]
    %v3025 = vld [vmem:[%s7 + $0x9a0] sm:$0xff]
    %v3026 = vld [vmem:[%s7 + $0x9a8] sm:$0xff]
    %v3027 = vld [vmem:[%s7 + $0x9b0] sm:$0xff]
    %v3028 = vld [vmem:[%s7 + $0x9b8] sm:$0xf]
    %v3029 = vld [vmem:[%s7 + $0x9bc] sm:$0xff]
    %v3030 = vld [vmem:[%s7 + $0x9c4] sm:$0xff]
    %v3031 = vld [vmem:[%s7 + $0x9cc] sm:$0xff]
    %v3032 = vld [vmem:[%s7 + $0x9d4] sm:$0xf]
    %v3033 = vld [vmem:[%s7 + $0x9d8] sm:$0xff]
    %v3034 = vld [vmem:[%s7 + $0x9e0] sm:$0xff]
    %v3035 = vld [vmem:[%s7 + $0x9e8] sm:$0xff]
    %v3036 = vld [vmem:[%s7 + $0x9f0] sm:$0xf]
    %v3037 = vld [vmem:[%s7 + $0x9f4] sm:$0xff]
    %v3038 = vld [vmem:[%s7 + $0x9fc] sm:$0xff]
    %v3039 = vld [vmem:[%s7 + $0xa04] sm:$0xff]
    %v3040 = vld [vmem:[%s7 + $0xa0c] sm:$0xf]
    %v3041 = vld [vmem:[%s7 + $0xa10] sm:$0xff]
    %v3042 = vld [vmem:[%s7 + $0xa18] sm:$0xff]
    %v3043 = vld [vmem:[%s7 + $0xa20] sm:$0xff]
    %v3044 = vld [vmem:[%s7 + $0xa28] sm:$0xf]
    %v3045 = vld [vmem:[%s7 + $0xa2c] sm:$0xff]
    %v3046 = vld [vmem:[%s7 + $0xa34] sm:$0xff]
    %v3047 = vld [vmem:[%s7 + $0xa3c] sm:$0xff]
    %v3048 = vld [vmem:[%s7 + $0xa44] sm:$0xf]
    %v3049 = vld [vmem:[%s7 + $0xa48] sm:$0xff]
    %v3050 = vld [vmem:[%s7 + $0xa50] sm:$0xff]
    %v3051 = vld [vmem:[%s7 + $0xa58] sm:$0xff]
    %v3052 = vld [vmem:[%s7 + $0xa60] sm:$0xf]
    %v3053 = vld [vmem:[%s7 + $0xa64] sm:$0xff]
    %v3054 = vld [vmem:[%s7 + $0xa6c] sm:$0xff]
    %v3055 = vld [vmem:[%s7 + $0xa74] sm:$0xff]
    %v3056 = vld [vmem:[%s7 + $0xa7c] sm:$0xf]
    %v3057 = vld [vmem:[%s7 + $0xa80] sm:$0xff]
    %v3058 = vld [vmem:[%s7 + $0xa88] sm:$0xff]
    %v3059 = vld [vmem:[%s7 + $0xa90] sm:$0xff]
    %v3060 = vld [vmem:[%s7 + $0xa98] sm:$0xf]
    %v3061 = vld [vmem:[%s7 + $0xa9c] sm:$0xff]
    %v3062 = vld [vmem:[%s7 + $0xaa4] sm:$0xff]
    %v3063 = vld [vmem:[%s7 + $0xaac] sm:$0xff]
    %v3064 = vld [vmem:[%s7 + $0xab4] sm:$0xf]
    %v3065 = vld [vmem:[%s7 + $0xab8] sm:$0xff]
    %v3066 = vld [vmem:[%s7 + $0xac0] sm:$0xff]
    %v3067 = vld [vmem:[%s7 + $0xac8] sm:$0xff]
    %v3068 = vld [vmem:[%s7 + $0xad0] sm:$0xf]
    %v3069 = vld [vmem:[%s7 + $0xad4] sm:$0xff]
    %v3070 = vld [vmem:[%s7 + $0xadc] sm:$0xff]
    %v3071 = vld [vmem:[%s7 + $0xae4] sm:$0xff]
    %v3072 = vld [vmem:[%s7 + $0xaec] sm:$0xf]
    %v3073 = vld [vmem:[%s7 + $0xaf0] sm:$0xff]
    %v3074 = vld [vmem:[%s7 + $0xaf8] sm:$0xff]
    %v3075 = vld [vmem:[%s7 + $0xb00] sm:$0xff]
    %v3076 = vld [vmem:[%s7 + $0xb08] sm:$0xf]
    %v3077 = vld [vmem:[%s7 + $0xb0c] sm:$0xff]
    %v3078 = vld [vmem:[%s7 + $0xb14] sm:$0xff]
    %v3079 = vld [vmem:[%s7 + $0xb1c] sm:$0xff]
    %v3080 = vld [vmem:[%s7 + $0xb24] sm:$0xf]
    %v3081 = vld [vmem:[%s7 + $0xb28] sm:$0xff]
    %v3082 = vld [vmem:[%s7 + $0xb30] sm:$0xff]
    %v3083 = vld [vmem:[%s7 + $0xb38] sm:$0xff]
    %v3084 = vld [vmem:[%s7 + $0xb40] sm:$0xf]
    %v3085 = vld [vmem:[%s7 + $0xb44] sm:$0xff]
    %v3086 = vld [vmem:[%s7 + $0xb4c] sm:$0xff]
    %v3087 = vld [vmem:[%s7 + $0xb54] sm:$0xff]
    %v3088 = vld [vmem:[%s7 + $0xb5c] sm:$0xf]
    %v3089 = vld [vmem:[%s7 + $0xb60] sm:$0xff]
    %v3090 = vld [vmem:[%s7 + $0xb68] sm:$0xff]
    %v3091 = vld [vmem:[%s7 + $0xb70] sm:$0xff]
    %v3092 = vld [vmem:[%s7 + $0xb78] sm:$0xf]
    %v3093 = vld [vmem:[%s7 + $0xb7c] sm:$0xff]
    %v3094 = vld [vmem:[%s7 + $0xb84] sm:$0xff]
    %v3095 = vld [vmem:[%s7 + $0xb8c] sm:$0xff]
    %v3096 = vld [vmem:[%s7 + $0xb94] sm:$0xf]
    %v3097 = vld [vmem:[%s7 + $0xb98] sm:$0xff]
    %v3098 = vld [vmem:[%s7 + $0xba0] sm:$0xff]
    %v3099 = vld [vmem:[%s7 + $0xba8] sm:$0xff]
    %v3100 = vld [vmem:[%s7 + $0xbb0] sm:$0xf]
    %v3101 = vld [vmem:[%s7 + $0xbb4] sm:$0xff]
    %v3102 = vld [vmem:[%s7 + $0xbbc] sm:$0xff]
    %v3103 = vld [vmem:[%s7 + $0xbc4] sm:$0xff]
    %v3104 = vld [vmem:[%s7 + $0xbcc] sm:$0xf]
    %v3105 = vld [vmem:[%s7 + $0xbd0] sm:$0xff]
    %v3106 = vld [vmem:[%s7 + $0xbd8] sm:$0xff]
    %v3107 = vld [vmem:[%s7 + $0xbe0] sm:$0xff]
    %v3108 = vld [vmem:[%s7 + $0xbe8] sm:$0xf]
    %v3109 = vld [vmem:[%s7 + $0xbec] sm:$0xff]
    %v3110 = vld [vmem:[%s7 + $0xbf4] sm:$0xff]
    %v3111 = vld [vmem:[%s7 + $0xbfc] sm:$0xff]
    %v3112 = vld [vmem:[%s7 + $0xc04] sm:$0xf]
    %v3113 = vld [vmem:[%s7 + $0xc08] sm:$0xff]
    %v3114 = vld [vmem:[%s7 + $0xc10] sm:$0xff]
    %v3115 = vld [vmem:[%s7 + $0xc18] sm:$0xff]
    %v3116 = vld [vmem:[%s7 + $0xc20] sm:$0xf]
    %v3117 = vld [vmem:[%s7 + $0xc24] sm:$0xff]
    %v3118 = vld [vmem:[%s7 + $0xc2c] sm:$0xff]
    %v3119 = vld [vmem:[%s7 + $0xc34] sm:$0xff]
    %v3120 = vld [vmem:[%s7 + $0xc3c] sm:$0xf]
    %v3121 = vld [vmem:[%s7 + $0xc40] sm:$0xff]
    %v3122 = vld [vmem:[%s7 + $0xc48] sm:$0xff]
    %v3123 = vld [vmem:[%s7 + $0xc50] sm:$0xff]
    %v3124 = vld [vmem:[%s7 + $0xc58] sm:$0xf]
    %v3125 = vld [vmem:[%s7 + $0xc5c] sm:$0xff]
    %v3126 = vld [vmem:[%s7 + $0xc64] sm:$0xff]
    %v3127 = vld [vmem:[%s7 + $0xc6c] sm:$0xff]
    %v3128 = vld [vmem:[%s7 + $0xc74] sm:$0xf]
    %v3129 = vld [vmem:[%s7 + $0xc78] sm:$0xff]
    %v3130 = vld [vmem:[%s7 + $0xc80] sm:$0xff]
    %v3131 = vld [vmem:[%s7 + $0xc88] sm:$0xff]
    %v3132 = vld [vmem:[%s7 + $0xc90] sm:$0xf]
    %v3133 = vld [vmem:[%s7 + $0xc94] sm:$0xff]
    %v3134 = vld [vmem:[%s7 + $0xc9c] sm:$0xff]
    %v3135 = vld [vmem:[%s7 + $0xca4] sm:$0xff]
    %v3136 = vld [vmem:[%s7 + $0xcac] sm:$0xf]
    %v3137 = vld [vmem:[%s7 + $0xcb0] sm:$0xff]
    %v3138 = vld [vmem:[%s7 + $0xcb8] sm:$0xff]
    %v3139 = vld [vmem:[%s7 + $0xcc0] sm:$0xff]
    %v3140 = vld [vmem:[%s7 + $0xcc8] sm:$0xf]
    %v3141 = vld [vmem:[%s7 + $0xccc] sm:$0xff]
    %v3142 = vld [vmem:[%s7 + $0xcd4] sm:$0xff]
    %v3143 = vld [vmem:[%s7 + $0xcdc] sm:$0xff]
    %v3144 = vld [vmem:[%s7 + $0xce4] sm:$0xf]
    %v3145 = vld [vmem:[%s7 + $0xce8] sm:$0xff]
    %v3146 = vld [vmem:[%s7 + $0xcf0] sm:$0xff]
    %v3147 = vld [vmem:[%s7 + $0xcf8] sm:$0xff]
    %v3148 = vld [vmem:[%s7 + $0xd00] sm:$0xf]
    %v3149 = vld [vmem:[%s7 + $0xd04] sm:$0xff]
    %v3150 = vld [vmem:[%s7 + $0xd0c] sm:$0xff]
    %v3151 = vld [vmem:[%s7 + $0xd14] sm:$0xff]
    %v3152 = vld [vmem:[%s7 + $0xd1c] sm:$0xf]
    %v3153 = vld [vmem:[%s7 + $0xd20] sm:$0xff]
    %v3154 = vld [vmem:[%s7 + $0xd28] sm:$0xff]
    %v3155 = vld [vmem:[%s7 + $0xd30] sm:$0xff]
    %v3156 = vld [vmem:[%s7 + $0xd38] sm:$0xf]
    %v3157 = vld [vmem:[%s7 + $0xd3c] sm:$0xff]
    %v3158 = vld [vmem:[%s7 + $0xd44] sm:$0xff]
    %v3159 = vld [vmem:[%s7 + $0xd4c] sm:$0xff]
    %v3160 = vld [vmem:[%s7 + $0xd54] sm:$0xf]
    %v3161 = vld [vmem:[%s7 + $0xd58] sm:$0xff]
    %v3162 = vld [vmem:[%s7 + $0xd60] sm:$0xff]
    %v3163 = vld [vmem:[%s7 + $0xd68] sm:$0xff]
    %v3164 = vld [vmem:[%s7 + $0xd70] sm:$0xf]
    %v3165 = vld [vmem:[%s7 + $0xd74] sm:$0xff]
    %v3166 = vld [vmem:[%s7 + $0xd7c] sm:$0xff]
    %v3167 = vld [vmem:[%s7 + $0xd84] sm:$0xff]
    %v3168 = vld [vmem:[%s7 + $0xd8c] sm:$0xf]
    %v3169 = vld [vmem:[%s7 + $0xd90] sm:$0xff]
    %v3170 = vld [vmem:[%s7 + $0xd98] sm:$0xff]
    %v3171 = vld [vmem:[%s7 + $0xda0] sm:$0xff]
    %v3172 = vld [vmem:[%s7 + $0xda8] sm:$0xf]
    %v3173 = vld [vmem:[%s7 + $0xdac] sm:$0xff]
    %v3174 = vld [vmem:[%s7 + $0xdb4] sm:$0xff]
    %v3175 = vld [vmem:[%s7 + $0xdbc] sm:$0xff]
    %v3176 = vld [vmem:[%s7 + $0xdc4] sm:$0xf]
    %v3177 = vld [vmem:[%s7 + $0xdc8] sm:$0xff]
    %v3178 = vld [vmem:[%s7 + $0xdd0] sm:$0xff]
    %v3179 = vld [vmem:[%s7 + $0xdd8] sm:$0xff]
    %v3180 = vld [vmem:[%s7 + $0xde0] sm:$0xf]
    %v3181 = vld [vmem:[%s7 + $0xde4] sm:$0xff]
    %v3182 = vld [vmem:[%s7 + $0xdec] sm:$0xff]
    %v3183 = vld [vmem:[%s7 + $0xdf4] sm:$0xff]
    %v3184 = vld [vmem:[%s7 + $0xdfc] sm:$0xf]
    %v3185 = vld [vmem:[%s8] sm:$0x7f]
    %v3187 = vperm.slane %v3185, 0
    %v3188 = vperm.slane %v3185, 1
    %v3189 = vperm.slane %v3185, 2
    %v3190 = vperm.slane %v3185, 3
    %v3191 = vperm.slane %v3185, 4
    %v3192 = vperm.slane %v3185, 5
    %v3193 = vperm.slane %v3185, 6
    %v3713 = vunpack.c.l.b16 %v2673
    %v3714 = vunpack.c.h.b16 %v2673
    %v3715 = vunpack.c.l.b16 %v2674
    %v3716 = vunpack.c.h.b16 %v2674
    %v3717 = vunpack.c.l.b16 %v2675
    %v3718 = vunpack.c.h.b16 %v2675
    %v3719 = vunpack.c.l.b16 %v2676
    %v3720 = vunpack.c.l.b16 %v2677
    %v3721 = vunpack.c.h.b16 %v2677
    %v3722 = vunpack.c.l.b16 %v2678
    %v3723 = vunpack.c.h.b16 %v2678
    %v3724 = vunpack.c.l.b16 %v2679
    %v3725 = vunpack.c.h.b16 %v2679
    %v3726 = vunpack.c.l.b16 %v2680
    %v3727 = vunpack.c.l.b16 %v2681
    %v3728 = vunpack.c.h.b16 %v2681
    %v3729 = vunpack.c.l.b16 %v2682
    %v3730 = vunpack.c.h.b16 %v2682
    %v3731 = vunpack.c.l.b16 %v2683
    %v3732 = vunpack.c.h.b16 %v2683
    %v3733 = vunpack.c.l.b16 %v2684
    %v3734 = vunpack.c.l.b16 %v2685
    %v3735 = vunpack.c.h.b16 %v2685
    %v3736 = vunpack.c.l.b16 %v2686
    %v3737 = vunpack.c.h.b16 %v2686
    %v3738 = vunpack.c.l.b16 %v2687
    %v3739 = vunpack.c.h.b16 %v2687
    %v3740 = vunpack.c.l.b16 %v2688
    %v3741 = vunpack.c.l.b16 %v2689
    %v3742 = vunpack.c.h.b16 %v2689
    %v3743 = vunpack.c.l.b16 %v2690
    %v3744 = vunpack.c.h.b16 %v2690
    %v3745 = vunpack.c.l.b16 %v2691
    %v3746 = vunpack.c.h.b16 %v2691
    %v3747 = vunpack.c.l.b16 %v2692
    %v3748 = vunpack.c.l.b16 %v2693
    %v3749 = vunpack.c.h.b16 %v2693
    %v3750 = vunpack.c.l.b16 %v2694
    %v3751 = vunpack.c.h.b16 %v2694
    %v3752 = vunpack.c.l.b16 %v2695
    %v3753 = vunpack.c.h.b16 %v2695
    %v3754 = vunpack.c.l.b16 %v2696
    %v3755 = vunpack.c.l.b16 %v2697
    %v3756 = vunpack.c.h.b16 %v2697
    %v3757 = vunpack.c.l.b16 %v2698
    %v3758 = vunpack.c.h.b16 %v2698
    %v3759 = vunpack.c.l.b16 %v2699
    %v3760 = vunpack.c.h.b16 %v2699
    %v3761 = vunpack.c.l.b16 %v2700
    %v3762 = vunpack.c.l.b16 %v2701
    %v3763 = vunpack.c.h.b16 %v2701
    %v3764 = vunpack.c.l.b16 %v2702
    %v3765 = vunpack.c.h.b16 %v2702
    %v3766 = vunpack.c.l.b16 %v2703
    %v3767 = vunpack.c.h.b16 %v2703
    %v3768 = vunpack.c.l.b16 %v2704
    %v3769 = vunpack.c.l.b16 %v2705
    %v3770 = vunpack.c.h.b16 %v2705
    %v3771 = vunpack.c.l.b16 %v2706
    %v3772 = vunpack.c.h.b16 %v2706
    %v3773 = vunpack.c.l.b16 %v2707
    %v3774 = vunpack.c.h.b16 %v2707
    %v3775 = vunpack.c.l.b16 %v2708
    %v3776 = vunpack.c.l.b16 %v2709
    %v3777 = vunpack.c.h.b16 %v2709
    %v3778 = vunpack.c.l.b16 %v2710
    %v3779 = vunpack.c.h.b16 %v2710
    %v3780 = vunpack.c.l.b16 %v2711
    %v3781 = vunpack.c.h.b16 %v2711
    %v3782 = vunpack.c.l.b16 %v2712
    %v3783 = vunpack.c.l.b16 %v2713
    %v3784 = vunpack.c.h.b16 %v2713
    %v3785 = vunpack.c.l.b16 %v2714
    %v3786 = vunpack.c.h.b16 %v2714
    %v3787 = vunpack.c.l.b16 %v2715
    %v3788 = vunpack.c.h.b16 %v2715
    %v3789 = vunpack.c.l.b16 %v2716
    %v3790 = vunpack.c.l.b16 %v2717
    %v3791 = vunpack.c.h.b16 %v2717
    %v3792 = vunpack.c.l.b16 %v2718
    %v3793 = vunpack.c.h.b16 %v2718
    %v3794 = vunpack.c.l.b16 %v2719
    %v3795 = vunpack.c.h.b16 %v2719
    %v3796 = vunpack.c.l.b16 %v2720
    %v3797 = vunpack.c.l.b16 %v2721
    %v3798 = vunpack.c.h.b16 %v2721
    %v3799 = vunpack.c.l.b16 %v2722
    %v3800 = vunpack.c.h.b16 %v2722
    %v3801 = vunpack.c.l.b16 %v2723
    %v3802 = vunpack.c.h.b16 %v2723
    %v3803 = vunpack.c.l.b16 %v2724
    %v3804 = vunpack.c.l.b16 %v2725
    %v3805 = vunpack.c.h.b16 %v2725
    %v3806 = vunpack.c.l.b16 %v2726
    %v3807 = vunpack.c.h.b16 %v2726
    %v3808 = vunpack.c.l.b16 %v2727
    %v3809 = vunpack.c.h.b16 %v2727
    %v3810 = vunpack.c.l.b16 %v2728
    %v3811 = vunpack.c.l.b16 %v2729
    %v3812 = vunpack.c.h.b16 %v2729
    %v3813 = vunpack.c.l.b16 %v2730
    %v3814 = vunpack.c.h.b16 %v2730
    %v3815 = vunpack.c.l.b16 %v2731
    %v3816 = vunpack.c.h.b16 %v2731
    %v3817 = vunpack.c.l.b16 %v2732
    %v3818 = vunpack.c.l.b16 %v2733
    %v3819 = vunpack.c.h.b16 %v2733
    %v3820 = vunpack.c.l.b16 %v2734
    %v3821 = vunpack.c.h.b16 %v2734
    %v3822 = vunpack.c.l.b16 %v2735
    %v3823 = vunpack.c.h.b16 %v2735
    %v3824 = vunpack.c.l.b16 %v2736
    %v3825 = vunpack.c.l.b16 %v2737
    %v3826 = vunpack.c.h.b16 %v2737
    %v3827 = vunpack.c.l.b16 %v2738
    %v3828 = vunpack.c.h.b16 %v2738
    %v3829 = vunpack.c.l.b16 %v2739
    %v3830 = vunpack.c.h.b16 %v2739
    %v3831 = vunpack.c.l.b16 %v2740
    %v3832 = vunpack.c.l.b16 %v2741
    %v3833 = vunpack.c.h.b16 %v2741
    %v3834 = vunpack.c.l.b16 %v2742
    %v3835 = vunpack.c.h.b16 %v2742
    %v3836 = vunpack.c.l.b16 %v2743
    %v3837 = vunpack.c.h.b16 %v2743
    %v3838 = vunpack.c.l.b16 %v2744
    %v3839 = vunpack.c.l.b16 %v2745
    %v3840 = vunpack.c.h.b16 %v2745
    %v3841 = vunpack.c.l.b16 %v2746
    %v3842 = vunpack.c.h.b16 %v2746
    %v3843 = vunpack.c.l.b16 %v2747
    %v3844 = vunpack.c.h.b16 %v2747
    %v3845 = vunpack.c.l.b16 %v2748
    %v3846 = vunpack.c.l.b16 %v2749
    %v3847 = vunpack.c.h.b16 %v2749
    %v3848 = vunpack.c.l.b16 %v2750
    %v3849 = vunpack.c.h.b16 %v2750
    %v3850 = vunpack.c.l.b16 %v2751
    %v3851 = vunpack.c.h.b16 %v2751
    %v3852 = vunpack.c.l.b16 %v2752
    %v3853 = vunpack.c.l.b16 %v2753
    %v3854 = vunpack.c.h.b16 %v2753
    %v3855 = vunpack.c.l.b16 %v2754
    %v3856 = vunpack.c.h.b16 %v2754
    %v3857 = vunpack.c.l.b16 %v2755
    %v3858 = vunpack.c.h.b16 %v2755
    %v3859 = vunpack.c.l.b16 %v2756
    %v3860 = vunpack.c.l.b16 %v2757
    %v3861 = vunpack.c.h.b16 %v2757
    %v3862 = vunpack.c.l.b16 %v2758
    %v3863 = vunpack.c.h.b16 %v2758
    %v3864 = vunpack.c.l.b16 %v2759
    %v3865 = vunpack.c.h.b16 %v2759
    %v3866 = vunpack.c.l.b16 %v2760
    %v3867 = vunpack.c.l.b16 %v2761
    %v3868 = vunpack.c.h.b16 %v2761
    %v3869 = vunpack.c.l.b16 %v2762
    %v3870 = vunpack.c.h.b16 %v2762
    %v3871 = vunpack.c.l.b16 %v2763
    %v3872 = vunpack.c.h.b16 %v2763
    %v3873 = vunpack.c.l.b16 %v2764
    %v3874 = vunpack.c.l.b16 %v2765
    %v3875 = vunpack.c.h.b16 %v2765
    %v3876 = vunpack.c.l.b16 %v2766
    %v3877 = vunpack.c.h.b16 %v2766
    %v3878 = vunpack.c.l.b16 %v2767
    %v3879 = vunpack.c.h.b16 %v2767
    %v3880 = vunpack.c.l.b16 %v2768
    %v3881 = vunpack.c.l.b16 %v2769
    %v3882 = vunpack.c.h.b16 %v2769
    %v3883 = vunpack.c.l.b16 %v2770
    %v3884 = vunpack.c.h.b16 %v2770
    %v3885 = vunpack.c.l.b16 %v2771
    %v3886 = vunpack.c.h.b16 %v2771
    %v3887 = vunpack.c.l.b16 %v2772
    %v3888 = vunpack.c.l.b16 %v2773
    %v3889 = vunpack.c.h.b16 %v2773
    %v3890 = vunpack.c.l.b16 %v2774
    %v3891 = vunpack.c.h.b16 %v2774
    %v3892 = vunpack.c.l.b16 %v2775
    %v3893 = vunpack.c.h.b16 %v2775
    %v3894 = vunpack.c.l.b16 %v2776
    %v3895 = vunpack.c.l.b16 %v2777
    %v3896 = vunpack.c.h.b16 %v2777
    %v3897 = vunpack.c.l.b16 %v2778
    %v3898 = vunpack.c.h.b16 %v2778
    %v3899 = vunpack.c.l.b16 %v2779
    %v3900 = vunpack.c.h.b16 %v2779
    %v3901 = vunpack.c.l.b16 %v2780
    %v3902 = vunpack.c.l.b16 %v2781
    %v3903 = vunpack.c.h.b16 %v2781
    %v3904 = vunpack.c.l.b16 %v2782
    %v3905 = vunpack.c.h.b16 %v2782
    %v3906 = vunpack.c.l.b16 %v2783
    %v3907 = vunpack.c.h.b16 %v2783
    %v3908 = vunpack.c.l.b16 %v2784
    %v3909 = vunpack.c.l.b16 %v2785
    %v3910 = vunpack.c.h.b16 %v2785
    %v3911 = vunpack.c.l.b16 %v2786
    %v3912 = vunpack.c.h.b16 %v2786
    %v3913 = vunpack.c.l.b16 %v2787
    %v3914 = vunpack.c.h.b16 %v2787
    %v3915 = vunpack.c.l.b16 %v2788
    %v3916 = vunpack.c.l.b16 %v2789
    %v3917 = vunpack.c.h.b16 %v2789
    %v3918 = vunpack.c.l.b16 %v2790
    %v3919 = vunpack.c.h.b16 %v2790
    %v3920 = vunpack.c.l.b16 %v2791
    %v3921 = vunpack.c.h.b16 %v2791
    %v3922 = vunpack.c.l.b16 %v2792
    %v3923 = vunpack.c.l.b16 %v2793
    %v3924 = vunpack.c.h.b16 %v2793
    %v3925 = vunpack.c.l.b16 %v2794
    %v3926 = vunpack.c.h.b16 %v2794
    %v3927 = vunpack.c.l.b16 %v2795
    %v3928 = vunpack.c.h.b16 %v2795
    %v3929 = vunpack.c.l.b16 %v2796
    %v3930 = vunpack.c.l.b16 %v2797
    %v3931 = vunpack.c.h.b16 %v2797
    %v3932 = vunpack.c.l.b16 %v2798
    %v3933 = vunpack.c.h.b16 %v2798
    %v3934 = vunpack.c.l.b16 %v2799
    %v3935 = vunpack.c.h.b16 %v2799
    %v3936 = vunpack.c.l.b16 %v2800
    %v3937 = vunpack.c.l.b16 %v2801
    %v3938 = vunpack.c.h.b16 %v2801
    %v3939 = vunpack.c.l.b16 %v2802
    %v3940 = vunpack.c.h.b16 %v2802
    %v3941 = vunpack.c.l.b16 %v2803
    %v3942 = vunpack.c.h.b16 %v2803
    %v3943 = vunpack.c.l.b16 %v2804
    %v3944 = vunpack.c.l.b16 %v2805
    %v3945 = vunpack.c.h.b16 %v2805
    %v3946 = vunpack.c.l.b16 %v2806
    %v3947 = vunpack.c.h.b16 %v2806
    %v3948 = vunpack.c.l.b16 %v2807
    %v3949 = vunpack.c.h.b16 %v2807
    %v3950 = vunpack.c.l.b16 %v2808
    %v3951 = vunpack.c.l.b16 %v2809
    %v3952 = vunpack.c.h.b16 %v2809
    %v3953 = vunpack.c.l.b16 %v2810
    %v3954 = vunpack.c.h.b16 %v2810
    %v3955 = vunpack.c.l.b16 %v2811
    %v3956 = vunpack.c.h.b16 %v2811
    %v3957 = vunpack.c.l.b16 %v2812
    %v3958 = vunpack.c.l.b16 %v2813
    %v3959 = vunpack.c.h.b16 %v2813
    %v3960 = vunpack.c.l.b16 %v2814
    %v3961 = vunpack.c.h.b16 %v2814
    %v3962 = vunpack.c.l.b16 %v2815
    %v3963 = vunpack.c.h.b16 %v2815
    %v3964 = vunpack.c.l.b16 %v2816
    %v3965 = vunpack.c.l.b16 %v2817
    %v3966 = vunpack.c.h.b16 %v2817
    %v3967 = vunpack.c.l.b16 %v2818
    %v3968 = vunpack.c.h.b16 %v2818
    %v3969 = vunpack.c.l.b16 %v2819
    %v3970 = vunpack.c.h.b16 %v2819
    %v3971 = vunpack.c.l.b16 %v2820
    %v3972 = vunpack.c.l.b16 %v2821
    %v3973 = vunpack.c.h.b16 %v2821
    %v3974 = vunpack.c.l.b16 %v2822
    %v3975 = vunpack.c.h.b16 %v2822
    %v3976 = vunpack.c.l.b16 %v2823
    %v3977 = vunpack.c.h.b16 %v2823
    %v3978 = vunpack.c.l.b16 %v2824
    %v3979 = vunpack.c.l.b16 %v2825
    %v3980 = vunpack.c.h.b16 %v2825
    %v3981 = vunpack.c.l.b16 %v2826
    %v3982 = vunpack.c.h.b16 %v2826
    %v3983 = vunpack.c.l.b16 %v2827
    %v3984 = vunpack.c.h.b16 %v2827
    %v3985 = vunpack.c.l.b16 %v2828
    %v3986 = vunpack.c.l.b16 %v2829
    %v3987 = vunpack.c.h.b16 %v2829
    %v3988 = vunpack.c.l.b16 %v2830
    %v3989 = vunpack.c.h.b16 %v2830
    %v3990 = vunpack.c.l.b16 %v2831
    %v3991 = vunpack.c.h.b16 %v2831
    %v3992 = vunpack.c.l.b16 %v2832
    %v3993 = vunpack.c.l.b16 %v2833
    %v3994 = vunpack.c.h.b16 %v2833
    %v3995 = vunpack.c.l.b16 %v2834
    %v3996 = vunpack.c.h.b16 %v2834
    %v3997 = vunpack.c.l.b16 %v2835
    %v3998 = vunpack.c.h.b16 %v2835
    %v3999 = vunpack.c.l.b16 %v2836
    %v4000 = vunpack.c.l.b16 %v2837
    %v4001 = vunpack.c.h.b16 %v2837
    %v4002 = vunpack.c.l.b16 %v2838
    %v4003 = vunpack.c.h.b16 %v2838
    %v4004 = vunpack.c.l.b16 %v2839
    %v4005 = vunpack.c.h.b16 %v2839
    %v4006 = vunpack.c.l.b16 %v2840
    %v4007 = vunpack.c.l.b16 %v2841
    %v4008 = vunpack.c.h.b16 %v2841
    %v4009 = vunpack.c.l.b16 %v2842
    %v4010 = vunpack.c.h.b16 %v2842
    %v4011 = vunpack.c.l.b16 %v2843
    %v4012 = vunpack.c.h.b16 %v2843
    %v4013 = vunpack.c.l.b16 %v2844
    %v4014 = vunpack.c.l.b16 %v2845
    %v4015 = vunpack.c.h.b16 %v2845
    %v4016 = vunpack.c.l.b16 %v2846
    %v4017 = vunpack.c.h.b16 %v2846
    %v4018 = vunpack.c.l.b16 %v2847
    %v4019 = vunpack.c.h.b16 %v2847
    %v4020 = vunpack.c.l.b16 %v2848
    %v4021 = vunpack.c.l.b16 %v2849
    %v4022 = vunpack.c.h.b16 %v2849
    %v4023 = vunpack.c.l.b16 %v2850
    %v4024 = vunpack.c.h.b16 %v2850
    %v4025 = vunpack.c.l.b16 %v2851
    %v4026 = vunpack.c.h.b16 %v2851
    %v4027 = vunpack.c.l.b16 %v2852
    %v4028 = vunpack.c.l.b16 %v2853
    %v4029 = vunpack.c.h.b16 %v2853
    %v4030 = vunpack.c.l.b16 %v2854
    %v4031 = vunpack.c.h.b16 %v2854
    %v4032 = vunpack.c.l.b16 %v2855
    %v4033 = vunpack.c.h.b16 %v2855
    %v4034 = vunpack.c.l.b16 %v2856
    %v4035 = vunpack.c.l.b16 %v2857
    %v4036 = vunpack.c.h.b16 %v2857
    %v4037 = vunpack.c.l.b16 %v2858
    %v4038 = vunpack.c.h.b16 %v2858
    %v4039 = vunpack.c.l.b16 %v2859
    %v4040 = vunpack.c.h.b16 %v2859
    %v4041 = vunpack.c.l.b16 %v2860
    %v4042 = vunpack.c.l.b16 %v2861
    %v4043 = vunpack.c.h.b16 %v2861
    %v4044 = vunpack.c.l.b16 %v2862
    %v4045 = vunpack.c.h.b16 %v2862
    %v4046 = vunpack.c.l.b16 %v2863
    %v4047 = vunpack.c.h.b16 %v2863
    %v4048 = vunpack.c.l.b16 %v2864
    %v4049 = vunpack.c.l.b16 %v2865
    %v4050 = vunpack.c.h.b16 %v2865
    %v4051 = vunpack.c.l.b16 %v2866
    %v4052 = vunpack.c.h.b16 %v2866
    %v4053 = vunpack.c.l.b16 %v2867
    %v4054 = vunpack.c.h.b16 %v2867
    %v4055 = vunpack.c.l.b16 %v2868
    %v4056 = vunpack.c.l.b16 %v2869
    %v4057 = vunpack.c.h.b16 %v2869
    %v4058 = vunpack.c.l.b16 %v2870
    %v4059 = vunpack.c.h.b16 %v2870
    %v4060 = vunpack.c.l.b16 %v2871
    %v4061 = vunpack.c.h.b16 %v2871
    %v4062 = vunpack.c.l.b16 %v2872
    %v4063 = vunpack.c.l.b16 %v2873
    %v4064 = vunpack.c.h.b16 %v2873
    %v4065 = vunpack.c.l.b16 %v2874
    %v4066 = vunpack.c.h.b16 %v2874
    %v4067 = vunpack.c.l.b16 %v2875
    %v4068 = vunpack.c.h.b16 %v2875
    %v4069 = vunpack.c.l.b16 %v2876
    %v4070 = vunpack.c.l.b16 %v2877
    %v4071 = vunpack.c.h.b16 %v2877
    %v4072 = vunpack.c.l.b16 %v2878
    %v4073 = vunpack.c.h.b16 %v2878
    %v4074 = vunpack.c.l.b16 %v2879
    %v4075 = vunpack.c.h.b16 %v2879
    %v4076 = vunpack.c.l.b16 %v2880
    %v4077 = vunpack.c.l.b16 %v2881
    %v4078 = vunpack.c.h.b16 %v2881
    %v4079 = vunpack.c.l.b16 %v2882
    %v4080 = vunpack.c.h.b16 %v2882
    %v4081 = vunpack.c.l.b16 %v2883
    %v4082 = vunpack.c.h.b16 %v2883
    %v4083 = vunpack.c.l.b16 %v2884
    %v4084 = vunpack.c.l.b16 %v2885
    %v4085 = vunpack.c.h.b16 %v2885
    %v4086 = vunpack.c.l.b16 %v2886
    %v4087 = vunpack.c.h.b16 %v2886
    %v4088 = vunpack.c.l.b16 %v2887
    %v4089 = vunpack.c.h.b16 %v2887
    %v4090 = vunpack.c.l.b16 %v2888
    %v4091 = vunpack.c.l.b16 %v2889
    %v4092 = vunpack.c.h.b16 %v2889
    %v4093 = vunpack.c.l.b16 %v2890
    %v4094 = vunpack.c.h.b16 %v2890
    %v4095 = vunpack.c.l.b16 %v2891
    %v4096 = vunpack.c.h.b16 %v2891
    %v4097 = vunpack.c.l.b16 %v2892
    %v4098 = vunpack.c.l.b16 %v2893
    %v4099 = vunpack.c.h.b16 %v2893
    %v4100 = vunpack.c.l.b16 %v2894
    %v4101 = vunpack.c.h.b16 %v2894
    %v4102 = vunpack.c.l.b16 %v2895
    %v4103 = vunpack.c.h.b16 %v2895
    %v4104 = vunpack.c.l.b16 %v2896
    %v4105 = vunpack.c.l.b16 %v2897
    %v4106 = vunpack.c.h.b16 %v2897
    %v4107 = vunpack.c.l.b16 %v2898
    %v4108 = vunpack.c.h.b16 %v2898
    %v4109 = vunpack.c.l.b16 %v2899
    %v4110 = vunpack.c.h.b16 %v2899
    %v4111 = vunpack.c.l.b16 %v2900
    %v4112 = vunpack.c.l.b16 %v2901
    %v4113 = vunpack.c.h.b16 %v2901
    %v4114 = vunpack.c.l.b16 %v2902
    %v4115 = vunpack.c.h.b16 %v2902
    %v4116 = vunpack.c.l.b16 %v2903
    %v4117 = vunpack.c.h.b16 %v2903
    %v4118 = vunpack.c.l.b16 %v2904
    %v4119 = vunpack.c.l.b16 %v2905
    %v4120 = vunpack.c.h.b16 %v2905
    %v4121 = vunpack.c.l.b16 %v2906
    %v4122 = vunpack.c.h.b16 %v2906
    %v4123 = vunpack.c.l.b16 %v2907
    %v4124 = vunpack.c.h.b16 %v2907
    %v4125 = vunpack.c.l.b16 %v2908
    %v4126 = vunpack.c.l.b16 %v2909
    %v4127 = vunpack.c.h.b16 %v2909
    %v4128 = vunpack.c.l.b16 %v2910
    %v4129 = vunpack.c.h.b16 %v2910
    %v4130 = vunpack.c.l.b16 %v2911
    %v4131 = vunpack.c.h.b16 %v2911
    %v4132 = vunpack.c.l.b16 %v2912
    %v4133 = vunpack.c.l.b16 %v2913
    %v4134 = vunpack.c.h.b16 %v2913
    %v4135 = vunpack.c.l.b16 %v2914
    %v4136 = vunpack.c.h.b16 %v2914
    %v4137 = vunpack.c.l.b16 %v2915
    %v4138 = vunpack.c.h.b16 %v2915
    %v4139 = vunpack.c.l.b16 %v2916
    %v4140 = vunpack.c.l.b16 %v2917
    %v4141 = vunpack.c.h.b16 %v2917
    %v4142 = vunpack.c.l.b16 %v2918
    %v4143 = vunpack.c.h.b16 %v2918
    %v4144 = vunpack.c.l.b16 %v2919
    %v4145 = vunpack.c.h.b16 %v2919
    %v4146 = vunpack.c.l.b16 %v2920
    %v4147 = vunpack.c.l.b16 %v2921
    %v4148 = vunpack.c.h.b16 %v2921
    %v4149 = vunpack.c.l.b16 %v2922
    %v4150 = vunpack.c.h.b16 %v2922
    %v4151 = vunpack.c.l.b16 %v2923
    %v4152 = vunpack.c.h.b16 %v2923
    %v4153 = vunpack.c.l.b16 %v2924
    %v4154 = vunpack.c.l.b16 %v2925
    %v4155 = vunpack.c.h.b16 %v2925
    %v4156 = vunpack.c.l.b16 %v2926
    %v4157 = vunpack.c.h.b16 %v2926
    %v4158 = vunpack.c.l.b16 %v2927
    %v4159 = vunpack.c.h.b16 %v2927
    %v4160 = vunpack.c.l.b16 %v2928
    %v4161 = vunpack.c.l.b16 %v2929
    %v4162 = vunpack.c.h.b16 %v2929
    %v4163 = vunpack.c.l.b16 %v2930
    %v4164 = vunpack.c.h.b16 %v2930
    %v4165 = vunpack.c.l.b16 %v2931
    %v4166 = vunpack.c.h.b16 %v2931
    %v4167 = vunpack.c.l.b16 %v2932
    %v4168 = vunpack.c.l.b16 %v2933
    %v4169 = vunpack.c.h.b16 %v2933
    %v4170 = vunpack.c.l.b16 %v2934
    %v4171 = vunpack.c.h.b16 %v2934
    %v4172 = vunpack.c.l.b16 %v2935
    %v4173 = vunpack.c.h.b16 %v2935
    %v4174 = vunpack.c.l.b16 %v2936
    %v4175 = vunpack.c.l.b16 %v2937
    %v4176 = vunpack.c.h.b16 %v2937
    %v4177 = vunpack.c.l.b16 %v2938
    %v4178 = vunpack.c.h.b16 %v2938
    %v4179 = vunpack.c.l.b16 %v2939
    %v4180 = vunpack.c.h.b16 %v2939
    %v4181 = vunpack.c.l.b16 %v2940
    %v4182 = vunpack.c.l.b16 %v2941
    %v4183 = vunpack.c.h.b16 %v2941
    %v4184 = vunpack.c.l.b16 %v2942
    %v4185 = vunpack.c.h.b16 %v2942
    %v4186 = vunpack.c.l.b16 %v2943
    %v4187 = vunpack.c.h.b16 %v2943
    %v4188 = vunpack.c.l.b16 %v2944
    %v4189 = vunpack.c.l.b16 %v2945
    %v4190 = vunpack.c.h.b16 %v2945
    %v4191 = vunpack.c.l.b16 %v2946
    %v4192 = vunpack.c.h.b16 %v2946
    %v4193 = vunpack.c.l.b16 %v2947
    %v4194 = vunpack.c.h.b16 %v2947
    %v4195 = vunpack.c.l.b16 %v2948
    %v4196 = vunpack.c.l.b16 %v2949
    %v4197 = vunpack.c.h.b16 %v2949
    %v4198 = vunpack.c.l.b16 %v2950
    %v4199 = vunpack.c.h.b16 %v2950
    %v4200 = vunpack.c.l.b16 %v2951
    %v4201 = vunpack.c.h.b16 %v2951
    %v4202 = vunpack.c.l.b16 %v2952
    %v4203 = vunpack.c.l.b16 %v2953
    %v4204 = vunpack.c.h.b16 %v2953
    %v4205 = vunpack.c.l.b16 %v2954
    %v4206 = vunpack.c.h.b16 %v2954
    %v4207 = vunpack.c.l.b16 %v2955
    %v4208 = vunpack.c.h.b16 %v2955
    %v4209 = vunpack.c.l.b16 %v2956
    %v4210 = vunpack.c.l.b16 %v2957
    %v4211 = vunpack.c.h.b16 %v2957
    %v4212 = vunpack.c.l.b16 %v2958
    %v4213 = vunpack.c.h.b16 %v2958
    %v4214 = vunpack.c.l.b16 %v2959
    %v4215 = vunpack.c.h.b16 %v2959
    %v4216 = vunpack.c.l.b16 %v2960
    %v4217 = vunpack.c.l.b16 %v2961
    %v4218 = vunpack.c.h.b16 %v2961
    %v4219 = vunpack.c.l.b16 %v2962
    %v4220 = vunpack.c.h.b16 %v2962
    %v4221 = vunpack.c.l.b16 %v2963
    %v4222 = vunpack.c.h.b16 %v2963
    %v4223 = vunpack.c.l.b16 %v2964
    %v4224 = vunpack.c.l.b16 %v2965
    %v4225 = vunpack.c.h.b16 %v2965
    %v4226 = vunpack.c.l.b16 %v2966
    %v4227 = vunpack.c.h.b16 %v2966
    %v4228 = vunpack.c.l.b16 %v2967
    %v4229 = vunpack.c.h.b16 %v2967
    %v4230 = vunpack.c.l.b16 %v2968
    %v4231 = vunpack.c.l.b16 %v2969
    %v4232 = vunpack.c.h.b16 %v2969
    %v4233 = vunpack.c.l.b16 %v2970
    %v4234 = vunpack.c.h.b16 %v2970
    %v4235 = vunpack.c.l.b16 %v2971
    %v4236 = vunpack.c.h.b16 %v2971
    %v4237 = vunpack.c.l.b16 %v2972
    %v4238 = vunpack.c.l.b16 %v2973
    %v4239 = vunpack.c.h.b16 %v2973
    %v4240 = vunpack.c.l.b16 %v2974
    %v4241 = vunpack.c.h.b16 %v2974
    %v4242 = vunpack.c.l.b16 %v2975
    %v4243 = vunpack.c.h.b16 %v2975
    %v4244 = vunpack.c.l.b16 %v2976
    %v4245 = vunpack.c.l.b16 %v2977
    %v4246 = vunpack.c.h.b16 %v2977
    %v4247 = vunpack.c.l.b16 %v2978
    %v4248 = vunpack.c.h.b16 %v2978
    %v4249 = vunpack.c.l.b16 %v2979
    %v4250 = vunpack.c.h.b16 %v2979
    %v4251 = vunpack.c.l.b16 %v2980
    %v4252 = vunpack.c.l.b16 %v2981
    %v4253 = vunpack.c.h.b16 %v2981
    %v4254 = vunpack.c.l.b16 %v2982
    %v4255 = vunpack.c.h.b16 %v2982
    %v4256 = vunpack.c.l.b16 %v2983
    %v4257 = vunpack.c.h.b16 %v2983
    %v4258 = vunpack.c.l.b16 %v2984
    %v4259 = vunpack.c.l.b16 %v2985
    %v4260 = vunpack.c.h.b16 %v2985
    %v4261 = vunpack.c.l.b16 %v2986
    %v4262 = vunpack.c.h.b16 %v2986
    %v4263 = vunpack.c.l.b16 %v2987
    %v4264 = vunpack.c.h.b16 %v2987
    %v4265 = vunpack.c.l.b16 %v2988
    %v4266 = vunpack.c.l.b16 %v2989
    %v4267 = vunpack.c.h.b16 %v2989
    %v4268 = vunpack.c.l.b16 %v2990
    %v4269 = vunpack.c.h.b16 %v2990
    %v4270 = vunpack.c.l.b16 %v2991
    %v4271 = vunpack.c.h.b16 %v2991
    %v4272 = vunpack.c.l.b16 %v2992
    %v4273 = vunpack.c.l.b16 %v2993
    %v4274 = vunpack.c.h.b16 %v2993
    %v4275 = vunpack.c.l.b16 %v2994
    %v4276 = vunpack.c.h.b16 %v2994
    %v4277 = vunpack.c.l.b16 %v2995
    %v4278 = vunpack.c.h.b16 %v2995
    %v4279 = vunpack.c.l.b16 %v2996
    %v4280 = vunpack.c.l.b16 %v2997
    %v4281 = vunpack.c.h.b16 %v2997
    %v4282 = vunpack.c.l.b16 %v2998
    %v4283 = vunpack.c.h.b16 %v2998
    %v4284 = vunpack.c.l.b16 %v2999
    %v4285 = vunpack.c.h.b16 %v2999
    %v4286 = vunpack.c.l.b16 %v3000
    %v4287 = vunpack.c.l.b16 %v3001
    %v4288 = vunpack.c.h.b16 %v3001
    %v4289 = vunpack.c.l.b16 %v3002
    %v4290 = vunpack.c.h.b16 %v3002
    %v4291 = vunpack.c.l.b16 %v3003
    %v4292 = vunpack.c.h.b16 %v3003
    %v4293 = vunpack.c.l.b16 %v3004
    %v4294 = vunpack.c.l.b16 %v3005
    %v4295 = vunpack.c.h.b16 %v3005
    %v4296 = vunpack.c.l.b16 %v3006
    %v4297 = vunpack.c.h.b16 %v3006
    %v4298 = vunpack.c.l.b16 %v3007
    %v4299 = vunpack.c.h.b16 %v3007
    %v4300 = vunpack.c.l.b16 %v3008
    %v4301 = vunpack.c.l.b16 %v3009
    %v4302 = vunpack.c.h.b16 %v3009
    %v4303 = vunpack.c.l.b16 %v3010
    %v4304 = vunpack.c.h.b16 %v3010
    %v4305 = vunpack.c.l.b16 %v3011
    %v4306 = vunpack.c.h.b16 %v3011
    %v4307 = vunpack.c.l.b16 %v3012
    %v4308 = vunpack.c.l.b16 %v3013
    %v4309 = vunpack.c.h.b16 %v3013
    %v4310 = vunpack.c.l.b16 %v3014
    %v4311 = vunpack.c.h.b16 %v3014
    %v4312 = vunpack.c.l.b16 %v3015
    %v4313 = vunpack.c.h.b16 %v3015
    %v4314 = vunpack.c.l.b16 %v3016
    %v4315 = vunpack.c.l.b16 %v3017
    %v4316 = vunpack.c.h.b16 %v3017
    %v4317 = vunpack.c.l.b16 %v3018
    %v4318 = vunpack.c.h.b16 %v3018
    %v4319 = vunpack.c.l.b16 %v3019
    %v4320 = vunpack.c.h.b16 %v3019
    %v4321 = vunpack.c.l.b16 %v3020
    %v4322 = vunpack.c.l.b16 %v3021
    %v4323 = vunpack.c.h.b16 %v3021
    %v4324 = vunpack.c.l.b16 %v3022
    %v4325 = vunpack.c.h.b16 %v3022
    %v4326 = vunpack.c.l.b16 %v3023
    %v4327 = vunpack.c.h.b16 %v3023
    %v4328 = vunpack.c.l.b16 %v3024
    %v4329 = vunpack.c.l.b16 %v3025
    %v4330 = vunpack.c.h.b16 %v3025
    %v4331 = vunpack.c.l.b16 %v3026
    %v4332 = vunpack.c.h.b16 %v3026
    %v4333 = vunpack.c.l.b16 %v3027
    %v4334 = vunpack.c.h.b16 %v3027
    %v4335 = vunpack.c.l.b16 %v3028
    %v4336 = vunpack.c.l.b16 %v3029
    %v4337 = vunpack.c.h.b16 %v3029
    %v4338 = vunpack.c.l.b16 %v3030
    %v4339 = vunpack.c.h.b16 %v3030
    %v4340 = vunpack.c.l.b16 %v3031
    %v4341 = vunpack.c.h.b16 %v3031
    %v4342 = vunpack.c.l.b16 %v3032
    %v4343 = vunpack.c.l.b16 %v3033
    %v4344 = vunpack.c.h.b16 %v3033
    %v4345 = vunpack.c.l.b16 %v3034
    %v4346 = vunpack.c.h.b16 %v3034
    %v4347 = vunpack.c.l.b16 %v3035
    %v4348 = vunpack.c.h.b16 %v3035
    %v4349 = vunpack.c.l.b16 %v3036
    %v4350 = vunpack.c.l.b16 %v3037
    %v4351 = vunpack.c.h.b16 %v3037
    %v4352 = vunpack.c.l.b16 %v3038
    %v4353 = vunpack.c.h.b16 %v3038
    %v4354 = vunpack.c.l.b16 %v3039
    %v4355 = vunpack.c.h.b16 %v3039
    %v4356 = vunpack.c.l.b16 %v3040
    %v4357 = vunpack.c.l.b16 %v3041
    %v4358 = vunpack.c.h.b16 %v3041
    %v4359 = vunpack.c.l.b16 %v3042
    %v4360 = vunpack.c.h.b16 %v3042
    %v4361 = vunpack.c.l.b16 %v3043
    %v4362 = vunpack.c.h.b16 %v3043
    %v4363 = vunpack.c.l.b16 %v3044
    %v4364 = vunpack.c.l.b16 %v3045
    %v4365 = vunpack.c.h.b16 %v3045
    %v4366 = vunpack.c.l.b16 %v3046
    %v4367 = vunpack.c.h.b16 %v3046
    %v4368 = vunpack.c.l.b16 %v3047
    %v4369 = vunpack.c.h.b16 %v3047
    %v4370 = vunpack.c.l.b16 %v3048
    %v4371 = vunpack.c.l.b16 %v3049
    %v4372 = vunpack.c.h.b16 %v3049
    %v4373 = vunpack.c.l.b16 %v3050
    %v4374 = vunpack.c.h.b16 %v3050
    %v4375 = vunpack.c.l.b16 %v3051
    %v4376 = vunpack.c.h.b16 %v3051
    %v4377 = vunpack.c.l.b16 %v3052
    %v4378 = vunpack.c.l.b16 %v3053
    %v4379 = vunpack.c.h.b16 %v3053
    %v4380 = vunpack.c.l.b16 %v3054
    %v4381 = vunpack.c.h.b16 %v3054
    %v4382 = vunpack.c.l.b16 %v3055
    %v4383 = vunpack.c.h.b16 %v3055
    %v4384 = vunpack.c.l.b16 %v3056
    %v4385 = vunpack.c.l.b16 %v3057
    %v4386 = vunpack.c.h.b16 %v3057
    %v4387 = vunpack.c.l.b16 %v3058
    %v4388 = vunpack.c.h.b16 %v3058
    %v4389 = vunpack.c.l.b16 %v3059
    %v4390 = vunpack.c.h.b16 %v3059
    %v4391 = vunpack.c.l.b16 %v3060
    %v4392 = vunpack.c.l.b16 %v3061
    %v4393 = vunpack.c.h.b16 %v3061
    %v4394 = vunpack.c.l.b16 %v3062
    %v4395 = vunpack.c.h.b16 %v3062
    %v4396 = vunpack.c.l.b16 %v3063
    %v4397 = vunpack.c.h.b16 %v3063
    %v4398 = vunpack.c.l.b16 %v3064
    %v4399 = vunpack.c.l.b16 %v3065
    %v4400 = vunpack.c.h.b16 %v3065
    %v4401 = vunpack.c.l.b16 %v3066
    %v4402 = vunpack.c.h.b16 %v3066
    %v4403 = vunpack.c.l.b16 %v3067
    %v4404 = vunpack.c.h.b16 %v3067
    %v4405 = vunpack.c.l.b16 %v3068
    %v4406 = vunpack.c.l.b16 %v3069
    %v4407 = vunpack.c.h.b16 %v3069
    %v4408 = vunpack.c.l.b16 %v3070
    %v4409 = vunpack.c.h.b16 %v3070
    %v4410 = vunpack.c.l.b16 %v3071
    %v4411 = vunpack.c.h.b16 %v3071
    %v4412 = vunpack.c.l.b16 %v3072
    %v4413 = vunpack.c.l.b16 %v3073
    %v4414 = vunpack.c.h.b16 %v3073
    %v4415 = vunpack.c.l.b16 %v3074
    %v4416 = vunpack.c.h.b16 %v3074
    %v4417 = vunpack.c.l.b16 %v3075
    %v4418 = vunpack.c.h.b16 %v3075
    %v4419 = vunpack.c.l.b16 %v3076
    %v4420 = vunpack.c.l.b16 %v3077
    %v4421 = vunpack.c.h.b16 %v3077
    %v4422 = vunpack.c.l.b16 %v3078
    %v4423 = vunpack.c.h.b16 %v3078
    %v4424 = vunpack.c.l.b16 %v3079
    %v4425 = vunpack.c.h.b16 %v3079
    %v4426 = vunpack.c.l.b16 %v3080
    %v4427 = vunpack.c.l.b16 %v3081
    %v4428 = vunpack.c.h.b16 %v3081
    %v4429 = vunpack.c.l.b16 %v3082
    %v4430 = vunpack.c.h.b16 %v3082
    %v4431 = vunpack.c.l.b16 %v3083
    %v4432 = vunpack.c.h.b16 %v3083
    %v4433 = vunpack.c.l.b16 %v3084
    %v4434 = vunpack.c.l.b16 %v3085
    %v4435 = vunpack.c.h.b16 %v3085
    %v4436 = vunpack.c.l.b16 %v3086
    %v4437 = vunpack.c.h.b16 %v3086
    %v4438 = vunpack.c.l.b16 %v3087
    %v4439 = vunpack.c.h.b16 %v3087
    %v4440 = vunpack.c.l.b16 %v3088
    %v4441 = vunpack.c.l.b16 %v3089
    %v4442 = vunpack.c.h.b16 %v3089
    %v4443 = vunpack.c.l.b16 %v3090
    %v4444 = vunpack.c.h.b16 %v3090
    %v4445 = vunpack.c.l.b16 %v3091
    %v4446 = vunpack.c.h.b16 %v3091
    %v4447 = vunpack.c.l.b16 %v3092
    %v4448 = vunpack.c.l.b16 %v3093
    %v4449 = vunpack.c.h.b16 %v3093
    %v4450 = vunpack.c.l.b16 %v3094
    %v4451 = vunpack.c.h.b16 %v3094
    %v4452 = vunpack.c.l.b16 %v3095
    %v4453 = vunpack.c.h.b16 %v3095
    %v4454 = vunpack.c.l.b16 %v3096
    %v4455 = vunpack.c.l.b16 %v3097
    %v4456 = vunpack.c.h.b16 %v3097
    %v4457 = vunpack.c.l.b16 %v3098
    %v4458 = vunpack.c.h.b16 %v3098
    %v4459 = vunpack.c.l.b16 %v3099
    %v4460 = vunpack.c.h.b16 %v3099
    %v4461 = vunpack.c.l.b16 %v3100
    %v4462 = vunpack.c.l.b16 %v3101
    %v4463 = vunpack.c.h.b16 %v3101
    %v4464 = vunpack.c.l.b16 %v3102
    %v4465 = vunpack.c.h.b16 %v3102
    %v4466 = vunpack.c.l.b16 %v3103
    %v4467 = vunpack.c.h.b16 %v3103
    %v4468 = vunpack.c.l.b16 %v3104
    %v4469 = vunpack.c.l.b16 %v3105
    %v4470 = vunpack.c.h.b16 %v3105
    %v4471 = vunpack.c.l.b16 %v3106
    %v4472 = vunpack.c.h.b16 %v3106
    %v4473 = vunpack.c.l.b16 %v3107
    %v4474 = vunpack.c.h.b16 %v3107
    %v4475 = vunpack.c.l.b16 %v3108
    %v4476 = vunpack.c.l.b16 %v3109
    %v4477 = vunpack.c.h.b16 %v3109
    %v4478 = vunpack.c.l.b16 %v3110
    %v4479 = vunpack.c.h.b16 %v3110
    %v4480 = vunpack.c.l.b16 %v3111
    %v4481 = vunpack.c.h.b16 %v3111
    %v4482 = vunpack.c.l.b16 %v3112
    %v4483 = vunpack.c.l.b16 %v3113
    %v4484 = vunpack.c.h.b16 %v3113
    %v4485 = vunpack.c.l.b16 %v3114
    %v4486 = vunpack.c.h.b16 %v3114
    %v4487 = vunpack.c.l.b16 %v3115
    %v4488 = vunpack.c.h.b16 %v3115
    %v4489 = vunpack.c.l.b16 %v3116
    %v4490 = vunpack.c.l.b16 %v3117
    %v4491 = vunpack.c.h.b16 %v3117
    %v4492 = vunpack.c.l.b16 %v3118
    %v4493 = vunpack.c.h.b16 %v3118
    %v4494 = vunpack.c.l.b16 %v3119
    %v4495 = vunpack.c.h.b16 %v3119
    %v4496 = vunpack.c.l.b16 %v3120
    %v4497 = vunpack.c.l.b16 %v3121
    %v4498 = vunpack.c.h.b16 %v3121
    %v4499 = vunpack.c.l.b16 %v3122
    %v4500 = vunpack.c.h.b16 %v3122
    %v4501 = vunpack.c.l.b16 %v3123
    %v4502 = vunpack.c.h.b16 %v3123
    %v4503 = vunpack.c.l.b16 %v3124
    %v4504 = vunpack.c.l.b16 %v3125
    %v4505 = vunpack.c.h.b16 %v3125
    %v4506 = vunpack.c.l.b16 %v3126
    %v4507 = vunpack.c.h.b16 %v3126
    %v4508 = vunpack.c.l.b16 %v3127
    %v4509 = vunpack.c.h.b16 %v3127
    %v4510 = vunpack.c.l.b16 %v3128
    %v4511 = vunpack.c.l.b16 %v3129
    %v4512 = vunpack.c.h.b16 %v3129
    %v4513 = vunpack.c.l.b16 %v3130
    %v4514 = vunpack.c.h.b16 %v3130
    %v4515 = vunpack.c.l.b16 %v3131
    %v4516 = vunpack.c.h.b16 %v3131
    %v4517 = vunpack.c.l.b16 %v3132
    %v4518 = vunpack.c.l.b16 %v3133
    %v4519 = vunpack.c.h.b16 %v3133
    %v4520 = vunpack.c.l.b16 %v3134
    %v4521 = vunpack.c.h.b16 %v3134
    %v4522 = vunpack.c.l.b16 %v3135
    %v4523 = vunpack.c.h.b16 %v3135
    %v4524 = vunpack.c.l.b16 %v3136
    %v4525 = vunpack.c.l.b16 %v3137
    %v4526 = vunpack.c.h.b16 %v3137
    %v4527 = vunpack.c.l.b16 %v3138
    %v4528 = vunpack.c.h.b16 %v3138
    %v4529 = vunpack.c.l.b16 %v3139
    %v4530 = vunpack.c.h.b16 %v3139
    %v4531 = vunpack.c.l.b16 %v3140
    %v4532 = vunpack.c.l.b16 %v3141
    %v4533 = vunpack.c.h.b16 %v3141
    %v4534 = vunpack.c.l.b16 %v3142
    %v4535 = vunpack.c.h.b16 %v3142
    %v4536 = vunpack.c.l.b16 %v3143
    %v4537 = vunpack.c.h.b16 %v3143
    %v4538 = vunpack.c.l.b16 %v3144
    %v4539 = vunpack.c.l.b16 %v3145
    %v4540 = vunpack.c.h.b16 %v3145
    %v4541 = vunpack.c.l.b16 %v3146
    %v4542 = vunpack.c.h.b16 %v3146
    %v4543 = vunpack.c.l.b16 %v3147
    %v4544 = vunpack.c.h.b16 %v3147
    %v4545 = vunpack.c.l.b16 %v3148
    %v4546 = vunpack.c.l.b16 %v3149
    %v4547 = vunpack.c.h.b16 %v3149
    %v4548 = vunpack.c.l.b16 %v3150
    %v4549 = vunpack.c.h.b16 %v3150
    %v4550 = vunpack.c.l.b16 %v3151
    %v4551 = vunpack.c.h.b16 %v3151
    %v4552 = vunpack.c.l.b16 %v3152
    %v4553 = vunpack.c.l.b16 %v3153
    %v4554 = vunpack.c.h.b16 %v3153
    %v4555 = vunpack.c.l.b16 %v3154
    %v4556 = vunpack.c.h.b16 %v3154
    %v4557 = vunpack.c.l.b16 %v3155
    %v4558 = vunpack.c.h.b16 %v3155
    %v4559 = vunpack.c.l.b16 %v3156
    %v4560 = vunpack.c.l.b16 %v3157
    %v4561 = vunpack.c.h.b16 %v3157
    %v4562 = vunpack.c.l.b16 %v3158
    %v4563 = vunpack.c.h.b16 %v3158
    %v4564 = vunpack.c.l.b16 %v3159
    %v4565 = vunpack.c.h.b16 %v3159
    %v4566 = vunpack.c.l.b16 %v3160
    %v4567 = vunpack.c.l.b16 %v3161
    %v4568 = vunpack.c.h.b16 %v3161
    %v4569 = vunpack.c.l.b16 %v3162
    %v4570 = vunpack.c.h.b16 %v3162
    %v4571 = vunpack.c.l.b16 %v3163
    %v4572 = vunpack.c.h.b16 %v3163
    %v4573 = vunpack.c.l.b16 %v3164
    %v4574 = vunpack.c.l.b16 %v3165
    %v4575 = vunpack.c.h.b16 %v3165
    %v4576 = vunpack.c.l.b16 %v3166
    %v4577 = vunpack.c.h.b16 %v3166
    %v4578 = vunpack.c.l.b16 %v3167
    %v4579 = vunpack.c.h.b16 %v3167
    %v4580 = vunpack.c.l.b16 %v3168
    %v4581 = vunpack.c.l.b16 %v3169
    %v4582 = vunpack.c.h.b16 %v3169
    %v4583 = vunpack.c.l.b16 %v3170
    %v4584 = vunpack.c.h.b16 %v3170
    %v4585 = vunpack.c.l.b16 %v3171
    %v4586 = vunpack.c.h.b16 %v3171
    %v4587 = vunpack.c.l.b16 %v3172
    %v4588 = vunpack.c.l.b16 %v3173
    %v4589 = vunpack.c.h.b16 %v3173
    %v4590 = vunpack.c.l.b16 %v3174
    %v4591 = vunpack.c.h.b16 %v3174
    %v4592 = vunpack.c.l.b16 %v3175
    %v4593 = vunpack.c.h.b16 %v3175
    %v4594 = vunpack.c.l.b16 %v3176
    %v4595 = vunpack.c.l.b16 %v3177
    %v4596 = vunpack.c.h.b16 %v3177
    %v4597 = vunpack.c.l.b16 %v3178
    %v4598 = vunpack.c.h.b16 %v3178
    %v4599 = vunpack.c.l.b16 %v3179
    %v4600 = vunpack.c.h.b16 %v3179
    %v4601 = vunpack.c.l.b16 %v3180
    %v4602 = vunpack.c.l.b16 %v3181
    %v4603 = vunpack.c.h.b16 %v3181
    %v4604 = vunpack.c.l.b16 %v3182
    %v4605 = vunpack.c.h.b16 %v3182
    %v4606 = vunpack.c.l.b16 %v3183
    %v4607 = vunpack.c.h.b16 %v3183
    %v4608 = vunpack.c.l.b16 %v3184
    %v4609 = vpack.c.b16 %v3720, %v3713
    %v4610 = vpack.c.b16 %v3721, %v3714
    %v4611 = vpack.c.b16 %v3722, %v3715
    %v4612 = vpack.c.b16 %v3723, %v3716
    %v4613 = vpack.c.b16 %v3724, %v3717
    %v4614 = vpack.c.b16 %v3725, %v3718
    %v4615 = vpack.c.b16 %v3726, %v3719
    %v4616 = vpack.c.b16 %v3734, %v3727
    %v4617 = vpack.c.b16 %v3735, %v3728
    %v4618 = vpack.c.b16 %v3736, %v3729
    %v4619 = vpack.c.b16 %v3737, %v3730
    %v4620 = vpack.c.b16 %v3738, %v3731
    %v4621 = vpack.c.b16 %v3739, %v3732
    %v4622 = vpack.c.b16 %v3740, %v3733
    %v4623 = vpack.c.b16 %v3748, %v3741
    %v4624 = vpack.c.b16 %v3749, %v3742
    %v4625 = vpack.c.b16 %v3750, %v3743
    %v4626 = vpack.c.b16 %v3751, %v3744
    %v4627 = vpack.c.b16 %v3752, %v3745
    %v4628 = vpack.c.b16 %v3753, %v3746
    %v4629 = vpack.c.b16 %v3754, %v3747
    %v4630 = vpack.c.b16 %v3762, %v3755
    %v4631 = vpack.c.b16 %v3763, %v3756
    %v4632 = vpack.c.b16 %v3764, %v3757
    %v4633 = vpack.c.b16 %v3765, %v3758
    %v4634 = vpack.c.b16 %v3766, %v3759
    %v4635 = vpack.c.b16 %v3767, %v3760
    %v4636 = vpack.c.b16 %v3768, %v3761
    %v4637 = vpack.c.b16 %v3776, %v3769
    %v4638 = vpack.c.b16 %v3777, %v3770
    %v4639 = vpack.c.b16 %v3778, %v3771
    %v4640 = vpack.c.b16 %v3779, %v3772
    %v4641 = vpack.c.b16 %v3780, %v3773
    %v4642 = vpack.c.b16 %v3781, %v3774
    %v4643 = vpack.c.b16 %v3782, %v3775
    %v4644 = vpack.c.b16 %v3790, %v3783
    %v4645 = vpack.c.b16 %v3791, %v3784
    %v4646 = vpack.c.b16 %v3792, %v3785
    %v4647 = vpack.c.b16 %v3793, %v3786
    %v4648 = vpack.c.b16 %v3794, %v3787
    %v4649 = vpack.c.b16 %v3795, %v3788
    %v4650 = vpack.c.b16 %v3796, %v3789
    %v4651 = vpack.c.b16 %v3804, %v3797
    %v4652 = vpack.c.b16 %v3805, %v3798
    %v4653 = vpack.c.b16 %v3806, %v3799
    %v4654 = vpack.c.b16 %v3807, %v3800
    %v4655 = vpack.c.b16 %v3808, %v3801
    %v4656 = vpack.c.b16 %v3809, %v3802
    %v4657 = vpack.c.b16 %v3810, %v3803
    %v4658 = vpack.c.b16 %v3818, %v3811
    %v4659 = vpack.c.b16 %v3819, %v3812
    %v4660 = vpack.c.b16 %v3820, %v3813
    %v4661 = vpack.c.b16 %v3821, %v3814
    %v4662 = vpack.c.b16 %v3822, %v3815
    %v4663 = vpack.c.b16 %v3823, %v3816
    %v4664 = vpack.c.b16 %v3824, %v3817
    %v4665 = vpack.c.b16 %v3832, %v3825
    %v4666 = vpack.c.b16 %v3833, %v3826
    %v4667 = vpack.c.b16 %v3834, %v3827
    %v4668 = vpack.c.b16 %v3835, %v3828
    %v4669 = vpack.c.b16 %v3836, %v3829
    %v4670 = vpack.c.b16 %v3837, %v3830
    %v4671 = vpack.c.b16 %v3838, %v3831
    %v4672 = vpack.c.b16 %v3846, %v3839
    %v4673 = vpack.c.b16 %v3847, %v3840
    %v4674 = vpack.c.b16 %v3848, %v3841
    %v4675 = vpack.c.b16 %v3849, %v3842
    %v4676 = vpack.c.b16 %v3850, %v3843
    %v4677 = vpack.c.b16 %v3851, %v3844
    %v4678 = vpack.c.b16 %v3852, %v3845
    %v4679 = vpack.c.b16 %v3860, %v3853
    %v4680 = vpack.c.b16 %v3861, %v3854
    %v4681 = vpack.c.b16 %v3862, %v3855
    %v4682 = vpack.c.b16 %v3863, %v3856
    %v4683 = vpack.c.b16 %v3864, %v3857
    %v4684 = vpack.c.b16 %v3865, %v3858
    %v4685 = vpack.c.b16 %v3866, %v3859
    %v4686 = vpack.c.b16 %v3874, %v3867
    %v4687 = vpack.c.b16 %v3875, %v3868
    %v4688 = vpack.c.b16 %v3876, %v3869
    %v4689 = vpack.c.b16 %v3877, %v3870
    %v4690 = vpack.c.b16 %v3878, %v3871
    %v4691 = vpack.c.b16 %v3879, %v3872
    %v4692 = vpack.c.b16 %v3880, %v3873
    %v4693 = vpack.c.b16 %v3888, %v3881
    %v4694 = vpack.c.b16 %v3889, %v3882
    %v4695 = vpack.c.b16 %v3890, %v3883
    %v4696 = vpack.c.b16 %v3891, %v3884
    %v4697 = vpack.c.b16 %v3892, %v3885
    %v4698 = vpack.c.b16 %v3893, %v3886
    %v4699 = vpack.c.b16 %v3894, %v3887
    %v4700 = vpack.c.b16 %v3902, %v3895
    %v4701 = vpack.c.b16 %v3903, %v3896
    %v4702 = vpack.c.b16 %v3904, %v3897
    %v4703 = vpack.c.b16 %v3905, %v3898
    %v4704 = vpack.c.b16 %v3906, %v3899
    %v4705 = vpack.c.b16 %v3907, %v3900
    %v4706 = vpack.c.b16 %v3908, %v3901
    %v4707 = vpack.c.b16 %v3916, %v3909
    %v4708 = vpack.c.b16 %v3917, %v3910
    %v4709 = vpack.c.b16 %v3918, %v3911
    %v4710 = vpack.c.b16 %v3919, %v3912
    %v4711 = vpack.c.b16 %v3920, %v3913
    %v4712 = vpack.c.b16 %v3921, %v3914
    %v4713 = vpack.c.b16 %v3922, %v3915
    %v4714 = vpack.c.b16 %v3930, %v3923
    %v4715 = vpack.c.b16 %v3931, %v3924
    %v4716 = vpack.c.b16 %v3932, %v3925
    %v4717 = vpack.c.b16 %v3933, %v3926
    %v4718 = vpack.c.b16 %v3934, %v3927
    %v4719 = vpack.c.b16 %v3935, %v3928
    %v4720 = vpack.c.b16 %v3936, %v3929
    %v4721 = vpack.c.b16 %v3944, %v3937
    %v4722 = vpack.c.b16 %v3945, %v3938
    %v4723 = vpack.c.b16 %v3946, %v3939
    %v4724 = vpack.c.b16 %v3947, %v3940
    %v4725 = vpack.c.b16 %v3948, %v3941
    %v4726 = vpack.c.b16 %v3949, %v3942
    %v4727 = vpack.c.b16 %v3950, %v3943
    %v4728 = vpack.c.b16 %v3958, %v3951
    %v4729 = vpack.c.b16 %v3959, %v3952
    %v4730 = vpack.c.b16 %v3960, %v3953
    %v4731 = vpack.c.b16 %v3961, %v3954
    %v4732 = vpack.c.b16 %v3962, %v3955
    %v4733 = vpack.c.b16 %v3963, %v3956
    %v4734 = vpack.c.b16 %v3964, %v3957
    %v4735 = vpack.c.b16 %v3972, %v3965
    %v4736 = vpack.c.b16 %v3973, %v3966
    %v4737 = vpack.c.b16 %v3974, %v3967
    %v4738 = vpack.c.b16 %v3975, %v3968
    %v4739 = vpack.c.b16 %v3976, %v3969
    %v4740 = vpack.c.b16 %v3977, %v3970
    %v4741 = vpack.c.b16 %v3978, %v3971
    %v4742 = vpack.c.b16 %v3986, %v3979
    %v4743 = vpack.c.b16 %v3987, %v3980
    %v4744 = vpack.c.b16 %v3988, %v3981
    %v4745 = vpack.c.b16 %v3989, %v3982
    %v4746 = vpack.c.b16 %v3990, %v3983
    %v4747 = vpack.c.b16 %v3991, %v3984
    %v4748 = vpack.c.b16 %v3992, %v3985
    %v4749 = vpack.c.b16 %v4000, %v3993
    %v4750 = vpack.c.b16 %v4001, %v3994
    %v4751 = vpack.c.b16 %v4002, %v3995
    %v4752 = vpack.c.b16 %v4003, %v3996
    %v4753 = vpack.c.b16 %v4004, %v3997
    %v4754 = vpack.c.b16 %v4005, %v3998
    %v4755 = vpack.c.b16 %v4006, %v3999
    %v4756 = vpack.c.b16 %v4014, %v4007
    %v4757 = vpack.c.b16 %v4015, %v4008
    %v4758 = vpack.c.b16 %v4016, %v4009
    %v4759 = vpack.c.b16 %v4017, %v4010
    %v4760 = vpack.c.b16 %v4018, %v4011
    %v4761 = vpack.c.b16 %v4019, %v4012
    %v4762 = vpack.c.b16 %v4020, %v4013
    %v4763 = vpack.c.b16 %v4028, %v4021
    %v4764 = vpack.c.b16 %v4029, %v4022
    %v4765 = vpack.c.b16 %v4030, %v4023
    %v4766 = vpack.c.b16 %v4031, %v4024
    %v4767 = vpack.c.b16 %v4032, %v4025
    %v4768 = vpack.c.b16 %v4033, %v4026
    %v4769 = vpack.c.b16 %v4034, %v4027
    %v4770 = vpack.c.b16 %v4042, %v4035
    %v4771 = vpack.c.b16 %v4043, %v4036
    %v4772 = vpack.c.b16 %v4044, %v4037
    %v4773 = vpack.c.b16 %v4045, %v4038
    %v4774 = vpack.c.b16 %v4046, %v4039
    %v4775 = vpack.c.b16 %v4047, %v4040
    %v4776 = vpack.c.b16 %v4048, %v4041
    %v4777 = vpack.c.b16 %v4056, %v4049
    %v4778 = vpack.c.b16 %v4057, %v4050
    %v4779 = vpack.c.b16 %v4058, %v4051
    %v4780 = vpack.c.b16 %v4059, %v4052
    %v4781 = vpack.c.b16 %v4060, %v4053
    %v4782 = vpack.c.b16 %v4061, %v4054
    %v4783 = vpack.c.b16 %v4062, %v4055
    %v4784 = vpack.c.b16 %v4070, %v4063
    %v4785 = vpack.c.b16 %v4071, %v4064
    %v4786 = vpack.c.b16 %v4072, %v4065
    %v4787 = vpack.c.b16 %v4073, %v4066
    %v4788 = vpack.c.b16 %v4074, %v4067
    %v4789 = vpack.c.b16 %v4075, %v4068
    %v4790 = vpack.c.b16 %v4076, %v4069
    %v4791 = vpack.c.b16 %v4084, %v4077
    %v4792 = vpack.c.b16 %v4085, %v4078
    %v4793 = vpack.c.b16 %v4086, %v4079
    %v4794 = vpack.c.b16 %v4087, %v4080
    %v4795 = vpack.c.b16 %v4088, %v4081
    %v4796 = vpack.c.b16 %v4089, %v4082
    %v4797 = vpack.c.b16 %v4090, %v4083
    %v4798 = vpack.c.b16 %v4098, %v4091
    %v4799 = vpack.c.b16 %v4099, %v4092
    %v4800 = vpack.c.b16 %v4100, %v4093
    %v4801 = vpack.c.b16 %v4101, %v4094
    %v4802 = vpack.c.b16 %v4102, %v4095
    %v4803 = vpack.c.b16 %v4103, %v4096
    %v4804 = vpack.c.b16 %v4104, %v4097
    %v4805 = vpack.c.b16 %v4112, %v4105
    %v4806 = vpack.c.b16 %v4113, %v4106
    %v4807 = vpack.c.b16 %v4114, %v4107
    %v4808 = vpack.c.b16 %v4115, %v4108
    %v4809 = vpack.c.b16 %v4116, %v4109
    %v4810 = vpack.c.b16 %v4117, %v4110
    %v4811 = vpack.c.b16 %v4118, %v4111
    %v4812 = vpack.c.b16 %v4126, %v4119
    %v4813 = vpack.c.b16 %v4127, %v4120
    %v4814 = vpack.c.b16 %v4128, %v4121
    %v4815 = vpack.c.b16 %v4129, %v4122
    %v4816 = vpack.c.b16 %v4130, %v4123
    %v4817 = vpack.c.b16 %v4131, %v4124
    %v4818 = vpack.c.b16 %v4132, %v4125
    %v4819 = vpack.c.b16 %v4140, %v4133
    %v4820 = vpack.c.b16 %v4141, %v4134
    %v4821 = vpack.c.b16 %v4142, %v4135
    %v4822 = vpack.c.b16 %v4143, %v4136
    %v4823 = vpack.c.b16 %v4144, %v4137
    %v4824 = vpack.c.b16 %v4145, %v4138
    %v4825 = vpack.c.b16 %v4146, %v4139
    %v4826 = vpack.c.b16 %v4154, %v4147
    %v4827 = vpack.c.b16 %v4155, %v4148
    %v4828 = vpack.c.b16 %v4156, %v4149
    %v4829 = vpack.c.b16 %v4157, %v4150
    %v4830 = vpack.c.b16 %v4158, %v4151
    %v4831 = vpack.c.b16 %v4159, %v4152
    %v4832 = vpack.c.b16 %v4160, %v4153
    %v4833 = vpack.c.b16 %v4168, %v4161
    %v4834 = vpack.c.b16 %v4169, %v4162
    %v4835 = vpack.c.b16 %v4170, %v4163
    %v4836 = vpack.c.b16 %v4171, %v4164
    %v4837 = vpack.c.b16 %v4172, %v4165
    %v4838 = vpack.c.b16 %v4173, %v4166
    %v4839 = vpack.c.b16 %v4174, %v4167
    %v4840 = vpack.c.b16 %v4182, %v4175
    %v4841 = vpack.c.b16 %v4183, %v4176
    %v4842 = vpack.c.b16 %v4184, %v4177
    %v4843 = vpack.c.b16 %v4185, %v4178
    %v4844 = vpack.c.b16 %v4186, %v4179
    %v4845 = vpack.c.b16 %v4187, %v4180
    %v4846 = vpack.c.b16 %v4188, %v4181
    %v4847 = vpack.c.b16 %v4196, %v4189
    %v4848 = vpack.c.b16 %v4197, %v4190
    %v4849 = vpack.c.b16 %v4198, %v4191
    %v4850 = vpack.c.b16 %v4199, %v4192
    %v4851 = vpack.c.b16 %v4200, %v4193
    %v4852 = vpack.c.b16 %v4201, %v4194
    %v4853 = vpack.c.b16 %v4202, %v4195
    %v4854 = vpack.c.b16 %v4210, %v4203
    %v4855 = vpack.c.b16 %v4211, %v4204
    %v4856 = vpack.c.b16 %v4212, %v4205
    %v4857 = vpack.c.b16 %v4213, %v4206
    %v4858 = vpack.c.b16 %v4214, %v4207
    %v4859 = vpack.c.b16 %v4215, %v4208
    %v4860 = vpack.c.b16 %v4216, %v4209
    %v4861 = vpack.c.b16 %v4224, %v4217
    %v4862 = vpack.c.b16 %v4225, %v4218
    %v4863 = vpack.c.b16 %v4226, %v4219
    %v4864 = vpack.c.b16 %v4227, %v4220
    %v4865 = vpack.c.b16 %v4228, %v4221
    %v4866 = vpack.c.b16 %v4229, %v4222
    %v4867 = vpack.c.b16 %v4230, %v4223
    %v4868 = vpack.c.b16 %v4238, %v4231
    %v4869 = vpack.c.b16 %v4239, %v4232
    %v4870 = vpack.c.b16 %v4240, %v4233
    %v4871 = vpack.c.b16 %v4241, %v4234
    %v4872 = vpack.c.b16 %v4242, %v4235
    %v4873 = vpack.c.b16 %v4243, %v4236
    %v4874 = vpack.c.b16 %v4244, %v4237
    %v4875 = vpack.c.b16 %v4252, %v4245
    %v4876 = vpack.c.b16 %v4253, %v4246
    %v4877 = vpack.c.b16 %v4254, %v4247
    %v4878 = vpack.c.b16 %v4255, %v4248
    %v4879 = vpack.c.b16 %v4256, %v4249
    %v4880 = vpack.c.b16 %v4257, %v4250
    %v4881 = vpack.c.b16 %v4258, %v4251
    %v4882 = vpack.c.b16 %v4266, %v4259
    %v4883 = vpack.c.b16 %v4267, %v4260
    %v4884 = vpack.c.b16 %v4268, %v4261
    %v4885 = vpack.c.b16 %v4269, %v4262
    %v4886 = vpack.c.b16 %v4270, %v4263
    %v4887 = vpack.c.b16 %v4271, %v4264
    %v4888 = vpack.c.b16 %v4272, %v4265
    %v4889 = vpack.c.b16 %v4280, %v4273
    %v4890 = vpack.c.b16 %v4281, %v4274
    %v4891 = vpack.c.b16 %v4282, %v4275
    %v4892 = vpack.c.b16 %v4283, %v4276
    %v4893 = vpack.c.b16 %v4284, %v4277
    %v4894 = vpack.c.b16 %v4285, %v4278
    %v4895 = vpack.c.b16 %v4286, %v4279
    %v4896 = vpack.c.b16 %v4294, %v4287
    %v4897 = vpack.c.b16 %v4295, %v4288
    %v4898 = vpack.c.b16 %v4296, %v4289
    %v4899 = vpack.c.b16 %v4297, %v4290
    %v4900 = vpack.c.b16 %v4298, %v4291
    %v4901 = vpack.c.b16 %v4299, %v4292
    %v4902 = vpack.c.b16 %v4300, %v4293
    %v4903 = vpack.c.b16 %v4308, %v4301
    %v4904 = vpack.c.b16 %v4309, %v4302
    %v4905 = vpack.c.b16 %v4310, %v4303
    %v4906 = vpack.c.b16 %v4311, %v4304
    %v4907 = vpack.c.b16 %v4312, %v4305
    %v4908 = vpack.c.b16 %v4313, %v4306
    %v4909 = vpack.c.b16 %v4314, %v4307
    %v4910 = vpack.c.b16 %v4322, %v4315
    %v4911 = vpack.c.b16 %v4323, %v4316
    %v4912 = vpack.c.b16 %v4324, %v4317
    %v4913 = vpack.c.b16 %v4325, %v4318
    %v4914 = vpack.c.b16 %v4326, %v4319
    %v4915 = vpack.c.b16 %v4327, %v4320
    %v4916 = vpack.c.b16 %v4328, %v4321
    %v4917 = vpack.c.b16 %v4336, %v4329
    %v4918 = vpack.c.b16 %v4337, %v4330
    %v4919 = vpack.c.b16 %v4338, %v4331
    %v4920 = vpack.c.b16 %v4339, %v4332
    %v4921 = vpack.c.b16 %v4340, %v4333
    %v4922 = vpack.c.b16 %v4341, %v4334
    %v4923 = vpack.c.b16 %v4342, %v4335
    %v4924 = vpack.c.b16 %v4350, %v4343
    %v4925 = vpack.c.b16 %v4351, %v4344
    %v4926 = vpack.c.b16 %v4352, %v4345
    %v4927 = vpack.c.b16 %v4353, %v4346
    %v4928 = vpack.c.b16 %v4354, %v4347
    %v4929 = vpack.c.b16 %v4355, %v4348
    %v4930 = vpack.c.b16 %v4356, %v4349
    %v4931 = vpack.c.b16 %v4364, %v4357
    %v4932 = vpack.c.b16 %v4365, %v4358
    %v4933 = vpack.c.b16 %v4366, %v4359
    %v4934 = vpack.c.b16 %v4367, %v4360
    %v4935 = vpack.c.b16 %v4368, %v4361
    %v4936 = vpack.c.b16 %v4369, %v4362
    %v4937 = vpack.c.b16 %v4370, %v4363
    %v4938 = vpack.c.b16 %v4378, %v4371
    %v4939 = vpack.c.b16 %v4379, %v4372
    %v4940 = vpack.c.b16 %v4380, %v4373
    %v4941 = vpack.c.b16 %v4381, %v4374
    %v4942 = vpack.c.b16 %v4382, %v4375
    %v4943 = vpack.c.b16 %v4383, %v4376
    %v4944 = vpack.c.b16 %v4384, %v4377
    %v4945 = vpack.c.b16 %v4392, %v4385
    %v4946 = vpack.c.b16 %v4393, %v4386
    %v4947 = vpack.c.b16 %v4394, %v4387
    %v4948 = vpack.c.b16 %v4395, %v4388
    %v4949 = vpack.c.b16 %v4396, %v4389
    %v4950 = vpack.c.b16 %v4397, %v4390
    %v4951 = vpack.c.b16 %v4398, %v4391
    %v4952 = vpack.c.b16 %v4406, %v4399
    %v4953 = vpack.c.b16 %v4407, %v4400
    %v4954 = vpack.c.b16 %v4408, %v4401
    %v4955 = vpack.c.b16 %v4409, %v4402
    %v4956 = vpack.c.b16 %v4410, %v4403
    %v4957 = vpack.c.b16 %v4411, %v4404
    %v4958 = vpack.c.b16 %v4412, %v4405
    %v4959 = vpack.c.b16 %v4420, %v4413
    %v4960 = vpack.c.b16 %v4421, %v4414
    %v4961 = vpack.c.b16 %v4422, %v4415
    %v4962 = vpack.c.b16 %v4423, %v4416
    %v4963 = vpack.c.b16 %v4424, %v4417
    %v4964 = vpack.c.b16 %v4425, %v4418
    %v4965 = vpack.c.b16 %v4426, %v4419
    %v4966 = vpack.c.b16 %v4434, %v4427
    %v4967 = vpack.c.b16 %v4435, %v4428
    %v4968 = vpack.c.b16 %v4436, %v4429
    %v4969 = vpack.c.b16 %v4437, %v4430
    %v4970 = vpack.c.b16 %v4438, %v4431
    %v4971 = vpack.c.b16 %v4439, %v4432
    %v4972 = vpack.c.b16 %v4440, %v4433
    %v4973 = vpack.c.b16 %v4448, %v4441
    %v4974 = vpack.c.b16 %v4449, %v4442
    %v4975 = vpack.c.b16 %v4450, %v4443
    %v4976 = vpack.c.b16 %v4451, %v4444
    %v4977 = vpack.c.b16 %v4452, %v4445
    %v4978 = vpack.c.b16 %v4453, %v4446
    %v4979 = vpack.c.b16 %v4454, %v4447
    %v4980 = vpack.c.b16 %v4462, %v4455
    %v4981 = vpack.c.b16 %v4463, %v4456
    %v4982 = vpack.c.b16 %v4464, %v4457
    %v4983 = vpack.c.b16 %v4465, %v4458
    %v4984 = vpack.c.b16 %v4466, %v4459
    %v4985 = vpack.c.b16 %v4467, %v4460
    %v4986 = vpack.c.b16 %v4468, %v4461
    %v4987 = vpack.c.b16 %v4476, %v4469
    %v4988 = vpack.c.b16 %v4477, %v4470
    %v4989 = vpack.c.b16 %v4478, %v4471
    %v4990 = vpack.c.b16 %v4479, %v4472
    %v4991 = vpack.c.b16 %v4480, %v4473
    %v4992 = vpack.c.b16 %v4481, %v4474
    %v4993 = vpack.c.b16 %v4482, %v4475
    %v4994 = vpack.c.b16 %v4490, %v4483
    %v4995 = vpack.c.b16 %v4491, %v4484
    %v4996 = vpack.c.b16 %v4492, %v4485
    %v4997 = vpack.c.b16 %v4493, %v4486
    %v4998 = vpack.c.b16 %v4494, %v4487
    %v4999 = vpack.c.b16 %v4495, %v4488
    %v5000 = vpack.c.b16 %v4496, %v4489
    %v5001 = vpack.c.b16 %v4504, %v4497
    %v5002 = vpack.c.b16 %v4505, %v4498
    %v5003 = vpack.c.b16 %v4506, %v4499
    %v5004 = vpack.c.b16 %v4507, %v4500
    %v5005 = vpack.c.b16 %v4508, %v4501
    %v5006 = vpack.c.b16 %v4509, %v4502
    %v5007 = vpack.c.b16 %v4510, %v4503
    %v5008 = vpack.c.b16 %v4518, %v4511
    %v5009 = vpack.c.b16 %v4519, %v4512
    %v5010 = vpack.c.b16 %v4520, %v4513
    %v5011 = vpack.c.b16 %v4521, %v4514
    %v5012 = vpack.c.b16 %v4522, %v4515
    %v5013 = vpack.c.b16 %v4523, %v4516
    %v5014 = vpack.c.b16 %v4524, %v4517
    %v5015 = vpack.c.b16 %v4532, %v4525
    %v5016 = vpack.c.b16 %v4533, %v4526
    %v5017 = vpack.c.b16 %v4534, %v4527
    %v5018 = vpack.c.b16 %v4535, %v4528
    %v5019 = vpack.c.b16 %v4536, %v4529
    %v5020 = vpack.c.b16 %v4537, %v4530
    %v5021 = vpack.c.b16 %v4538, %v4531
    %v5022 = vpack.c.b16 %v4546, %v4539
    %v5023 = vpack.c.b16 %v4547, %v4540
    %v5024 = vpack.c.b16 %v4548, %v4541
    %v5025 = vpack.c.b16 %v4549, %v4542
    %v5026 = vpack.c.b16 %v4550, %v4543
    %v5027 = vpack.c.b16 %v4551, %v4544
    %v5028 = vpack.c.b16 %v4552, %v4545
    %v5029 = vpack.c.b16 %v4560, %v4553
    %v5030 = vpack.c.b16 %v4561, %v4554
    %v5031 = vpack.c.b16 %v4562, %v4555
    %v5032 = vpack.c.b16 %v4563, %v4556
    %v5033 = vpack.c.b16 %v4564, %v4557
    %v5034 = vpack.c.b16 %v4565, %v4558
    %v5035 = vpack.c.b16 %v4566, %v4559
    %v5036 = vpack.c.b16 %v4574, %v4567
    %v5037 = vpack.c.b16 %v4575, %v4568
    %v5038 = vpack.c.b16 %v4576, %v4569
    %v5039 = vpack.c.b16 %v4577, %v4570
    %v5040 = vpack.c.b16 %v4578, %v4571
    %v5041 = vpack.c.b16 %v4579, %v4572
    %v5042 = vpack.c.b16 %v4580, %v4573
    %v5043 = vpack.c.b16 %v4588, %v4581
    %v5044 = vpack.c.b16 %v4589, %v4582
    %v5045 = vpack.c.b16 %v4590, %v4583
    %v5046 = vpack.c.b16 %v4591, %v4584
    %v5047 = vpack.c.b16 %v4592, %v4585
    %v5048 = vpack.c.b16 %v4593, %v4586
    %v5049 = vpack.c.b16 %v4594, %v4587
    %v5050 = vpack.c.b16 %v4602, %v4595
    %v5051 = vpack.c.b16 %v4603, %v4596
    %v5052 = vpack.c.b16 %v4604, %v4597
    %v5053 = vpack.c.b16 %v4605, %v4598
    %v5054 = vpack.c.b16 %v4606, %v4599
    %v5055 = vpack.c.b16 %v4607, %v4600
    %v5056 = vpack.c.b16 %v4608, %v4601
    %5505 = vmatpush.bf16.msra.mxu0 %v4658
    %5506 = vmatpush.bf16.msra.mxu0 %v4651
    %5507 = vmatpush.bf16.msra.mxu0 %v4644
    %5508 = vmatpush.bf16.msra.mxu0 %v4637
    %5509 = vmatpush.bf16.msra.mxu0 %v4630
    %5510 = vmatpush.bf16.msra.mxu0 %v4623
    %5511 = vmatpush.bf16.msra.mxu0 %v4616
    %5512 = vmatpush.bf16.msra.mxu0 %v4609
    %5513 = vmatmul.bf16.gmra.mxu0 %v2665
    %v5514 = vpop.f32.mrf.mxu0
    %v5515 = vadd.f32 %v3187, %v5514
    %v5516 = vpop.f32.mrf.mxu0
    %5517 = vdwg.mxu0
    %5518 = vmatpush.bf16.msra.mxu0 %v4714
    %5519 = vmatpush.bf16.msra.mxu0 %v4707
    %5520 = vmatpush.bf16.msra.mxu0 %v4700
    %5521 = vmatpush.bf16.msra.mxu0 %v4693
    %5522 = vmatpush.bf16.msra.mxu0 %v4686
    %5523 = vmatpush.bf16.msra.mxu0 %v4679
    %5524 = vmatpush.bf16.msra.mxu0 %v4672
    %5525 = vmatpush.bf16.msra.mxu0 %v4665
    %5526 = vmatmul.bf16.gmra.mxu0 %v2666
    %v5527 = vpop.f32.mrf.mxu0
    %v5528 = vadd.f32 %v5515, %v5527
    %v5529 = vpop.f32.mrf.mxu0
    %5530 = vdwg.mxu0
    %5531 = vmatpush.bf16.msra.mxu0 %v4770
    %5532 = vmatpush.bf16.msra.mxu0 %v4763
    %5533 = vmatpush.bf16.msra.mxu0 %v4756
    %5534 = vmatpush.bf16.msra.mxu0 %v4749
    %5535 = vmatpush.bf16.msra.mxu0 %v4742
    %5536 = vmatpush.bf16.msra.mxu0 %v4735
    %5537 = vmatpush.bf16.msra.mxu0 %v4728
    %5538 = vmatpush.bf16.msra.mxu0 %v4721
    %5539 = vmatmul.bf16.gmra.mxu0 %v2667
    %v5540 = vpop.f32.mrf.mxu0
    %v5541 = vadd.f32 %v5528, %v5540
    %v5542 = vpop.f32.mrf.mxu0
    %5543 = vdwg.mxu0
    %5544 = vmatpush.bf16.msra.mxu0 %v4826
    %5545 = vmatpush.bf16.msra.mxu0 %v4819
    %5546 = vmatpush.bf16.msra.mxu0 %v4812
    %5547 = vmatpush.bf16.msra.mxu0 %v4805
    %5548 = vmatpush.bf16.msra.mxu0 %v4798
    %5549 = vmatpush.bf16.msra.mxu0 %v4791
    %5550 = vmatpush.bf16.msra.mxu0 %v4784
    %5551 = vmatpush.bf16.msra.mxu0 %v4777
    %5552 = vmatmul.bf16.gmra.mxu0 %v2668
    %v5553 = vpop.f32.mrf.mxu0
    %v5554 = vadd.f32 %v5541, %v5553
    %v5555 = vpop.f32.mrf.mxu0
    %5556 = vdwg.mxu0
    %5557 = vmatpush.bf16.msra.mxu0 %v4882
    %5558 = vmatpush.bf16.msra.mxu0 %v4875
    %5559 = vmatpush.bf16.msra.mxu0 %v4868
    %5560 = vmatpush.bf16.msra.mxu0 %v4861
    %5561 = vmatpush.bf16.msra.mxu0 %v4854
    %5562 = vmatpush.bf16.msra.mxu0 %v4847
    %5563 = vmatpush.bf16.msra.mxu0 %v4840
    %5564 = vmatpush.bf16.msra.mxu0 %v4833
    %5565 = vmatmul.bf16.gmra.mxu0 %v2669
    %v5566 = vpop.f32.mrf.mxu0
    %v5567 = vadd.f32 %v5554, %v5566
    %v5568 = vpop.f32.mrf.mxu0
    %5569 = vdwg.mxu0
    %5570 = vmatpush.bf16.msra.mxu0 %v4938
    %5571 = vmatpush.bf16.msra.mxu0 %v4931
    %5572 = vmatpush.bf16.msra.mxu0 %v4924
    %5573 = vmatpush.bf16.msra.mxu0 %v4917
    %5574 = vmatpush.bf16.msra.mxu0 %v4910
    %5575 = vmatpush.bf16.msra.mxu0 %v4903
    %5576 = vmatpush.bf16.msra.mxu0 %v4896
    %5577 = vmatpush.bf16.msra.mxu0 %v4889
    %5578 = vmatmul.bf16.gmra.mxu0 %v2670
    %v5579 = vpop.f32.mrf.mxu0
    %v5580 = vadd.f32 %v5567, %v5579
    %v5581 = vpop.f32.mrf.mxu0
    %5582 = vdwg.mxu0
    %5583 = vmatpush.bf16.msra.mxu0 %v4994
    %5584 = vmatpush.bf16.msra.mxu0 %v4987
    %5585 = vmatpush.bf16.msra.mxu0 %v4980
    %5586 = vmatpush.bf16.msra.mxu0 %v4973
    %5587 = vmatpush.bf16.msra.mxu0 %v4966
    %5588 = vmatpush.bf16.msra.mxu0 %v4959
    %5589 = vmatpush.bf16.msra.mxu0 %v4952
    %5590 = vmatpush.bf16.msra.mxu0 %v4945
    %5591 = vmatmul.bf16.gmra.mxu0 %v2671
    %v5592 = vpop.f32.mrf.mxu0
    %v5593 = vadd.f32 %v5580, %v5592
    %v5594 = vpop.f32.mrf.mxu0
    %5595 = vdwg.mxu0
    %5596 = vmatpush.bf16.msra.mxu0 %v5050
    %5597 = vmatpush.bf16.msra.mxu0 %v5043
    %5598 = vmatpush.bf16.msra.mxu0 %v5036
    %5599 = vmatpush.bf16.msra.mxu0 %v5029
    %5600 = vmatpush.bf16.msra.mxu0 %v5022
    %5601 = vmatpush.bf16.msra.mxu0 %v5015
    %5602 = vmatpush.bf16.msra.mxu0 %v5008
    %5603 = vmatpush.bf16.msra.mxu0 %v5001
    %5604 = vmatmul.bf16.gmra.mxu0 %v2672
    %v5605 = vpop.f32.mrf.mxu0
    %v5606 = vadd.f32 %v5593, %v5605
    %v5607 = vpop.f32.mrf.mxu0
    %5608 = vdwg.mxu0
    %5609 = vmatpush.bf16.msra.mxu0 %v4659
    %5610 = vmatpush.bf16.msra.mxu0 %v4652
    %5611 = vmatpush.bf16.msra.mxu0 %v4645
    %5612 = vmatpush.bf16.msra.mxu0 %v4638
    %5613 = vmatpush.bf16.msra.mxu0 %v4631
    %5614 = vmatpush.bf16.msra.mxu0 %v4624
    %5615 = vmatpush.bf16.msra.mxu0 %v4617
    %5616 = vmatpush.bf16.msra.mxu0 %v4610
    %5617 = vmatmul.bf16.gmra.mxu0 %v2665
    %v5618 = vpop.f32.mrf.mxu0
    %v5619 = vadd.f32 %v3188, %v5618
    %v5620 = vpop.f32.mrf.mxu0
    %5621 = vdwg.mxu0
    %5622 = vmatpush.bf16.msra.mxu0 %v4715
    %5623 = vmatpush.bf16.msra.mxu0 %v4708
    %5624 = vmatpush.bf16.msra.mxu0 %v4701
    %5625 = vmatpush.bf16.msra.mxu0 %v4694
    %5626 = vmatpush.bf16.msra.mxu0 %v4687
    %5627 = vmatpush.bf16.msra.mxu0 %v4680
    %5628 = vmatpush.bf16.msra.mxu0 %v4673
    %5629 = vmatpush.bf16.msra.mxu0 %v4666
    %5630 = vmatmul.bf16.gmra.mxu0 %v2666
    %v5631 = vpop.f32.mrf.mxu0
    %v5632 = vadd.f32 %v5619, %v5631
    %v5633 = vpop.f32.mrf.mxu0
    %5634 = vdwg.mxu0
    %5635 = vmatpush.bf16.msra.mxu0 %v4771
    %5636 = vmatpush.bf16.msra.mxu0 %v4764
    %5637 = vmatpush.bf16.msra.mxu0 %v4757
    %5638 = vmatpush.bf16.msra.mxu0 %v4750
    %5639 = vmatpush.bf16.msra.mxu0 %v4743
    %5640 = vmatpush.bf16.msra.mxu0 %v4736
    %5641 = vmatpush.bf16.msra.mxu0 %v4729
    %5642 = vmatpush.bf16.msra.mxu0 %v4722
    %5643 = vmatmul.bf16.gmra.mxu0 %v2667
    %v5644 = vpop.f32.mrf.mxu0
    %v5645 = vadd.f32 %v5632, %v5644
    %v5646 = vpop.f32.mrf.mxu0
    %5647 = vdwg.mxu0
    %5648 = vmatpush.bf16.msra.mxu0 %v4827
    %5649 = vmatpush.bf16.msra.mxu0 %v4820
    %5650 = vmatpush.bf16.msra.mxu0 %v4813
    %5651 = vmatpush.bf16.msra.mxu0 %v4806
    %5652 = vmatpush.bf16.msra.mxu0 %v4799
    %5653 = vmatpush.bf16.msra.mxu0 %v4792
    %5654 = vmatpush.bf16.msra.mxu0 %v4785
    %5655 = vmatpush.bf16.msra.mxu0 %v4778
    %5656 = vmatmul.bf16.gmra.mxu0 %v2668
    %v5657 = vpop.f32.mrf.mxu0
    %v5658 = vadd.f32 %v5645, %v5657
    %v5659 = vpop.f32.mrf.mxu0
    %5660 = vdwg.mxu0
    %5661 = vmatpush.bf16.msra.mxu0 %v4883
    %5662 = vmatpush.bf16.msra.mxu0 %v4876
    %5663 = vmatpush.bf16.msra.mxu0 %v4869
    %5664 = vmatpush.bf16.msra.mxu0 %v4862
    %5665 = vmatpush.bf16.msra.mxu0 %v4855
    %5666 = vmatpush.bf16.msra.mxu0 %v4848
    %5667 = vmatpush.bf16.msra.mxu0 %v4841
    %5668 = vmatpush.bf16.msra.mxu0 %v4834
    %5669 = vmatmul.bf16.gmra.mxu0 %v2669
    %v5670 = vpop.f32.mrf.mxu0
    %v5671 = vadd.f32 %v5658, %v5670
    %v5672 = vpop.f32.mrf.mxu0
    %5673 = vdwg.mxu0
    %5674 = vmatpush.bf16.msra.mxu0 %v4939
    %5675 = vmatpush.bf16.msra.mxu0 %v4932
    %5676 = vmatpush.bf16.msra.mxu0 %v4925
    %5677 = vmatpush.bf16.msra.mxu0 %v4918
    %5678 = vmatpush.bf16.msra.mxu0 %v4911
    %5679 = vmatpush.bf16.msra.mxu0 %v4904
    %5680 = vmatpush.bf16.msra.mxu0 %v4897
    %5681 = vmatpush.bf16.msra.mxu0 %v4890
    %5682 = vmatmul.bf16.gmra.mxu0 %v2670
    %v5683 = vpop.f32.mrf.mxu0
    %v5684 = vadd.f32 %v5671, %v5683
    %v5685 = vpop.f32.mrf.mxu0
    %5686 = vdwg.mxu0
    %5687 = vmatpush.bf16.msra.mxu0 %v4995
    %5688 = vmatpush.bf16.msra.mxu0 %v4988
    %5689 = vmatpush.bf16.msra.mxu0 %v4981
    %5690 = vmatpush.bf16.msra.mxu0 %v4974
    %5691 = vmatpush.bf16.msra.mxu0 %v4967
    %5692 = vmatpush.bf16.msra.mxu0 %v4960
    %5693 = vmatpush.bf16.msra.mxu0 %v4953
    %5694 = vmatpush.bf16.msra.mxu0 %v4946
    %5695 = vmatmul.bf16.gmra.mxu0 %v2671
    %v5696 = vpop.f32.mrf.mxu0
    %v5697 = vadd.f32 %v5684, %v5696
    %v5698 = vpop.f32.mrf.mxu0
    %5699 = vdwg.mxu0
    %5700 = vmatpush.bf16.msra.mxu0 %v5051
    %5701 = vmatpush.bf16.msra.mxu0 %v5044
    %5702 = vmatpush.bf16.msra.mxu0 %v5037
    %5703 = vmatpush.bf16.msra.mxu0 %v5030
    %5704 = vmatpush.bf16.msra.mxu0 %v5023
    %5705 = vmatpush.bf16.msra.mxu0 %v5016
    %5706 = vmatpush.bf16.msra.mxu0 %v5009
    %5707 = vmatpush.bf16.msra.mxu0 %v5002
    %5708 = vmatmul.bf16.gmra.mxu0 %v2672
    %v5709 = vpop.f32.mrf.mxu0
    %v5710 = vadd.f32 %v5697, %v5709
    %v5711 = vpop.f32.mrf.mxu0
    %5712 = vdwg.mxu0
    %5713 = vmatpush.bf16.msra.mxu0 %v4660
    %5714 = vmatpush.bf16.msra.mxu0 %v4653
    %5715 = vmatpush.bf16.msra.mxu0 %v4646
    %5716 = vmatpush.bf16.msra.mxu0 %v4639
    %5717 = vmatpush.bf16.msra.mxu0 %v4632
    %5718 = vmatpush.bf16.msra.mxu0 %v4625
    %5719 = vmatpush.bf16.msra.mxu0 %v4618
    %5720 = vmatpush.bf16.msra.mxu0 %v4611
    %5721 = vmatmul.bf16.gmra.mxu0 %v2665
    %v5722 = vpop.f32.mrf.mxu0
    %v5723 = vadd.f32 %v3189, %v5722
    %v5724 = vpop.f32.mrf.mxu0
    %5725 = vdwg.mxu0
    %5726 = vmatpush.bf16.msra.mxu0 %v4716
    %5727 = vmatpush.bf16.msra.mxu0 %v4709
    %5728 = vmatpush.bf16.msra.mxu0 %v4702
    %5729 = vmatpush.bf16.msra.mxu0 %v4695
    %5730 = vmatpush.bf16.msra.mxu0 %v4688
    %5731 = vmatpush.bf16.msra.mxu0 %v4681
    %5732 = vmatpush.bf16.msra.mxu0 %v4674
    %5733 = vmatpush.bf16.msra.mxu0 %v4667
    %5734 = vmatmul.bf16.gmra.mxu0 %v2666
    %v5735 = vpop.f32.mrf.mxu0
    %v5736 = vadd.f32 %v5723, %v5735
    %v5737 = vpop.f32.mrf.mxu0
    %5738 = vdwg.mxu0
    %5739 = vmatpush.bf16.msra.mxu0 %v4772
    %5740 = vmatpush.bf16.msra.mxu0 %v4765
    %5741 = vmatpush.bf16.msra.mxu0 %v4758
    %5742 = vmatpush.bf16.msra.mxu0 %v4751
    %5743 = vmatpush.bf16.msra.mxu0 %v4744
    %5744 = vmatpush.bf16.msra.mxu0 %v4737
    %5745 = vmatpush.bf16.msra.mxu0 %v4730
    %5746 = vmatpush.bf16.msra.mxu0 %v4723
    %5747 = vmatmul.bf16.gmra.mxu0 %v2667
    %v5748 = vpop.f32.mrf.mxu0
    %v5749 = vadd.f32 %v5736, %v5748
    %v5750 = vpop.f32.mrf.mxu0
    %5751 = vdwg.mxu0
    %5752 = vmatpush.bf16.msra.mxu0 %v4828
    %5753 = vmatpush.bf16.msra.mxu0 %v4821
    %5754 = vmatpush.bf16.msra.mxu0 %v4814
    %5755 = vmatpush.bf16.msra.mxu0 %v4807
    %5756 = vmatpush.bf16.msra.mxu0 %v4800
    %5757 = vmatpush.bf16.msra.mxu0 %v4793
    %5758 = vmatpush.bf16.msra.mxu0 %v4786
    %5759 = vmatpush.bf16.msra.mxu0 %v4779
    %5760 = vmatmul.bf16.gmra.mxu0 %v2668
    %v5761 = vpop.f32.mrf.mxu0
    %v5762 = vadd.f32 %v5749, %v5761
    %v5763 = vpop.f32.mrf.mxu0
    %5764 = vdwg.mxu0
    %5765 = vmatpush.bf16.msra.mxu0 %v4884
    %5766 = vmatpush.bf16.msra.mxu0 %v4877
    %5767 = vmatpush.bf16.msra.mxu0 %v4870
    %5768 = vmatpush.bf16.msra.mxu0 %v4863
    %5769 = vmatpush.bf16.msra.mxu0 %v4856
    %5770 = vmatpush.bf16.msra.mxu0 %v4849
    %5771 = vmatpush.bf16.msra.mxu0 %v4842
    %5772 = vmatpush.bf16.msra.mxu0 %v4835
    %5773 = vmatmul.bf16.gmra.mxu0 %v2669
    %v5774 = vpop.f32.mrf.mxu0
    %v5775 = vadd.f32 %v5762, %v5774
    %v5776 = vpop.f32.mrf.mxu0
    %5777 = vdwg.mxu0
    %5778 = vmatpush.bf16.msra.mxu0 %v4940
    %5779 = vmatpush.bf16.msra.mxu0 %v4933
    %5780 = vmatpush.bf16.msra.mxu0 %v4926
    %5781 = vmatpush.bf16.msra.mxu0 %v4919
    %5782 = vmatpush.bf16.msra.mxu0 %v4912
    %5783 = vmatpush.bf16.msra.mxu0 %v4905
    %5784 = vmatpush.bf16.msra.mxu0 %v4898
    %5785 = vmatpush.bf16.msra.mxu0 %v4891
    %5786 = vmatmul.bf16.gmra.mxu0 %v2670
    %v5787 = vpop.f32.mrf.mxu0
    %v5788 = vadd.f32 %v5775, %v5787
    %v5789 = vpop.f32.mrf.mxu0
    %5790 = vdwg.mxu0
    %5791 = vmatpush.bf16.msra.mxu0 %v4996
    %5792 = vmatpush.bf16.msra.mxu0 %v4989
    %5793 = vmatpush.bf16.msra.mxu0 %v4982
    %5794 = vmatpush.bf16.msra.mxu0 %v4975
    %5795 = vmatpush.bf16.msra.mxu0 %v4968
    %5796 = vmatpush.bf16.msra.mxu0 %v4961
    %5797 = vmatpush.bf16.msra.mxu0 %v4954
    %5798 = vmatpush.bf16.msra.mxu0 %v4947
    %5799 = vmatmul.bf16.gmra.mxu0 %v2671
    %v5800 = vpop.f32.mrf.mxu0
    %v5801 = vadd.f32 %v5788, %v5800
    %v5802 = vpop.f32.mrf.mxu0
    %5803 = vdwg.mxu0
    %5804 = vmatpush.bf16.msra.mxu0 %v5052
    %5805 = vmatpush.bf16.msra.mxu0 %v5045
    %5806 = vmatpush.bf16.msra.mxu0 %v5038
    %5807 = vmatpush.bf16.msra.mxu0 %v5031
    %5808 = vmatpush.bf16.msra.mxu0 %v5024
    %5809 = vmatpush.bf16.msra.mxu0 %v5017
    %5810 = vmatpush.bf16.msra.mxu0 %v5010
    %5811 = vmatpush.bf16.msra.mxu0 %v5003
    %5812 = vmatmul.bf16.gmra.mxu0 %v2672
    %v5813 = vpop.f32.mrf.mxu0
    %v5814 = vadd.f32 %v5801, %v5813
    %v5815 = vpop.f32.mrf.mxu0
    %5816 = vdwg.mxu0
    %5817 = vmatpush.bf16.msra.mxu0 %v4661
    %5818 = vmatpush.bf16.msra.mxu0 %v4654
    %5819 = vmatpush.bf16.msra.mxu0 %v4647
    %5820 = vmatpush.bf16.msra.mxu0 %v4640
    %5821 = vmatpush.bf16.msra.mxu0 %v4633
    %5822 = vmatpush.bf16.msra.mxu0 %v4626
    %5823 = vmatpush.bf16.msra.mxu0 %v4619
    %5824 = vmatpush.bf16.msra.mxu0 %v4612
    %5825 = vmatmul.bf16.gmra.mxu0 %v2665
    %v5826 = vpop.f32.mrf.mxu0
    %v5827 = vadd.f32 %v3190, %v5826
    %v5828 = vpop.f32.mrf.mxu0
    %5829 = vdwg.mxu0
    %5830 = vmatpush.bf16.msra.mxu0 %v4717
    %5831 = vmatpush.bf16.msra.mxu0 %v4710
    %5832 = vmatpush.bf16.msra.mxu0 %v4703
    %5833 = vmatpush.bf16.msra.mxu0 %v4696
    %5834 = vmatpush.bf16.msra.mxu0 %v4689
    %5835 = vmatpush.bf16.msra.mxu0 %v4682
    %5836 = vmatpush.bf16.msra.mxu0 %v4675
    %5837 = vmatpush.bf16.msra.mxu0 %v4668
    %5838 = vmatmul.bf16.gmra.mxu0 %v2666
    %v5839 = vpop.f32.mrf.mxu0
    %v5840 = vadd.f32 %v5827, %v5839
    %v5841 = vpop.f32.mrf.mxu0
    %5842 = vdwg.mxu0
    %5843 = vmatpush.bf16.msra.mxu0 %v4773
    %5844 = vmatpush.bf16.msra.mxu0 %v4766
    %5845 = vmatpush.bf16.msra.mxu0 %v4759
    %5846 = vmatpush.bf16.msra.mxu0 %v4752
    %5847 = vmatpush.bf16.msra.mxu0 %v4745
    %5848 = vmatpush.bf16.msra.mxu0 %v4738
    %5849 = vmatpush.bf16.msra.mxu0 %v4731
    %5850 = vmatpush.bf16.msra.mxu0 %v4724
    %5851 = vmatmul.bf16.gmra.mxu0 %v2667
    %v5852 = vpop.f32.mrf.mxu0
    %v5853 = vadd.f32 %v5840, %v5852
    %v5854 = vpop.f32.mrf.mxu0
    %5855 = vdwg.mxu0
    %5856 = vmatpush.bf16.msra.mxu0 %v4829
    %5857 = vmatpush.bf16.msra.mxu0 %v4822
    %5858 = vmatpush.bf16.msra.mxu0 %v4815
    %5859 = vmatpush.bf16.msra.mxu0 %v4808
    %5860 = vmatpush.bf16.msra.mxu0 %v4801
    %5861 = vmatpush.bf16.msra.mxu0 %v4794
    %5862 = vmatpush.bf16.msra.mxu0 %v4787
    %5863 = vmatpush.bf16.msra.mxu0 %v4780
    %5864 = vmatmul.bf16.gmra.mxu0 %v2668
    %v5865 = vpop.f32.mrf.mxu0
    %v5866 = vadd.f32 %v5853, %v5865
    %v5867 = vpop.f32.mrf.mxu0
    %5868 = vdwg.mxu0
    %5869 = vmatpush.bf16.msra.mxu0 %v4885
    %5870 = vmatpush.bf16.msra.mxu0 %v4878
    %5871 = vmatpush.bf16.msra.mxu0 %v4871
    %5872 = vmatpush.bf16.msra.mxu0 %v4864
    %5873 = vmatpush.bf16.msra.mxu0 %v4857
    %5874 = vmatpush.bf16.msra.mxu0 %v4850
    %5875 = vmatpush.bf16.msra.mxu0 %v4843
    %5876 = vmatpush.bf16.msra.mxu0 %v4836
    %5877 = vmatmul.bf16.gmra.mxu0 %v2669
    %v5878 = vpop.f32.mrf.mxu0
    %v5879 = vadd.f32 %v5866, %v5878
    %v5880 = vpop.f32.mrf.mxu0
    %5881 = vdwg.mxu0
    %5882 = vmatpush.bf16.msra.mxu0 %v4941
    %5883 = vmatpush.bf16.msra.mxu0 %v4934
    %5884 = vmatpush.bf16.msra.mxu0 %v4927
    %5885 = vmatpush.bf16.msra.mxu0 %v4920
    %5886 = vmatpush.bf16.msra.mxu0 %v4913
    %5887 = vmatpush.bf16.msra.mxu0 %v4906
    %5888 = vmatpush.bf16.msra.mxu0 %v4899
    %5889 = vmatpush.bf16.msra.mxu0 %v4892
    %5890 = vmatmul.bf16.gmra.mxu0 %v2670
    %v5891 = vpop.f32.mrf.mxu0
    %v5892 = vadd.f32 %v5879, %v5891
    %v5893 = vpop.f32.mrf.mxu0
    %5894 = vdwg.mxu0
    %5895 = vmatpush.bf16.msra.mxu0 %v4997
    %5896 = vmatpush.bf16.msra.mxu0 %v4990
    %5897 = vmatpush.bf16.msra.mxu0 %v4983
    %5898 = vmatpush.bf16.msra.mxu0 %v4976
    %5899 = vmatpush.bf16.msra.mxu0 %v4969
    %5900 = vmatpush.bf16.msra.mxu0 %v4962
    %5901 = vmatpush.bf16.msra.mxu0 %v4955
    %5902 = vmatpush.bf16.msra.mxu0 %v4948
    %5903 = vmatmul.bf16.gmra.mxu0 %v2671
    %v5904 = vpop.f32.mrf.mxu0
    %v5905 = vadd.f32 %v5892, %v5904
    %v5906 = vpop.f32.mrf.mxu0
    %5907 = vdwg.mxu0
    %5908 = vmatpush.bf16.msra.mxu0 %v5053
    %5909 = vmatpush.bf16.msra.mxu0 %v5046
    %5910 = vmatpush.bf16.msra.mxu0 %v5039
    %5911 = vmatpush.bf16.msra.mxu0 %v5032
    %5912 = vmatpush.bf16.msra.mxu0 %v5025
    %5913 = vmatpush.bf16.msra.mxu0 %v5018
    %5914 = vmatpush.bf16.msra.mxu0 %v5011
    %5915 = vmatpush.bf16.msra.mxu0 %v5004
    %5916 = vmatmul.bf16.gmra.mxu0 %v2672
    %v5917 = vpop.f32.mrf.mxu0
    %v5918 = vadd.f32 %v5905, %v5917
    %v5919 = vpop.f32.mrf.mxu0
    %5920 = vdwg.mxu0
    %5921 = vmatpush.bf16.msra.mxu0 %v4662
    %5922 = vmatpush.bf16.msra.mxu0 %v4655
    %5923 = vmatpush.bf16.msra.mxu0 %v4648
    %5924 = vmatpush.bf16.msra.mxu0 %v4641
    %5925 = vmatpush.bf16.msra.mxu0 %v4634
    %5926 = vmatpush.bf16.msra.mxu0 %v4627
    %5927 = vmatpush.bf16.msra.mxu0 %v4620
    %5928 = vmatpush.bf16.msra.mxu0 %v4613
    %5929 = vmatmul.bf16.gmra.mxu0 %v2665
    %v5930 = vpop.f32.mrf.mxu0
    %v5931 = vadd.f32 %v3191, %v5930
    %v5932 = vpop.f32.mrf.mxu0
    %5933 = vdwg.mxu0
    %5934 = vmatpush.bf16.msra.mxu0 %v4718
    %5935 = vmatpush.bf16.msra.mxu0 %v4711
    %5936 = vmatpush.bf16.msra.mxu0 %v4704
    %5937 = vmatpush.bf16.msra.mxu0 %v4697
    %5938 = vmatpush.bf16.msra.mxu0 %v4690
    %5939 = vmatpush.bf16.msra.mxu0 %v4683
    %5940 = vmatpush.bf16.msra.mxu0 %v4676
    %5941 = vmatpush.bf16.msra.mxu0 %v4669
    %5942 = vmatmul.bf16.gmra.mxu0 %v2666
    %v5943 = vpop.f32.mrf.mxu0
    %v5944 = vadd.f32 %v5931, %v5943
    %v5945 = vpop.f32.mrf.mxu0
    %5946 = vdwg.mxu0
    %5947 = vmatpush.bf16.msra.mxu0 %v4774
    %5948 = vmatpush.bf16.msra.mxu0 %v4767
    %5949 = vmatpush.bf16.msra.mxu0 %v4760
    %5950 = vmatpush.bf16.msra.mxu0 %v4753
    %5951 = vmatpush.bf16.msra.mxu0 %v4746
    %5952 = vmatpush.bf16.msra.mxu0 %v4739
    %5953 = vmatpush.bf16.msra.mxu0 %v4732
    %5954 = vmatpush.bf16.msra.mxu0 %v4725
    %5955 = vmatmul.bf16.gmra.mxu0 %v2667
    %v5956 = vpop.f32.mrf.mxu0
    %v5957 = vadd.f32 %v5944, %v5956
    %v5958 = vpop.f32.mrf.mxu0
    %5959 = vdwg.mxu0
    %5960 = vmatpush.bf16.msra.mxu0 %v4830
    %5961 = vmatpush.bf16.msra.mxu0 %v4823
    %5962 = vmatpush.bf16.msra.mxu0 %v4816
    %5963 = vmatpush.bf16.msra.mxu0 %v4809
    %5964 = vmatpush.bf16.msra.mxu0 %v4802
    %5965 = vmatpush.bf16.msra.mxu0 %v4795
    %5966 = vmatpush.bf16.msra.mxu0 %v4788
    %5967 = vmatpush.bf16.msra.mxu0 %v4781
    %5968 = vmatmul.bf16.gmra.mxu0 %v2668
    %v5969 = vpop.f32.mrf.mxu0
    %v5970 = vadd.f32 %v5957, %v5969
    %v5971 = vpop.f32.mrf.mxu0
    %5972 = vdwg.mxu0
    %5973 = vmatpush.bf16.msra.mxu0 %v4886
    %5974 = vmatpush.bf16.msra.mxu0 %v4879
    %5975 = vmatpush.bf16.msra.mxu0 %v4872
    %5976 = vmatpush.bf16.msra.mxu0 %v4865
    %5977 = vmatpush.bf16.msra.mxu0 %v4858
    %5978 = vmatpush.bf16.msra.mxu0 %v4851
    %5979 = vmatpush.bf16.msra.mxu0 %v4844
    %5980 = vmatpush.bf16.msra.mxu0 %v4837
    %5981 = vmatmul.bf16.gmra.mxu0 %v2669
    %v5982 = vpop.f32.mrf.mxu0
    %v5983 = vadd.f32 %v5970, %v5982
    %v5984 = vpop.f32.mrf.mxu0
    %5985 = vdwg.mxu0
    %5986 = vmatpush.bf16.msra.mxu0 %v4942
    %5987 = vmatpush.bf16.msra.mxu0 %v4935
    %5988 = vmatpush.bf16.msra.mxu0 %v4928
    %5989 = vmatpush.bf16.msra.mxu0 %v4921
    %5990 = vmatpush.bf16.msra.mxu0 %v4914
    %5991 = vmatpush.bf16.msra.mxu0 %v4907
    %5992 = vmatpush.bf16.msra.mxu0 %v4900
    %5993 = vmatpush.bf16.msra.mxu0 %v4893
    %5994 = vmatmul.bf16.gmra.mxu0 %v2670
    %v5995 = vpop.f32.mrf.mxu0
    %v5996 = vadd.f32 %v5983, %v5995
    %v5997 = vpop.f32.mrf.mxu0
    %5998 = vdwg.mxu0
    %5999 = vmatpush.bf16.msra.mxu0 %v4998
    %6000 = vmatpush.bf16.msra.mxu0 %v4991
    %6001 = vmatpush.bf16.msra.mxu0 %v4984
    %6002 = vmatpush.bf16.msra.mxu0 %v4977
    %6003 = vmatpush.bf16.msra.mxu0 %v4970
    %6004 = vmatpush.bf16.msra.mxu0 %v4963
    %6005 = vmatpush.bf16.msra.mxu0 %v4956
    %6006 = vmatpush.bf16.msra.mxu0 %v4949
    %6007 = vmatmul.bf16.gmra.mxu0 %v2671
    %v6008 = vpop.f32.mrf.mxu0
    %v6009 = vadd.f32 %v5996, %v6008
    %v6010 = vpop.f32.mrf.mxu0
    %6011 = vdwg.mxu0
    %6012 = vmatpush.bf16.msra.mxu0 %v5054
    %6013 = vmatpush.bf16.msra.mxu0 %v5047
    %6014 = vmatpush.bf16.msra.mxu0 %v5040
    %6015 = vmatpush.bf16.msra.mxu0 %v5033
    %6016 = vmatpush.bf16.msra.mxu0 %v5026
    %6017 = vmatpush.bf16.msra.mxu0 %v5019
    %6018 = vmatpush.bf16.msra.mxu0 %v5012
    %6019 = vmatpush.bf16.msra.mxu0 %v5005
    %6020 = vmatmul.bf16.gmra.mxu0 %v2672
    %v6021 = vpop.f32.mrf.mxu0
    %v6022 = vadd.f32 %v6009, %v6021
    %v6023 = vpop.f32.mrf.mxu0
    %6024 = vdwg.mxu0
    %6025 = vmatpush.bf16.msra.mxu0 %v4663
    %6026 = vmatpush.bf16.msra.mxu0 %v4656
    %6027 = vmatpush.bf16.msra.mxu0 %v4649
    %6028 = vmatpush.bf16.msra.mxu0 %v4642
    %6029 = vmatpush.bf16.msra.mxu0 %v4635
    %6030 = vmatpush.bf16.msra.mxu0 %v4628
    %6031 = vmatpush.bf16.msra.mxu0 %v4621
    %6032 = vmatpush.bf16.msra.mxu0 %v4614
    %6033 = vmatmul.bf16.gmra.mxu0 %v2665
    %v6034 = vpop.f32.mrf.mxu0
    %v6035 = vadd.f32 %v3192, %v6034
    %v6036 = vpop.f32.mrf.mxu0
    %6037 = vdwg.mxu0
    %6038 = vmatpush.bf16.msra.mxu0 %v4719
    %6039 = vmatpush.bf16.msra.mxu0 %v4712
    %6040 = vmatpush.bf16.msra.mxu0 %v4705
    %6041 = vmatpush.bf16.msra.mxu0 %v4698
    %6042 = vmatpush.bf16.msra.mxu0 %v4691
    %6043 = vmatpush.bf16.msra.mxu0 %v4684
    %6044 = vmatpush.bf16.msra.mxu0 %v4677
    %6045 = vmatpush.bf16.msra.mxu0 %v4670
    %6046 = vmatmul.bf16.gmra.mxu0 %v2666
    %v6047 = vpop.f32.mrf.mxu0
    %v6048 = vadd.f32 %v6035, %v6047
    %v6049 = vpop.f32.mrf.mxu0
    %6050 = vdwg.mxu0
    %6051 = vmatpush.bf16.msra.mxu0 %v4775
    %6052 = vmatpush.bf16.msra.mxu0 %v4768
    %6053 = vmatpush.bf16.msra.mxu0 %v4761
    %6054 = vmatpush.bf16.msra.mxu0 %v4754
    %6055 = vmatpush.bf16.msra.mxu0 %v4747
    %6056 = vmatpush.bf16.msra.mxu0 %v4740
    %6057 = vmatpush.bf16.msra.mxu0 %v4733
    %6058 = vmatpush.bf16.msra.mxu0 %v4726
    %6059 = vmatmul.bf16.gmra.mxu0 %v2667
    %v6060 = vpop.f32.mrf.mxu0
    %v6061 = vadd.f32 %v6048, %v6060
    %v6062 = vpop.f32.mrf.mxu0
    %6063 = vdwg.mxu0
    %6064 = vmatpush.bf16.msra.mxu0 %v4831
    %6065 = vmatpush.bf16.msra.mxu0 %v4824
    %6066 = vmatpush.bf16.msra.mxu0 %v4817
    %6067 = vmatpush.bf16.msra.mxu0 %v4810
    %6068 = vmatpush.bf16.msra.mxu0 %v4803
    %6069 = vmatpush.bf16.msra.mxu0 %v4796
    %6070 = vmatpush.bf16.msra.mxu0 %v4789
    %6071 = vmatpush.bf16.msra.mxu0 %v4782
    %6072 = vmatmul.bf16.gmra.mxu0 %v2668
    %v6073 = vpop.f32.mrf.mxu0
    %v6074 = vadd.f32 %v6061, %v6073
    %v6075 = vpop.f32.mrf.mxu0
    %6076 = vdwg.mxu0
    %6077 = vmatpush.bf16.msra.mxu0 %v4887
    %6078 = vmatpush.bf16.msra.mxu0 %v4880
    %6079 = vmatpush.bf16.msra.mxu0 %v4873
    %6080 = vmatpush.bf16.msra.mxu0 %v4866
    %6081 = vmatpush.bf16.msra.mxu0 %v4859
    %6082 = vmatpush.bf16.msra.mxu0 %v4852
    %6083 = vmatpush.bf16.msra.mxu0 %v4845
    %6084 = vmatpush.bf16.msra.mxu0 %v4838
    %6085 = vmatmul.bf16.gmra.mxu0 %v2669
    %v6086 = vpop.f32.mrf.mxu0
    %v6087 = vadd.f32 %v6074, %v6086
    %v6088 = vpop.f32.mrf.mxu0
    %6089 = vdwg.mxu0
    %6090 = vmatpush.bf16.msra.mxu0 %v4943
    %6091 = vmatpush.bf16.msra.mxu0 %v4936
    %6092 = vmatpush.bf16.msra.mxu0 %v4929
    %6093 = vmatpush.bf16.msra.mxu0 %v4922
    %6094 = vmatpush.bf16.msra.mxu0 %v4915
    %6095 = vmatpush.bf16.msra.mxu0 %v4908
    %6096 = vmatpush.bf16.msra.mxu0 %v4901
    %6097 = vmatpush.bf16.msra.mxu0 %v4894
    %6098 = vmatmul.bf16.gmra.mxu0 %v2670
    %v6099 = vpop.f32.mrf.mxu0
    %v6100 = vadd.f32 %v6087, %v6099
    %v6101 = vpop.f32.mrf.mxu0
    %6102 = vdwg.mxu0
    %6103 = vmatpush.bf16.msra.mxu0 %v4999
    %6104 = vmatpush.bf16.msra.mxu0 %v4992
    %6105 = vmatpush.bf16.msra.mxu0 %v4985
    %6106 = vmatpush.bf16.msra.mxu0 %v4978
    %6107 = vmatpush.bf16.msra.mxu0 %v4971
    %6108 = vmatpush.bf16.msra.mxu0 %v4964
    %6109 = vmatpush.bf16.msra.mxu0 %v4957
    %6110 = vmatpush.bf16.msra.mxu0 %v4950
    %6111 = vmatmul.bf16.gmra.mxu0 %v2671
    %v6112 = vpop.f32.mrf.mxu0
    %v6113 = vadd.f32 %v6100, %v6112
    %v6114 = vpop.f32.mrf.mxu0
    %6115 = vdwg.mxu0
    %6116 = vmatpush.bf16.msra.mxu0 %v5055
    %6117 = vmatpush.bf16.msra.mxu0 %v5048
    %6118 = vmatpush.bf16.msra.mxu0 %v5041
    %6119 = vmatpush.bf16.msra.mxu0 %v5034
    %6120 = vmatpush.bf16.msra.mxu0 %v5027
    %6121 = vmatpush.bf16.msra.mxu0 %v5020
    %6122 = vmatpush.bf16.msra.mxu0 %v5013
    %6123 = vmatpush.bf16.msra.mxu0 %v5006
    %6124 = vmatmul.bf16.gmra.mxu0 %v2672
    %v6125 = vpop.f32.mrf.mxu0
    %v6126 = vadd.f32 %v6113, %v6125
    %v6127 = vpop.f32.mrf.mxu0
    %6128 = vdwg.mxu0
    %6129 = vmatpush.bf16.msra.mxu0 %v4664
    %6130 = vmatpush.bf16.msra.mxu0 %v4657
    %6131 = vmatpush.bf16.msra.mxu0 %v4650
    %6132 = vmatpush.bf16.msra.mxu0 %v4643
    %6133 = vmatpush.bf16.msra.mxu0 %v4636
    %6134 = vmatpush.bf16.msra.mxu0 %v4629
    %6135 = vmatpush.bf16.msra.mxu0 %v4622
    %6136 = vmatpush.bf16.msra.mxu0 %v4615
    %6137 = vmatmul.bf16.gmra.mxu0 %v2665
    %v6138 = vpop.f32.mrf.mxu0
    %v6139 = vadd.f32 %v3193, %v6138
    %v6140 = vpop.f32.mrf.mxu0
    %6141 = vdwg.mxu0
    %6142 = vmatpush.bf16.msra.mxu0 %v4720
    %6143 = vmatpush.bf16.msra.mxu0 %v4713
    %6144 = vmatpush.bf16.msra.mxu0 %v4706
    %6145 = vmatpush.bf16.msra.mxu0 %v4699
    %6146 = vmatpush.bf16.msra.mxu0 %v4692
    %6147 = vmatpush.bf16.msra.mxu0 %v4685
    %6148 = vmatpush.bf16.msra.mxu0 %v4678
    %6149 = vmatpush.bf16.msra.mxu0 %v4671
    %6150 = vmatmul.bf16.gmra.mxu0 %v2666
    %v6151 = vpop.f32.mrf.mxu0
    %v6152 = vadd.f32 %v6139, %v6151
    %v6153 = vpop.f32.mrf.mxu0
    %6154 = vdwg.mxu0
    %6155 = vmatpush.bf16.msra.mxu0 %v4776
    %6156 = vmatpush.bf16.msra.mxu0 %v4769
    %6157 = vmatpush.bf16.msra.mxu0 %v4762
    %6158 = vmatpush.bf16.msra.mxu0 %v4755
    %6159 = vmatpush.bf16.msra.mxu0 %v4748
    %6160 = vmatpush.bf16.msra.mxu0 %v4741
    %6161 = vmatpush.bf16.msra.mxu0 %v4734
    %6162 = vmatpush.bf16.msra.mxu0 %v4727
    %6163 = vmatmul.bf16.gmra.mxu0 %v2667
    %v6164 = vpop.f32.mrf.mxu0
    %v6165 = vadd.f32 %v6152, %v6164
    %v6166 = vpop.f32.mrf.mxu0
    %6167 = vdwg.mxu0
    %6168 = vmatpush.bf16.msra.mxu0 %v4832
    %6169 = vmatpush.bf16.msra.mxu0 %v4825
    %6170 = vmatpush.bf16.msra.mxu0 %v4818
    %6171 = vmatpush.bf16.msra.mxu0 %v4811
    %6172 = vmatpush.bf16.msra.mxu0 %v4804
    %6173 = vmatpush.bf16.msra.mxu0 %v4797
    %6174 = vmatpush.bf16.msra.mxu0 %v4790
    %6175 = vmatpush.bf16.msra.mxu0 %v4783
    %6176 = vmatmul.bf16.gmra.mxu0 %v2668
    %v6177 = vpop.f32.mrf.mxu0
    %v6178 = vadd.f32 %v6165, %v6177
    %v6179 = vpop.f32.mrf.mxu0
    %6180 = vdwg.mxu0
    %6181 = vmatpush.bf16.msra.mxu0 %v4888
    %6182 = vmatpush.bf16.msra.mxu0 %v4881
    %6183 = vmatpush.bf16.msra.mxu0 %v4874
    %6184 = vmatpush.bf16.msra.mxu0 %v4867
    %6185 = vmatpush.bf16.msra.mxu0 %v4860
    %6186 = vmatpush.bf16.msra.mxu0 %v4853
    %6187 = vmatpush.bf16.msra.mxu0 %v4846
    %6188 = vmatpush.bf16.msra.mxu0 %v4839
    %6189 = vmatmul.bf16.gmra.mxu0 %v2669
    %v6190 = vpop.f32.mrf.mxu0
    %v6191 = vadd.f32 %v6178, %v6190
    %v6192 = vpop.f32.mrf.mxu0
    %6193 = vdwg.mxu0
    %6194 = vmatpush.bf16.msra.mxu0 %v4944
    %6195 = vmatpush.bf16.msra.mxu0 %v4937
    %6196 = vmatpush.bf16.msra.mxu0 %v4930
    %6197 = vmatpush.bf16.msra.mxu0 %v4923
    %6198 = vmatpush.bf16.msra.mxu0 %v4916
    %6199 = vmatpush.bf16.msra.mxu0 %v4909
    %6200 = vmatpush.bf16.msra.mxu0 %v4902
    %6201 = vmatpush.bf16.msra.mxu0 %v4895
    %6202 = vmatmul.bf16.gmra.mxu0 %v2670
    %v6203 = vpop.f32.mrf.mxu0
    %v6204 = vadd.f32 %v6191, %v6203
    %v6205 = vpop.f32.mrf.mxu0
    %6206 = vdwg.mxu0
    %6207 = vmatpush.bf16.msra.mxu0 %v5000
    %6208 = vmatpush.bf16.msra.mxu0 %v4993
    %6209 = vmatpush.bf16.msra.mxu0 %v4986
    %6210 = vmatpush.bf16.msra.mxu0 %v4979
    %6211 = vmatpush.bf16.msra.mxu0 %v4972
    %6212 = vmatpush.bf16.msra.mxu0 %v4965
    %6213 = vmatpush.bf16.msra.mxu0 %v4958
    %6214 = vmatpush.bf16.msra.mxu0 %v4951
    %6215 = vmatmul.bf16.gmra.mxu0 %v2671
    %v6216 = vpop.f32.mrf.mxu0
    %v6217 = vadd.f32 %v6204, %v6216
    %v6218 = vpop.f32.mrf.mxu0
    %6219 = vdwg.mxu0
    %6220 = vmatpush.bf16.msra.mxu0 %v5056
    %6221 = vmatpush.bf16.msra.mxu0 %v5049
    %6222 = vmatpush.bf16.msra.mxu0 %v5042
    %6223 = vmatpush.bf16.msra.mxu0 %v5035
    %6224 = vmatpush.bf16.msra.mxu0 %v5028
    %6225 = vmatpush.bf16.msra.mxu0 %v5021
    %6226 = vmatpush.bf16.msra.mxu0 %v5014
    %6227 = vmatpush.bf16.msra.mxu0 %v5007
    %6228 = vmatmul.bf16.gmra.mxu0 %v2672
    %v6229 = vpop.f32.mrf.mxu0
    %v6230 = vadd.f32 %v6217, %v6229
    %v6231 = vpop.f32.mrf.mxu0
    %6232 = vdwg.mxu0
    %v6233 = vtanh.pop %v5606
    %v6234 = vtanh.pop %v5710
    %v6235 = vtanh.pop %v5814
    %v6236 = vtanh.pop %v5918
    %v6237 = vtanh.pop %v6022
    %v6238 = vtanh.pop %v6126
    %v6239 = vtanh.pop %v6230
    %6240 = vst [vmem:[#allocation2] sm:$0xff] %v6233
    %6241 = vst [vmem:[#allocation2 + $0x8] sm:$0xff] %v6234
    %6242 = vst [vmem:[#allocation2 + $0x10] sm:$0xff] %v6235
    %6243 = vst [vmem:[#allocation2 + $0x18] sm:$0xff] %v6236
    %6244 = vst [vmem:[#allocation2 + $0x20] sm:$0xff] %v6237
    %6245 = vst [vmem:[#allocation2 + $0x28] sm:$0xff] %v6238
    %vm6246 = vcmask 130048
    %6247 = vst.msk [vmem:[#allocation2 + $0x30] sm:$0xff] %vm6246, %v6239
    // Predicated region
    $region38: #{tpu_custom_call.1} parent=1 // pred_check
      _
    $region39: #{tpu_custom_call.1} parent=1 // pred_check_branch
      %6249 = sbr.rel (0) target = $region41
    $region40: #{tpu_custom_call.1} parent=1 // pred_region
      %6251 = vsyncadd [#allocation3], 0
      %s6253 = sshll.u32 [#allocation2], 4
      %s6254 = int_to_ptr.vmem [resolvable:$true] %s6253
      %s6255 = sshll.u32 %s9, 4
      %s6256 = int_to_ptr.hbm [resolvable:$true] %s6255
      %6258 = dma.vmem_to_hbm [thread:$0]  %s6254, 896, %s6256, [#allocation3]
    $region41: #{tpu_custom_call.1} parent=1 // pred_fallthru
      _
    // Predicated region
    $region42: #{tpu_custom_call.1} parent=1 // pred_check
      _
    $region43: #{tpu_custom_call.1} parent=1 // pred_check_branch
      %6260 = sbr.rel (0) target = $region45
    $region44: #{tpu_custom_call.1} parent=1 // pred_region
      %6262 = dma.done [#allocation3], 896
    $region45: #{tpu_custom_call.1} parent=1 // pred_fallthru
      _
    %6263 = vsyncpa [#allocation3], 1

</llo_original>
